<compile_context>
chip_gen: v7x
topology: tpu7x:2x2x1
jax: 0.10.0
libtpu: 0.0.40
codegen_flags: <defaults>
</compile_context>

<pallas_src>
import jax
import jax.numpy as jnp
import numpy as np
from jax import lax
from jax.experimental import pallas as pl
from jax.experimental.pallas import tpu as pltpu

CIN = 32      # block input/output channels (residual width) — fixed by the module
CMID = 128    # expanded bottleneck width — fixed by the module
KH = KW = 3   # depthwise kernel size
BN_EPS = 1e-5


def _make_kernel(H, W):
    HW = H * W
    CENTER = (KH // 2) * KW + (KW // 2)          # tap index with dy = dx = 0

    def kernel(x_ref, w1_ref, b1_ref, dw_ref, bdw_ref, m_ref, w3_ref, b3_ref,
               o_ref):
        # x_ref  : (1, CIN, HW) f32   channels on sublanes, H*W on lanes
        # w1_ref : (CMID, CIN)  bf16  BN-folded pointwise-1 weight
        # b1_ref : (CMID, 1)    f32   BN-folded pointwise-1 bias
        # dw_ref : (CMID, 9)    f32   BN-folded depthwise taps, k = ky*KW + kx
        # bdw_ref: (CMID, 1)    f32   BN-folded depthwise bias
        # m_ref  : (9, HW)      f32   0/1 border-validity mask per tap
        # w3_ref : (CIN, CMID)  bf16  pointwise-2 weight
        # b3_ref : (CIN, 1)     f32
        # o_ref  : (1, CIN, HW)
        x = x_ref[0]                                               # (CIN, HW) f32

        # ---- pointwise 32 -> 128 (MXU, bf16 operands, f32 accumulate) ----
        t = jnp.dot(w1_ref[...], x.astype(jnp.bfloat16),
                    preferred_element_type=jnp.float32)            # (CMID, HW)
        t = jnp.clip(t + b1_ref[...], 0.0, 6.0)                    # bias/BN folded, ReLU6

        # ---- depthwise 3x3, pad=1: XLU lane rolls + precomputed border masks ----
        taps = dw_ref[...]                                         # (CMID, 9)
        acc = t * taps[:, CENTER:CENTER + 1]                       # center tap, mask == 1
        for k in range(KH * KW):                                   # unrolled (8 shifted taps)
            if k == CENTER:
                continue
            dy, dx = k // KW - 1, k % KW - 1
            s = dy * W + dx                                        # flat source offset
            rolled = pltpu.roll(t, shift=(-s) % HW, axis=1)        # rolled[:, p] = t[:, p+s]
            acc = acc + (rolled * taps[:, k:k + 1]) * m_ref[k:k + 1, :]
        a = jnp.clip(acc + bdw_ref[...], 0.0, 6.0)                 # bias/BN folded, ReLU6

        # ---- pointwise 128 -> 32 (MXU) + bias + residual add ----
        y = jnp.dot(w3_ref[...], a.astype(jnp.bfloat16),
                    preferred_element_type=jnp.float32)            # (CIN, HW)
        y = y + b3_ref[...] + x
        o_ref[0] = y.astype(o_ref.dtype)

    return kernel


def combo_block_bottleneck_residual(x, params):
    """x: (N, CIN, H, W) float32 (NCHW, PyTorch convention)."""
    (w1, b1, run_mean, run_var, dw, bdw, w3, b3) = params
    N, C, H, W = x.shape
    assert C == CIN
    assert w1.shape == (CMID, CIN, 1, 1) and b1.shape == (CMID,)
    assert dw.shape == (CMID, 1, KH, KW) and bdw.shape == (CMID,)
    assert w3.shape == (CIN, CMID, 1, 1) and b3.shape == (CIN,)
    assert run_mean.shape == (CMID,) and run_var.shape == (CMID,)
    HW = H * W

    run_mean = run_mean.astype(jnp.float32)
    run_var = run_var.astype(jnp.float32)
    scale = 1.0 / jnp.sqrt(run_var + BN_EPS)                       # (CMID,)

    # Fold eval-mode BatchNorm (affine=False) and conv biases into the weights.
    w1f = (w1.reshape(CMID, CIN).astype(jnp.float32)
           * scale[:, None]).astype(jnp.bfloat16)                  # (CMID, CIN)
    b1f = ((b1.astype(jnp.float32) - run_mean) * scale).reshape(CMID, 1)
    dwf = dw.reshape(CMID, KH * KW).astype(jnp.float32) * scale[:, None]
    bdwf = ((bdw.astype(jnp.float32) - run_mean) * scale).reshape(CMID, 1)
    w3f = w3.reshape(CIN, CMID).astype(jnp.bfloat16)               # (CIN, CMID)
    b3f = b3.reshape(CIN, 1).astype(jnp.float32)

    # Static 0/1 border-validity masks for the 9 depthwise taps (host-side).
    def _h_ok(dy):
        return (np.arange(H) + dy >= 0) & (np.arange(H) + dy < H)

    def _w_ok(dx):
        return (np.arange(W) + dx >= 0) & (np.arange(W) + dx < W)

    masks = np.stack([
        (_h_ok(k // KW - 1)[:, None] & _w_ok(k % KW - 1)[None, :]).reshape(HW)
        for k in range(KH * KW)
    ]).astype(np.float32)                                          # (9, HW)
    masks = jnp.asarray(masks)

    # Channels-first, spatially-flattened layout: FREE reshape of NCHW (no transpose).
    x_flat = x.reshape(N, CIN, HW).astype(jnp.float32)

    def const(shape):
        return pl.BlockSpec(shape, lambda n: (0,) * len(shape))

    out_flat = pl.pallas_call(
        _make_kernel(H, W),
        out_shape=jax.ShapeDtypeStruct((N, CIN, HW), x.dtype),
        grid=(N,),
        in_specs=[
            pl.BlockSpec((1, CIN, HW), lambda n: (n, 0, 0)),
            const((CMID, CIN)),          # w1 (BN folded, bf16)
            const((CMID, 1)),            # b1 (BN folded)
            const((CMID, KH * KW)),      # depthwise taps (BN folded)
            const((CMID, 1)),            # depthwise bias (BN folded)
            const((KH * KW, HW)),        # border masks
            const((CIN, CMID)),          # w3 (bf16)
            const((CIN, 1)),             # b3
        ],
        out_specs=pl.BlockSpec((1, CIN, HW), lambda n: (n, 0, 0)),
        compiler_params=pltpu.CompilerParams(
            dimension_semantics=("parallel",)),
    )(x_flat, w1f, b1f, dwf, bdwf, masks, w3f, b3f)

    return out_flat.reshape(N, CIN, H, W)


def _reference(x, params):
    (w1, b1, run_mean, run_var, dw, bdw, w3, b3) = params
    dn = ("NCHW", "OIHW", "NCHW")
    prec = lax.Precision.HIGHEST

    def bn(v):
        return (v - run_mean.reshape(1, -1, 1, 1)) / jnp.sqrt(
            run_var.reshape(1, -1, 1, 1) + BN_EPS)

    y = lax.conv_general_dilated(x, w1, (1, 1), "VALID",
                                 dimension_numbers=dn, precision=prec)
    y = y + b1.reshape(1, -1, 1, 1)
    y = jnp.clip(bn(y), 0.0, 6.0)
    y = lax.conv_general_dilated(y, dw, (1, 1), ((1, 1), (1, 1)),
                                 dimension_numbers=dn,
                                 feature_group_count=CMID, precision=prec)
    y = y + bdw.reshape(1, -1, 1, 1)
    y = jnp.clip(bn(y), 0.0, 6.0)
    y = lax.conv_general_dilated(y, w3, (1, 1), "VALID",
                                 dimension_numbers=dn, precision=prec)
    y = y + b3.reshape(1, -1, 1, 1)
    return y + x


if __name__ == "__main__":
    key = jax.random.PRNGKey(0)
    keys = jax.random.split(key, 9)

    # Small shapes consistent with the module: channels fixed at 32/128, spatial 16.
    N, H, W = 2, 16, 16
    x = jax.random.normal(keys[0], (N, CIN, H, W), dtype=jnp.float32)

    def uinit(k, shape, fan_in):
        bound = 1.0 / (fan_in ** 0.5)
        return jax.random.uniform(k, shape, jnp.float32, minval=-bound, maxval=bound)

    # PyTorch-like Conv2d init (uniform(-1/sqrt(fan_in), 1/sqrt(fan_in))).
    w1 = uinit(keys[1], (CMID, CIN, 1, 1), CIN * 1 * 1)
    b1 = uinit(keys[2], (CMID,), CIN * 1 * 1)
    dw = uinit(keys[3], (CMID, 1, KH, KW), 1 * KH * KW)
    bdw = uinit(keys[4], (CMID,), 1 * KH * KW)
    w3 = uinit(keys[5], (CIN, CMID, 1, 1), CMID * 1 * 1)
    b3 = uinit(keys[6], (CIN,), CMID * 1 * 1)

    # Eval-mode BatchNorm running statistics (affine=False, no training).
    run_mean = 0.1 * jax.random.normal(keys[7], (CMID,), dtype=jnp.float32)
    run_var = 1.0 + 0.1 * jax.random.uniform(keys[8], (CMID,), dtype=jnp.float32)

    params = (w1, b1, run_mean, run_var, dw, bdw, w3, b3)

    out = combo_block_bottleneck_residual(x, params)
    out = jax.block_until_ready(out)

    ref = _reference(x, params)
    assert out.shape == (N, CIN, H, W)
    max_err = float(jnp.max(jnp.abs(out - ref)))
    assert jnp.allclose(out, ref, atol=2e-2, rtol=2e-2), f"max_err={max_err}"

    print("KERNEL_OK")
</pallas_src>

<mosaic_0001>
module attributes {stable_mosaic.version = 11 : i64} {
  func.func @kernel(%arg0: i32, %arg1: memref<1x32x256xf32, #tpu.memory_space<vmem>>, %arg2: memref<128x32xbf16, #tpu.memory_space<vmem>>, %arg3: memref<128x1xf32, #tpu.memory_space<vmem>>, %arg4: memref<128x9xf32, #tpu.memory_space<vmem>>, %arg5: memref<128x1xf32, #tpu.memory_space<vmem>>, %arg6: memref<9x256xf32, #tpu.memory_space<vmem>>, %arg7: memref<32x128xbf16, #tpu.memory_space<vmem>>, %arg8: memref<32x1xf32, #tpu.memory_space<vmem>>, %arg9: memref<1x32x256xf32, #tpu.memory_space<vmem>>) attributes {dimension_semantics = [#tpu.dimension_semantics<parallel>], iteration_bounds = array<i64: 2>, scalar_prefetch = 0 : i64, scratch_operands = 0 : i64, tpu.core_type = #tpu.core_type<tc>, window_params = [{transform_indices = @transform_0, window_bounds = array<i64: 1, 32, 256>}, {pipeline_mode = #tpu.pipeline_mode<synchronous>, transform_indices = @transform_1, window_bounds = array<i64: 128, 32>}, {pipeline_mode = #tpu.pipeline_mode<synchronous>, transform_indices = @transform_2, window_bounds = array<i64: 128, 1>}, {pipeline_mode = #tpu.pipeline_mode<synchronous>, transform_indices = @transform_3, window_bounds = array<i64: 128, 9>}, {pipeline_mode = #tpu.pipeline_mode<synchronous>, transform_indices = @transform_4, window_bounds = array<i64: 128, 1>}, {pipeline_mode = #tpu.pipeline_mode<synchronous>, transform_indices = @transform_5, window_bounds = array<i64: 9, 256>}, {pipeline_mode = #tpu.pipeline_mode<synchronous>, transform_indices = @transform_6, window_bounds = array<i64: 32, 128>}, {pipeline_mode = #tpu.pipeline_mode<synchronous>, transform_indices = @transform_7, window_bounds = array<i64: 32, 1>}, {transform_indices = @transform_8, window_bounds = array<i64: 1, 32, 256>}]} {
    %c0 = arith.constant 0 : index
    %c0_0 = arith.constant 0 : index
    %c0_1 = arith.constant 0 : index
    %0 = vector.load %arg1[%c0, %c0_0, %c0_1] : memref<1x32x256xf32, #tpu.memory_space<vmem>>, vector<1x32x256xf32>
    %1 = vector.shape_cast %0 : vector<1x32x256xf32> to vector<32x256xf32>
    %c0_2 = arith.constant 0 : index
    %c0_3 = arith.constant 0 : index
    %2 = vector.load %arg2[%c0_2, %c0_3] : memref<128x32xbf16, #tpu.memory_space<vmem>>, vector<128x32xbf16>
    %3 = arith.truncf %1 : vector<32x256xf32> to vector<32x256xbf16>
    %cst = arith.constant dense<0.000000e+00> : vector<128x256xf32>
    %4 = tpu.matmul %2, %3, %cst {dimension_numbers = #tpu.dot_dimension_numbers<[1], [0], [0], [1], [0, 0, 1, 1], [], []>} : vector<128x32xbf16>, vector<32x256xbf16>, vector<128x256xf32> -> vector<128x256xf32>
    %c0_4 = arith.constant 0 : index
    %c0_5 = arith.constant 0 : index
    %5 = vector.load %arg3[%c0_4, %c0_5] : memref<128x1xf32, #tpu.memory_space<vmem>>, vector<128x1xf32>
    %6 = vector.broadcast %5 : vector<128x1xf32> to vector<128x256xf32>
    %7 = arith.addf %4, %6 : vector<128x256xf32>
    %cst_6 = arith.constant 0.000000e+00 : f32
    %cst_7 = arith.constant 6.000000e+00 : f32
    %8 = vector.broadcast %cst_6 : f32 to vector<128x256xf32>
    %9 = arith.maximumf %8, %7 : vector<128x256xf32>
    %10 = vector.broadcast %cst_7 : f32 to vector<128x256xf32>
    %11 = arith.minimumf %10, %9 : vector<128x256xf32>
    %c0_8 = arith.constant 0 : index
    %c0_9 = arith.constant 0 : index
    %12 = vector.load %arg4[%c0_8, %c0_9] : memref<128x9xf32, #tpu.memory_space<vmem>>, vector<128x9xf32>
    %13 = vector.extract_strided_slice %12 {offsets = [0, 4], sizes = [128, 1], strides = [1, 1]} : vector<128x9xf32> to vector<128x1xf32>
    %14 = vector.broadcast %13 : vector<128x1xf32> to vector<128x256xf32>
    %15 = arith.mulf %11, %14 : vector<128x256xf32>
    %c17_i32 = arith.constant 17 : i32
    %16 = tpu.dynamic_rotate %11 by %c17_i32 dim 1 : vector<128x256xf32>, i32 -> vector<128x256xf32>
    %17 = vector.extract_strided_slice %12 {offsets = [0, 0], sizes = [128, 1], strides = [1, 1]} : vector<128x9xf32> to vector<128x1xf32>
    %18 = vector.broadcast %17 : vector<128x1xf32> to vector<128x256xf32>
    %19 = arith.mulf %16, %18 : vector<128x256xf32>
    %c0_10 = arith.constant 0 : index
    %c0_11 = arith.constant 0 : index
    %20 = vector.load %arg6[%c0_10, %c0_11] : memref<9x256xf32, #tpu.memory_space<vmem>>, vector<1x256xf32>
    %21 = vector.broadcast %20 : vector<1x256xf32> to vector<128x256xf32>
    %22 = arith.mulf %19, %21 : vector<128x256xf32>
    %23 = arith.addf %15, %22 : vector<128x256xf32>
    %c16_i32 = arith.constant 16 : i32
    %24 = tpu.dynamic_rotate %11 by %c16_i32 dim 1 : vector<128x256xf32>, i32 -> vector<128x256xf32>
    %25 = vector.extract_strided_slice %12 {offsets = [0, 1], sizes = [128, 1], strides = [1, 1]} : vector<128x9xf32> to vector<128x1xf32>
    %26 = vector.broadcast %25 : vector<128x1xf32> to vector<128x256xf32>
    %27 = arith.mulf %24, %26 : vector<128x256xf32>
    %c1 = arith.constant 1 : index
    %c0_12 = arith.constant 0 : index
    %28 = vector.load %arg6[%c1, %c0_12] : memref<9x256xf32, #tpu.memory_space<vmem>>, vector<1x256xf32>
    %29 = vector.broadcast %28 : vector<1x256xf32> to vector<128x256xf32>
    %30 = arith.mulf %27, %29 : vector<128x256xf32>
    %31 = arith.addf %23, %30 : vector<128x256xf32>
    %c15_i32 = arith.constant 15 : i32
    %32 = tpu.dynamic_rotate %11 by %c15_i32 dim 1 : vector<128x256xf32>, i32 -> vector<128x256xf32>
    %33 = vector.extract_strided_slice %12 {offsets = [0, 2], sizes = [128, 1], strides = [1, 1]} : vector<128x9xf32> to vector<128x1xf32>
    %34 = vector.broadcast %33 : vector<128x1xf32> to vector<128x256xf32>
    %35 = arith.mulf %32, %34 : vector<128x256xf32>
    %c2 = arith.constant 2 : index
    %c0_13 = arith.constant 0 : index
    %36 = vector.load %arg6[%c2, %c0_13] : memref<9x256xf32, #tpu.memory_space<vmem>>, vector<1x256xf32>
    %37 = vector.broadcast %36 : vector<1x256xf32> to vector<128x256xf32>
    %38 = arith.mulf %35, %37 : vector<128x256xf32>
    %39 = arith.addf %31, %38 : vector<128x256xf32>
    %c1_i32 = arith.constant 1 : i32
    %40 = tpu.dynamic_rotate %11 by %c1_i32 dim 1 : vector<128x256xf32>, i32 -> vector<128x256xf32>
    %41 = vector.extract_strided_slice %12 {offsets = [0, 3], sizes = [128, 1], strides = [1, 1]} : vector<128x9xf32> to vector<128x1xf32>
    %42 = vector.broadcast %41 : vector<128x1xf32> to vector<128x256xf32>
    %43 = arith.mulf %40, %42 : vector<128x256xf32>
    %c3 = arith.constant 3 : index
    %c0_14 = arith.constant 0 : index
    %44 = vector.load %arg6[%c3, %c0_14] : memref<9x256xf32, #tpu.memory_space<vmem>>, vector<1x256xf32>
    %45 = vector.broadcast %44 : vector<1x256xf32> to vector<128x256xf32>
    %46 = arith.mulf %43, %45 : vector<128x256xf32>
    %47 = arith.addf %39, %46 : vector<128x256xf32>
    %c255_i32 = arith.constant 255 : i32
    %48 = tpu.dynamic_rotate %11 by %c255_i32 dim 1 : vector<128x256xf32>, i32 -> vector<128x256xf32>
    %49 = vector.extract_strided_slice %12 {offsets = [0, 5], sizes = [128, 1], strides = [1, 1]} : vector<128x9xf32> to vector<128x1xf32>
    %50 = vector.broadcast %49 : vector<128x1xf32> to vector<128x256xf32>
    %51 = arith.mulf %48, %50 : vector<128x256xf32>
    %c5 = arith.constant 5 : index
    %c0_15 = arith.constant 0 : index
    %52 = vector.load %arg6[%c5, %c0_15] : memref<9x256xf32, #tpu.memory_space<vmem>>, vector<1x256xf32>
    %53 = vector.broadcast %52 : vector<1x256xf32> to vector<128x256xf32>
    %54 = arith.mulf %51, %53 : vector<128x256xf32>
    %55 = arith.addf %47, %54 : vector<128x256xf32>
    %c241_i32 = arith.constant 241 : i32
    %56 = tpu.dynamic_rotate %11 by %c241_i32 dim 1 : vector<128x256xf32>, i32 -> vector<128x256xf32>
    %57 = vector.extract_strided_slice %12 {offsets = [0, 6], sizes = [128, 1], strides = [1, 1]} : vector<128x9xf32> to vector<128x1xf32>
    %58 = vector.broadcast %57 : vector<128x1xf32> to vector<128x256xf32>
    %59 = arith.mulf %56, %58 : vector<128x256xf32>
    %c6 = arith.constant 6 : index
    %c0_16 = arith.constant 0 : index
    %60 = vector.load %arg6[%c6, %c0_16] : memref<9x256xf32, #tpu.memory_space<vmem>>, vector<1x256xf32>
    %61 = vector.broadcast %60 : vector<1x256xf32> to vector<128x256xf32>
    %62 = arith.mulf %59, %61 : vector<128x256xf32>
    %63 = arith.addf %55, %62 : vector<128x256xf32>
    %c240_i32 = arith.constant 240 : i32
    %64 = tpu.dynamic_rotate %11 by %c240_i32 dim 1 : vector<128x256xf32>, i32 -> vector<128x256xf32>
    %65 = vector.extract_strided_slice %12 {offsets = [0, 7], sizes = [128, 1], strides = [1, 1]} : vector<128x9xf32> to vector<128x1xf32>
    %66 = vector.broadcast %65 : vector<128x1xf32> to vector<128x256xf32>
    %67 = arith.mulf %64, %66 : vector<128x256xf32>
    %c7 = arith.constant 7 : index
    %c0_17 = arith.constant 0 : index
    %68 = vector.load %arg6[%c7, %c0_17] : memref<9x256xf32, #tpu.memory_space<vmem>>, vector<1x256xf32>
    %69 = vector.broadcast %68 : vector<1x256xf32> to vector<128x256xf32>
    %70 = arith.mulf %67, %69 : vector<128x256xf32>
    %71 = arith.addf %63, %70 : vector<128x256xf32>
    %c239_i32 = arith.constant 239 : i32
    %72 = tpu.dynamic_rotate %11 by %c239_i32 dim 1 : vector<128x256xf32>, i32 -> vector<128x256xf32>
    %73 = vector.extract_strided_slice %12 {offsets = [0, 8], sizes = [128, 1], strides = [1, 1]} : vector<128x9xf32> to vector<128x1xf32>
    %74 = vector.broadcast %73 : vector<128x1xf32> to vector<128x256xf32>
    %75 = arith.mulf %72, %74 : vector<128x256xf32>
    %c8 = arith.constant 8 : index
    %c0_18 = arith.constant 0 : index
    %76 = vector.load %arg6[%c8, %c0_18] : memref<9x256xf32, #tpu.memory_space<vmem>>, vector<1x256xf32>
    %77 = vector.broadcast %76 : vector<1x256xf32> to vector<128x256xf32>
    %78 = arith.mulf %75, %77 : vector<128x256xf32>
    %79 = arith.addf %71, %78 : vector<128x256xf32>
    %c0_19 = arith.constant 0 : index
    %c0_20 = arith.constant 0 : index
    %80 = vector.load %arg5[%c0_19, %c0_20] : memref<128x1xf32, #tpu.memory_space<vmem>>, vector<128x1xf32>
    %81 = vector.broadcast %80 : vector<128x1xf32> to vector<128x256xf32>
    %82 = arith.addf %79, %81 : vector<128x256xf32>
    %cst_21 = arith.constant 0.000000e+00 : f32
    %cst_22 = arith.constant 6.000000e+00 : f32
    %83 = vector.broadcast %cst_21 : f32 to vector<128x256xf32>
    %84 = arith.maximumf %83, %82 : vector<128x256xf32>
    %85 = vector.broadcast %cst_22 : f32 to vector<128x256xf32>
    %86 = arith.minimumf %85, %84 : vector<128x256xf32>
    %c0_23 = arith.constant 0 : index
    %c0_24 = arith.constant 0 : index
    %87 = vector.load %arg7[%c0_23, %c0_24] : memref<32x128xbf16, #tpu.memory_space<vmem>>, vector<32x128xbf16>
    %88 = arith.truncf %86 : vector<128x256xf32> to vector<128x256xbf16>
    %cst_25 = arith.constant dense<0.000000e+00> : vector<32x256xf32>
    %89 = tpu.matmul %87, %88, %cst_25 {dimension_numbers = #tpu.dot_dimension_numbers<[1], [0], [0], [1], [0, 0, 1, 1], [], []>} : vector<32x128xbf16>, vector<128x256xbf16>, vector<32x256xf32> -> vector<32x256xf32>
    %c0_26 = arith.constant 0 : index
    %c0_27 = arith.constant 0 : index
    %90 = vector.load %arg8[%c0_26, %c0_27] : memref<32x1xf32, #tpu.memory_space<vmem>>, vector<32x1xf32>
    %91 = vector.broadcast %90 : vector<32x1xf32> to vector<32x256xf32>
    %92 = arith.addf %89, %91 : vector<32x256xf32>
    %93 = arith.addf %92, %1 : vector<32x256xf32>
    %c0_28 = arith.constant 0 : index
    %c0_29 = arith.constant 0 : index
    %c0_30 = arith.constant 0 : index
    %94 = vector.load %arg9[%c0_28, %c0_29, %c0_30] : memref<1x32x256xf32, #tpu.memory_space<vmem>>, vector<1x32x256xf32>
    %95 = vector.shape_cast %94 : vector<1x32x256xf32> to vector<32x256xf32>
    %96 = vector.shape_cast %93 : vector<32x256xf32> to vector<1x32x256xf32>
    tpu.vector_store %arg9[%c0_28, %c0_29, %c0_30], %96 {strides = array<i32>} : memref<1x32x256xf32, #tpu.memory_space<vmem>>, vector<1x32x256xf32>,
    return
  }
  func.func @transform_0(%arg0: i32) -> (i32, i32, i32) {
    %c0_i32 = arith.constant 0 : i32
    %c0_i32_0 = arith.constant 0 : i32
    %c0_i32_1 = arith.constant 0 : i32
    return %arg0, %c0_i32, %c0_i32_0 : i32, i32, i32
  }
  func.func @transform_1(%arg0: i32) -> (i32, i32) {
    %c0_i32 = arith.constant 0 : i32
    %c0_i32_0 = arith.constant 0 : i32
    %c0_i32_1 = arith.constant 0 : i32
    return %c0_i32, %c0_i32_0 : i32, i32
  }
  func.func @transform_2(%arg0: i32) -> (i32, i32) {
    %c0_i32 = arith.constant 0 : i32
    %c0_i32_0 = arith.constant 0 : i32
    %c0_i32_1 = arith.constant 0 : i32
    return %c0_i32, %c0_i32_0 : i32, i32
  }
  func.func @transform_3(%arg0: i32) -> (i32, i32) {
    %c0_i32 = arith.constant 0 : i32
    %c0_i32_0 = arith.constant 0 : i32
    %c0_i32_1 = arith.constant 0 : i32
    return %c0_i32, %c0_i32_0 : i32, i32
  }
  func.func @transform_4(%arg0: i32) -> (i32, i32) {
    %c0_i32 = arith.constant 0 : i32
    %c0_i32_0 = arith.constant 0 : i32
    %c0_i32_1 = arith.constant 0 : i32
    return %c0_i32, %c0_i32_0 : i32, i32
  }
  func.func @transform_5(%arg0: i32) -> (i32, i32) {
    %c0_i32 = arith.constant 0 : i32
    %c0_i32_0 = arith.constant 0 : i32
    %c0_i32_1 = arith.constant 0 : i32
    return %c0_i32, %c0_i32_0 : i32, i32
  }
  func.func @transform_6(%arg0: i32) -> (i32, i32) {
    %c0_i32 = arith.constant 0 : i32
    %c0_i32_0 = arith.constant 0 : i32
    %c0_i32_1 = arith.constant 0 : i32
    return %c0_i32, %c0_i32_0 : i32, i32
  }
  func.func @transform_7(%arg0: i32) -> (i32, i32) {
    %c0_i32 = arith.constant 0 : i32
    %c0_i32_0 = arith.constant 0 : i32
    %c0_i32_1 = arith.constant 0 : i32
    return %c0_i32, %c0_i32_0 : i32, i32
  }
  func.func @transform_8(%arg0: i32) -> (i32, i32, i32) {
    %c0_i32 = arith.constant 0 : i32
    %c0_i32_0 = arith.constant 0 : i32
    %c0_i32_1 = arith.constant 0 : i32
    return %arg0, %c0_i32, %c0_i32_0 : i32, i32, i32
  }
}

</mosaic_0001>

<llo_original>
// kernel: tpu_custom_call.1
$region0: #{tpu_custom_call.1}
  #allocation0 [shape = 'u32[]', space=smem, size = 0x4, offset = 0x4, fixed_abs, tag = 'smem constant byte address 0x4 - core index']
  #allocation1 [shape = 'u32[144,128]{1,0:T(1,128)}', space=vmem, size = 0x12000, scoped, tag = 'internal scratch']
  %s0 = inlined_call_operand.vmem [shape: f32[2,32,256], index: 0, kind: input, shape index: {}]
  %s1 = inlined_call_operand.vmem [shape: bf16[128,32], index: 1, kind: input, shape index: {}]
  %s2 = inlined_call_operand.vmem [shape: f32[128,1], index: 2, kind: input, shape index: {}]
  %s3 = inlined_call_operand.vmem [shape: f32[128,9], index: 3, kind: input, shape index: {}]
  %s4 = inlined_call_operand.vmem [shape: f32[128,1], index: 4, kind: input, shape index: {}]
  %s5 = inlined_call_operand.vmem [shape: f32[9,256], index: 5, kind: input, shape index: {}]
  %s6 = inlined_call_operand.vmem [shape: bf16[32,128], index: 6, kind: input, shape index: {}]
  %s7 = inlined_call_operand.vmem [shape: f32[32,1], index: 7, kind: input, shape index: {}]
  %s8 = inlined_call_operand.hbm [shape: f32[2,32,256], index: 8, kind: output, shape index: {}]
  %s9 = sld [smem:[#allocation0]]
  $region65: #{tpu_custom_call.1} parent=0
    _
  %s11 = ssub.s32 1, %s9
  %s12 = scalar_select 0, %s11, %s9
  $region1: #{tpu_custom_call.1} parent=0
    #allocation2 [shape = 'u8[65536]{0}', space=vmem, size = 0x10000, scoped, tag = 'output window, operand 0']
    #allocation3 [shape = 's32[2]{0}', space=sflag, size = 0x8, scoped, tag = 'scoped memory for tpu_custom_call.1']
    %13 = vsyncpa [#allocation3], 0
    %s14 = scalar_lea.sflag [#allocation3], 1
    %15 = vsyncpa %s14, 0
    loop: start=0, step=1, limit=4
    $region2: #{tpu_custom_call.1} parent=1 // loop_pre_header
      _
    $region3: #{tpu_custom_call.1} parent=1 // loop_header
      %s17 = sphi 0, %s21
      %p18 = scmp.ge.s32.totalorder %s17, 4
      %s27 = sphi 0, %s29
      %s30 = sphi 0, %s27
      %s31 = sphi 0, %s30
      %s47 = sphi 0, %s31
      %s51 = sphi 0, %s51
      %s53 = sphi 0, %s51
      %s54 = sphi 0, %s53
      %s68 = sphi 0, %s54
      %s72 = sphi 0, %s72
      %s74 = sphi 0, %s72
      %s75 = sphi 0, %s74
      %s89 = sphi 0, %s75
      %s93 = sphi 0, %s93
      %s95 = sphi 0, %s93
      %s96 = sphi 0, %s95
      %s110 = sphi 0, %s96
      %s114 = sphi 0, %s114
      %s116 = sphi 0, %s114
      %s117 = sphi 0, %s116
      %s131 = sphi 0, %s117
      %s135 = sphi 0, %s135
      %s137 = sphi 0, %s135
      %s138 = sphi 0, %s137
      %s152 = sphi 0, %s138
      %s156 = sphi 0, %s156
      %s158 = sphi 0, %s156
      %s159 = sphi 0, %s158
      %s173 = sphi 0, %s159
      %s177 = sphi 0, %s177
      %s179 = sphi 0, %s177
      %s180 = sphi 0, %s179
      %s194 = sphi 0, %s180
      %s200 = sphi 0, %s202
      %s203 = sphi 0, %s200
      %s204 = sphi 0, %s203
      %s220 = sphi 0, %s204
    $region4: #{tpu_custom_call.1} parent=1 // loop_header_branch
      %20 = sbr.rel (%p18) target = $region8
    $region5: #{tpu_custom_call.1} parent=1 // loop_body
      %s22 = ssub.s32 %s17, 1
      %s23 = ssub.s32 %s17, 2
      %s24 = sadd.s32 %s17, 1
      %s25 = ssub.s32 %s17, %s24
      %p26 = scmp.eq.s32.totalorder %s25, 0
      %s28 = sadd.s32 %s27, 1
      %s29 = scalar_select %p26, %s27, %s28
      %p32 = pneg %p26
      %p33 = scmp.eq.s32.totalorder %s17, 1
      %p34 = por %p32, %p33
      %p35 = scmp.ne.s32.totalorder %s27, %s30
      %p36 = scmp.eq.s32.totalorder %s17, 0
      %p37 = por %p35, %p36
      %p38 = scmp.ne.s32.totalorder %s27, %s30
      %p39 = scmp.eq.s32.totalorder %s22, 1
      %p40 = por %p38, %p39
      %p41 = scmp.ne.s32.totalorder %s30, %s31
      %p42 = scmp.eq.s32.totalorder %s22, 0
      %p43 = por %p41, %p42
      %p44 = scmp.ne.s32.totalorder %s30, %s31
      %p45 = scmp.eq.s32.totalorder %s23, 1
      %p46 = por %p44, %p45
      %p48 = scmp.ne.s32.totalorder %s31, %s47
      %p49 = scmp.eq.s32.totalorder %s23, 0
      %p50 = por %p48, %p49
      %s52 = sadd.s32 %s51, 1
      %p55 = scmp.eq.s32.totalorder %s17, 1
      %p56 = scmp.ne.s32.totalorder %s51, %s53
      %p57 = scmp.eq.s32.totalorder %s17, 0
      %p58 = por %p56, %p57
      %p59 = scmp.ne.s32.totalorder %s51, %s53
      %p60 = scmp.eq.s32.totalorder %s22, 1
      %p61 = por %p59, %p60
      %p62 = scmp.ne.s32.totalorder %s53, %s54
      %p63 = scmp.eq.s32.totalorder %s22, 0
      %p64 = por %p62, %p63
      %p65 = scmp.ne.s32.totalorder %s53, %s54
      %p66 = scmp.eq.s32.totalorder %s23, 1
      %p67 = por %p65, %p66
      %p69 = scmp.ne.s32.totalorder %s54, %s68
      %p70 = scmp.eq.s32.totalorder %s23, 0
      %p71 = por %p69, %p70
      %s73 = sadd.s32 %s72, 1
      %p76 = scmp.eq.s32.totalorder %s17, 1
      %p77 = scmp.ne.s32.totalorder %s72, %s74
      %p78 = scmp.eq.s32.totalorder %s17, 0
      %p79 = por %p77, %p78
      %p80 = scmp.ne.s32.totalorder %s72, %s74
      %p81 = scmp.eq.s32.totalorder %s22, 1
      %p82 = por %p80, %p81
      %p83 = scmp.ne.s32.totalorder %s74, %s75
      %p84 = scmp.eq.s32.totalorder %s22, 0
      %p85 = por %p83, %p84
      %p86 = scmp.ne.s32.totalorder %s74, %s75
      %p87 = scmp.eq.s32.totalorder %s23, 1
      %p88 = por %p86, %p87
      %p90 = scmp.ne.s32.totalorder %s75, %s89
      %p91 = scmp.eq.s32.totalorder %s23, 0
      %p92 = por %p90, %p91
      %s94 = sadd.s32 %s93, 1
      %p97 = scmp.eq.s32.totalorder %s17, 1
      %p98 = scmp.ne.s32.totalorder %s93, %s95
      %p99 = scmp.eq.s32.totalorder %s17, 0
      %p100 = por %p98, %p99
      %p101 = scmp.ne.s32.totalorder %s93, %s95
      %p102 = scmp.eq.s32.totalorder %s22, 1
      %p103 = por %p101, %p102
      %p104 = scmp.ne.s32.totalorder %s95, %s96
      %p105 = scmp.eq.s32.totalorder %s22, 0
      %p106 = por %p104, %p105
      %p107 = scmp.ne.s32.totalorder %s95, %s96
      %p108 = scmp.eq.s32.totalorder %s23, 1
      %p109 = por %p107, %p108
      %p111 = scmp.ne.s32.totalorder %s96, %s110
      %p112 = scmp.eq.s32.totalorder %s23, 0
      %p113 = por %p111, %p112
      %s115 = sadd.s32 %s114, 1
      %p118 = scmp.eq.s32.totalorder %s17, 1
      %p119 = scmp.ne.s32.totalorder %s114, %s116
      %p120 = scmp.eq.s32.totalorder %s17, 0
      %p121 = por %p119, %p120
      %p122 = scmp.ne.s32.totalorder %s114, %s116
      %p123 = scmp.eq.s32.totalorder %s22, 1
      %p124 = por %p122, %p123
      %p125 = scmp.ne.s32.totalorder %s116, %s117
      %p126 = scmp.eq.s32.totalorder %s22, 0
      %p127 = por %p125, %p126
      %p128 = scmp.ne.s32.totalorder %s116, %s117
      %p129 = scmp.eq.s32.totalorder %s23, 1
      %p130 = por %p128, %p129
      %p132 = scmp.ne.s32.totalorder %s117, %s131
      %p133 = scmp.eq.s32.totalorder %s23, 0
      %p134 = por %p132, %p133
      %s136 = sadd.s32 %s135, 1
      %p139 = scmp.eq.s32.totalorder %s17, 1
      %p140 = scmp.ne.s32.totalorder %s135, %s137
      %p141 = scmp.eq.s32.totalorder %s17, 0
      %p142 = por %p140, %p141
      %p143 = scmp.ne.s32.totalorder %s135, %s137
      %p144 = scmp.eq.s32.totalorder %s22, 1
      %p145 = por %p143, %p144
      %p146 = scmp.ne.s32.totalorder %s137, %s138
      %p147 = scmp.eq.s32.totalorder %s22, 0
      %p148 = por %p146, %p147
      %p149 = scmp.ne.s32.totalorder %s137, %s138
      %p150 = scmp.eq.s32.totalorder %s23, 1
      %p151 = por %p149, %p150
      %p153 = scmp.ne.s32.totalorder %s138, %s152
      %p154 = scmp.eq.s32.totalorder %s23, 0
      %p155 = por %p153, %p154
      %s157 = sadd.s32 %s156, 1
      %p160 = scmp.eq.s32.totalorder %s17, 1
      %p161 = scmp.ne.s32.totalorder %s156, %s158
      %p162 = scmp.eq.s32.totalorder %s17, 0
      %p163 = por %p161, %p162
      %p164 = scmp.ne.s32.totalorder %s156, %s158
      %p165 = scmp.eq.s32.totalorder %s22, 1
      %p166 = por %p164, %p165
      %p167 = scmp.ne.s32.totalorder %s158, %s159
      %p168 = scmp.eq.s32.totalorder %s22, 0
      %p169 = por %p167, %p168
      %p170 = scmp.ne.s32.totalorder %s158, %s159
      %p171 = scmp.eq.s32.totalorder %s23, 1
      %p172 = por %p170, %p171
      %p174 = scmp.ne.s32.totalorder %s159, %s173
      %p175 = scmp.eq.s32.totalorder %s23, 0
      %p176 = por %p174, %p175
      %s178 = sadd.s32 %s177, 1
      %p181 = scmp.eq.s32.totalorder %s17, 1
      %p182 = scmp.ne.s32.totalorder %s177, %s179
      %p183 = scmp.eq.s32.totalorder %s17, 0
      %p184 = por %p182, %p183
      %p185 = scmp.ne.s32.totalorder %s177, %s179
      %p186 = scmp.eq.s32.totalorder %s22, 1
      %p187 = por %p185, %p186
      %p188 = scmp.ne.s32.totalorder %s179, %s180
      %p189 = scmp.eq.s32.totalorder %s22, 0
      %p190 = por %p188, %p189
      %p191 = scmp.ne.s32.totalorder %s179, %s180
      %p192 = scmp.eq.s32.totalorder %s23, 1
      %p193 = por %p191, %p192
      %p195 = scmp.ne.s32.totalorder %s180, %s194
      %p196 = scmp.eq.s32.totalorder %s23, 0
      %p197 = por %p195, %p196
      %s198 = ssub.s32 %s17, %s24
      %p199 = scmp.eq.s32.totalorder %s198, 0
      %s201 = sadd.s32 %s200, 1
      %s202 = scalar_select %p199, %s200, %s201
      %p205 = pneg %p199
      %p206 = scmp.eq.s32.totalorder %s17, 1
      %p207 = por %p205, %p206
      %p208 = scmp.ne.s32.totalorder %s200, %s203
      %p209 = scmp.eq.s32.totalorder %s17, 0
      %p210 = por %p208, %p209
      %p211 = scmp.ne.s32.totalorder %s200, %s203
      %p212 = scmp.eq.s32.totalorder %s22, 1
      %p213 = por %p211, %p212
      %p214 = scmp.ne.s32.totalorder %s203, %s204
      %p215 = scmp.eq.s32.totalorder %s22, 0
      %p216 = por %p214, %p215
      %p217 = scmp.ne.s32.totalorder %s203, %s204
      %p218 = scmp.eq.s32.totalorder %s23, 1
      %p219 = por %p217, %p218
      %p221 = scmp.ne.s32.totalorder %s204, %s220
      %p222 = scmp.eq.s32.totalorder %s23, 0
      %p223 = por %p221, %p222
      %p224 = scmp.le.s32.totalorder 1, %s17
      %p225 = scmp.lt.s32.totalorder %s17, 3
      %p226 = pnand %p224, %p225
      %p227 = pneg %p226
      // Predicated region
      $region9: #{tpu_custom_call.1} parent=5 // pred_check
        _
      $region10: #{tpu_custom_call.1} parent=5 // pred_check_branch
        %229 = sbr.rel (%p226) target = $region12
      $region11: #{tpu_custom_call.1} parent=5 // pred_region
        %s230 = ssub.s32 %s17, 1
        // Predicated region
        $region13: #{tpu_custom_call.1} parent=11 // pred_check
          %p231 = pneg %p64
        $region14: #{tpu_custom_call.1} parent=11 // pred_check_branch
          %233 = sbr.rel (%p231) target = $region16
        $region15: #{tpu_custom_call.1} parent=11 // pred_region
          _
        $region16: #{tpu_custom_call.1} parent=11 // pred_fallthru
          _
        // Predicated region
        $region17: #{tpu_custom_call.1} parent=11 // pred_check
          %p234 = pneg %p85
        $region18: #{tpu_custom_call.1} parent=11 // pred_check_branch
          %236 = sbr.rel (%p234) target = $region20
        $region19: #{tpu_custom_call.1} parent=11 // pred_region
          _
        $region20: #{tpu_custom_call.1} parent=11 // pred_fallthru
          _
        // Predicated region
        $region21: #{tpu_custom_call.1} parent=11 // pred_check
          %p237 = pneg %p106
        $region22: #{tpu_custom_call.1} parent=11 // pred_check_branch
          %239 = sbr.rel (%p237) target = $region24
        $region23: #{tpu_custom_call.1} parent=11 // pred_region
          _
        $region24: #{tpu_custom_call.1} parent=11 // pred_fallthru
          _
        // Predicated region
        $region25: #{tpu_custom_call.1} parent=11 // pred_check
          %p240 = pneg %p127
        $region26: #{tpu_custom_call.1} parent=11 // pred_check_branch
          %242 = sbr.rel (%p240) target = $region28
        $region27: #{tpu_custom_call.1} parent=11 // pred_region
          _
        $region28: #{tpu_custom_call.1} parent=11 // pred_fallthru
          _
        // Predicated region
        $region29: #{tpu_custom_call.1} parent=11 // pred_check
          %p243 = pneg %p148
        $region30: #{tpu_custom_call.1} parent=11 // pred_check_branch
          %245 = sbr.rel (%p243) target = $region32
        $region31: #{tpu_custom_call.1} parent=11 // pred_region
          _
        $region32: #{tpu_custom_call.1} parent=11 // pred_fallthru
          _
        // Predicated region
        $region33: #{tpu_custom_call.1} parent=11 // pred_check
          %p246 = pneg %p169
        $region34: #{tpu_custom_call.1} parent=11 // pred_check_branch
          %248 = sbr.rel (%p246) target = $region36
        $region35: #{tpu_custom_call.1} parent=11 // pred_region
          _
        $region36: #{tpu_custom_call.1} parent=11 // pred_fallthru
          _
        // Predicated region
        $region37: #{tpu_custom_call.1} parent=11 // pred_check
          %p249 = pneg %p190
        $region38: #{tpu_custom_call.1} parent=11 // pred_check_branch
          %251 = sbr.rel (%p249) target = $region40
        $region39: #{tpu_custom_call.1} parent=11 // pred_region
          _
        $region40: #{tpu_custom_call.1} parent=11 // pred_fallthru
          _
      $region12: #{tpu_custom_call.1} parent=5 // pred_fallthru
        _
      %p252 = scmp.lt.s32.totalorder %s17, 2
      // Predicated region
      $region41: #{tpu_custom_call.1} parent=5 // pred_check
        %p253 = pneg %p252
      $region42: #{tpu_custom_call.1} parent=5 // pred_check_branch
        %255 = sbr.rel (%p253) target = $region44
      $region43: #{tpu_custom_call.1} parent=5 // pred_region
        // Predicated region
        $region45: #{tpu_custom_call.1} parent=43 // pred_check
          %p256 = pneg %p37
        $region46: #{tpu_custom_call.1} parent=43 // pred_check_branch
          %258 = sbr.rel (%p256) target = $region48
        $region47: #{tpu_custom_call.1} parent=43 // pred_region
          %p259 = scmp.lt.s32.totalorder %s17, 1
          %s260 = scalar_select %p259, %s17, 1
          %s261 = smul.addr %s260, 8
          %s262 = smul.addr %s261, 8
          %s263 = scalar_lea.vmem %s0, %s262
        $region48: #{tpu_custom_call.1} parent=43 // pred_fallthru
          _
      $region44: #{tpu_custom_call.1} parent=5 // pred_fallthru
        _
      %p264 = scmp.le.s32.totalorder 1, %s17
      %p265 = scmp.lt.s32.totalorder %s17, 3
      %p266 = pnand %p264, %p265
      %p267 = pneg %p266
      // Predicated region
      $region49: #{tpu_custom_call.1} parent=5 // pred_check
        _
      $region50: #{tpu_custom_call.1} parent=5 // pred_check_branch
        %269 = sbr.rel (%p266) target = $region52
      $region51: #{tpu_custom_call.1} parent=5 // pred_region
        %s270 = ssub.s32 %s17, 1
        %p271 = scmp.lt.s32.totalorder %s22, 1
        %s272 = scalar_select %p271, %s22, 1
        %s273 = smul.addr %s272, 8
        %s274 = smul.addr %s273, 8
        %s275 = scalar_lea.vmem %s0, %s274
        %p276 = pneg %p43
        %p277 = pneg %p40
        %p278 = pneg %p64
        %p279 = pneg %p61
        %p280 = pneg %p85
        %p281 = pneg %p82
        %p282 = pneg %p106
        %p283 = pneg %p103
        %p284 = pneg %p127
        %p285 = pneg %p124
        %p286 = pneg %p148
        %p287 = pneg %p145
        %p288 = pneg %p169
        %p289 = pneg %p166
        %p290 = pneg %p190
        %p291 = pneg %p187
        %p292 = pneg %p216
        %p293 = pneg %p213
        %s294 = sand.u32 %s203, 1
        %s295 = scalar_lea.sflag [#allocation3], %s294
        %s296 = sand.u32 %s203, 1
        %s297 = smul.addr %s296, 64
        %s298 = scalar_lea.vmem [#allocation2], %s297
        %p299 = scmp.lt.s32.totalorder %s22, 1
        %s300 = scalar_select %p299, %s22, 1
        %s301 = smul.addr %s300, 8
        %s302 = smul.addr %s301, 8
        %s303 = scalar_lea.vmem %s0, %s302
        %v305 = vld [vmem:[%s303] sm:$0xff]
        %v306 = vld [vmem:[%s303 + $0x8] sm:$0xff]
        %v307 = vld [vmem:[%s303 + $0x10] sm:$0xff]
        %v308 = vld [vmem:[%s303 + $0x18] sm:$0xff]
        %v309 = vld [vmem:[%s303 + $0x20] sm:$0xff]
        %v310 = vld [vmem:[%s303 + $0x28] sm:$0xff]
        %v311 = vld [vmem:[%s303 + $0x30] sm:$0xff]
        %v312 = vld [vmem:[%s303 + $0x38] sm:$0xff]
        %v313 = vld [vmem:[%s1] sm:$0xf]
        %v314 = vld [vmem:[%s1 + $0x4] sm:$0xf]
        %v315 = vld [vmem:[%s1 + $0x8] sm:$0xf]
        %v316 = vld [vmem:[%s1 + $0xc] sm:$0xf]
        %v317 = vld [vmem:[%s1 + $0x10] sm:$0xf]
        %v318 = vld [vmem:[%s1 + $0x14] sm:$0xf]
        %v319 = vld [vmem:[%s1 + $0x18] sm:$0xf]
        %v320 = vld [vmem:[%s1 + $0x1c] sm:$0xf]
        %v321 = vld [vmem:[%s1 + $0x20] sm:$0xf]
        %v322 = vld [vmem:[%s1 + $0x24] sm:$0xf]
        %v323 = vld [vmem:[%s1 + $0x28] sm:$0xf]
        %v324 = vld [vmem:[%s1 + $0x2c] sm:$0xf]
        %v325 = vld [vmem:[%s1 + $0x30] sm:$0xf]
        %v326 = vld [vmem:[%s1 + $0x34] sm:$0xf]
        %v327 = vld [vmem:[%s1 + $0x38] sm:$0xf]
        %v328 = vld [vmem:[%s1 + $0x3c] sm:$0xf]
        %v329 = vpack.c.bf16 %v307, %v305
        %v330 = vpack.c.bf16 %v308, %v306
        %v331 = vpack.c.bf16 %v311, %v309
        %v332 = vpack.c.bf16 %v312, %v310
        %v333 = vld [vmem:[%s2] sm:$0xff]
        %v334 = vld [vmem:[%s2 + $0x8] sm:$0xff]
        %v335 = vld [vmem:[%s2 + $0x10] sm:$0xff]
        %v336 = vld [vmem:[%s2 + $0x18] sm:$0xff]
        %v337 = vld [vmem:[%s2 + $0x20] sm:$0xff]
        %v338 = vld [vmem:[%s2 + $0x28] sm:$0xff]
        %v339 = vld [vmem:[%s2 + $0x30] sm:$0xff]
        %v340 = vld [vmem:[%s2 + $0x38] sm:$0xff]
        %v341 = vld [vmem:[%s2 + $0x40] sm:$0xff]
        %v342 = vld [vmem:[%s2 + $0x48] sm:$0xff]
        %v343 = vld [vmem:[%s2 + $0x50] sm:$0xff]
        %v344 = vld [vmem:[%s2 + $0x58] sm:$0xff]
        %v345 = vld [vmem:[%s2 + $0x60] sm:$0xff]
        %v346 = vld [vmem:[%s2 + $0x68] sm:$0xff]
        %v347 = vld [vmem:[%s2 + $0x70] sm:$0xff]
        %v348 = vld [vmem:[%s2 + $0x78] sm:$0xff]
        %350 = vset.pattern.permute.xlu0 0
        %351 = vperm.xlu0 %350, %v333
        %v352 = vpop.permute.xlu0 %351
        %355 = vset.pattern.permute.xlu0 0
        %356 = vperm.xlu0 %355, %v334
        %v357 = vpop.permute.xlu0 %356
        %360 = vset.pattern.permute.xlu0 0
        %361 = vperm.xlu0 %360, %v335
        %v362 = vpop.permute.xlu0 %361
        %365 = vset.pattern.permute.xlu0 0
        %366 = vperm.xlu0 %365, %v336
        %v367 = vpop.permute.xlu0 %366
        %370 = vset.pattern.permute.xlu0 0
        %371 = vperm.xlu0 %370, %v337
        %v372 = vpop.permute.xlu0 %371
        %375 = vset.pattern.permute.xlu0 0
        %376 = vperm.xlu0 %375, %v338
        %v377 = vpop.permute.xlu0 %376
        %380 = vset.pattern.permute.xlu0 0
        %381 = vperm.xlu0 %380, %v339
        %v382 = vpop.permute.xlu0 %381
        %385 = vset.pattern.permute.xlu0 0
        %386 = vperm.xlu0 %385, %v340
        %v387 = vpop.permute.xlu0 %386
        %390 = vset.pattern.permute.xlu0 0
        %391 = vperm.xlu0 %390, %v341
        %v392 = vpop.permute.xlu0 %391
        %395 = vset.pattern.permute.xlu0 0
        %396 = vperm.xlu0 %395, %v342
        %v397 = vpop.permute.xlu0 %396
        %400 = vset.pattern.permute.xlu0 0
        %401 = vperm.xlu0 %400, %v343
        %v402 = vpop.permute.xlu0 %401
        %405 = vset.pattern.permute.xlu0 0
        %406 = vperm.xlu0 %405, %v344
        %v407 = vpop.permute.xlu0 %406
        %410 = vset.pattern.permute.xlu0 0
        %411 = vperm.xlu0 %410, %v345
        %v412 = vpop.permute.xlu0 %411
        %415 = vset.pattern.permute.xlu0 0
        %416 = vperm.xlu0 %415, %v346
        %v417 = vpop.permute.xlu0 %416
        %420 = vset.pattern.permute.xlu0 0
        %421 = vperm.xlu0 %420, %v347
        %v422 = vpop.permute.xlu0 %421
        %425 = vset.pattern.permute.xlu0 0
        %426 = vperm.xlu0 %425, %v348
        %v427 = vpop.permute.xlu0 %426
        %v445 = vunpack.c.l.b16 %v313
        %v446 = vunpack.c.l.b16 %v314
        %v447 = vunpack.c.l.b16 %v315
        %v448 = vunpack.c.l.b16 %v316
        %v449 = vunpack.c.l.b16 %v317
        %v450 = vunpack.c.l.b16 %v318
        %v451 = vunpack.c.l.b16 %v319
        %v452 = vunpack.c.l.b16 %v320
        %v453 = vunpack.c.l.b16 %v321
        %v454 = vunpack.c.l.b16 %v322
        %v455 = vunpack.c.l.b16 %v323
        %v456 = vunpack.c.l.b16 %v324
        %v457 = vunpack.c.l.b16 %v325
        %v458 = vunpack.c.l.b16 %v326
        %v459 = vunpack.c.l.b16 %v327
        %v460 = vunpack.c.l.b16 %v328
        %v461 = vpack.c.b16 %v446, %v445
        %v462 = vpack.c.b16 %v448, %v447
        %v463 = vpack.c.b16 %v450, %v449
        %v464 = vpack.c.b16 %v452, %v451
        %v465 = vpack.c.b16 %v454, %v453
        %v466 = vpack.c.b16 %v456, %v455
        %v467 = vpack.c.b16 %v458, %v457
        %v468 = vpack.c.b16 %v460, %v459
        %vm469 = vcmask 261120
        %v471 = vsel %vm469, %v461, 0
        %v474 = vsel %vm469, %v462, 0
        %v477 = vsel %vm469, %v463, 0
        %v480 = vsel %vm469, %v464, 0
        %v483 = vsel %vm469, %v465, 0
        %v486 = vsel %vm469, %v466, 0
        %v489 = vsel %vm469, %v467, 0
        %v492 = vsel %vm469, %v468, 0
        %494 = vmatprep.subr.bf16.mxu0 %v330
        %495 = vmatpush1.bf16.msra.mxu0 %v329
        %496 = vmatprep.subr.bf16.mxu0 %v332
        %497 = vmatpush1.bf16.msra.mxu0 %v331
        %498 = vmatprep.subr.bf16.mxu0 0
        %499 = vmatpush1.bf16.msra.mxu0 0
        %500 = vmatprep.subr.bf16.mxu0 0
        %501 = vmatpush1.bf16.msra.mxu0 0
        %502 = vmatprep.subr.bf16.mxu0 0
        %503 = vmatpush1.bf16.msra.mxu0 0
        %504 = vmatprep.subr.bf16.mxu0 0
        %505 = vmatpush1.bf16.msra.mxu0 0
        %506 = vmatprep.subr.bf16.mxu0 0
        %507 = vmatpush1.bf16.msra.mxu0 0
        %508 = vmatprep.subr.bf16.mxu0 0
        %509 = vmatpush1.bf16.msra.mxu0 0
        %510 = vmatprep.subr.bf16.mxu0 0
        %511 = vmatpush1.bf16.msra.mxu0 0
        %512 = vmatprep.subr.bf16.mxu0 0
        %513 = vmatpush1.bf16.msra.mxu0 0
        %514 = vmatprep.subr.bf16.mxu0 0
        %515 = vmatpush1.bf16.msra.mxu0 0
        %516 = vmatprep.subr.bf16.mxu0 0
        %517 = vmatpush1.bf16.msra.mxu0 0
        %518 = vmatprep.subr.bf16.mxu0 0
        %519 = vmatpush1.bf16.msra.mxu0 0
        %520 = vmatprep.subr.bf16.mxu0 0
        %521 = vmatpush1.bf16.msra.mxu0 0
        %522 = vmatprep.subr.bf16.mxu0 0
        %523 = vmatpush1.bf16.msra.mxu0 0
        %524 = vmatprep.subr.bf16.mxu0 0
        %525 = vmatpush1.bf16.msra.mxu0 0
        %526 = vmatprep.mubr.bf16.mxu0 0
        %527 = vmatmul.mubr.bf16.gmra.mrb[0].mxu0 %v471
        %v528 = vpop.f32.mrb[0].mxu0
        %v529 = vadd.f32 %v352, %v528
        %v530 = vpop.f32.mrb[0].mxu0
        %v531 = vadd.f32 %v352, %v530
        %v532 = vpop.f32.mrb[0].mxu0
        %v533 = vadd.f32 %v357, %v532
        %v534 = vpop.f32.mrb[0].mxu0
        %v535 = vadd.f32 %v357, %v534
        %536 = vmatprep.mubr.bf16.mxu0 0
        %537 = vmatmul.mubr.bf16.gmra.mrb[0].mxu0 %v474
        %v538 = vpop.f32.mrb[0].mxu0
        %v539 = vadd.f32 %v362, %v538
        %v540 = vpop.f32.mrb[0].mxu0
        %v541 = vadd.f32 %v362, %v540
        %v542 = vpop.f32.mrb[0].mxu0
        %v543 = vadd.f32 %v367, %v542
        %v544 = vpop.f32.mrb[0].mxu0
        %v545 = vadd.f32 %v367, %v544
        %546 = vmatprep.mubr.bf16.mxu0 0
        %547 = vmatmul.mubr.bf16.gmra.mrb[0].mxu0 %v477
        %v548 = vpop.f32.mrb[0].mxu0
        %v549 = vadd.f32 %v372, %v548
        %v550 = vpop.f32.mrb[0].mxu0
        %v551 = vadd.f32 %v372, %v550
        %v552 = vpop.f32.mrb[0].mxu0
        %v553 = vadd.f32 %v377, %v552
        %v554 = vpop.f32.mrb[0].mxu0
        %v555 = vadd.f32 %v377, %v554
        %556 = vmatprep.mubr.bf16.mxu0 0
        %557 = vmatmul.mubr.bf16.gmra.mrb[0].mxu0 %v480
        %v558 = vpop.f32.mrb[0].mxu0
        %v559 = vadd.f32 %v382, %v558
        %v560 = vpop.f32.mrb[0].mxu0
        %v561 = vadd.f32 %v382, %v560
        %v562 = vpop.f32.mrb[0].mxu0
        %v563 = vadd.f32 %v387, %v562
        %v564 = vpop.f32.mrb[0].mxu0
        %v565 = vadd.f32 %v387, %v564
        %566 = vmatprep.mubr.bf16.mxu0 0
        %567 = vmatmul.mubr.bf16.gmra.mrb[0].mxu0 %v483
        %v568 = vpop.f32.mrb[0].mxu0
        %v569 = vadd.f32 %v392, %v568
        %v570 = vpop.f32.mrb[0].mxu0
        %v571 = vadd.f32 %v392, %v570
        %v572 = vpop.f32.mrb[0].mxu0
        %v573 = vadd.f32 %v397, %v572
        %v574 = vpop.f32.mrb[0].mxu0
        %v575 = vadd.f32 %v397, %v574
        %576 = vmatprep.mubr.bf16.mxu0 0
        %577 = vmatmul.mubr.bf16.gmra.mrb[0].mxu0 %v486
        %v578 = vpop.f32.mrb[0].mxu0
        %v579 = vadd.f32 %v402, %v578
        %v580 = vpop.f32.mrb[0].mxu0
        %v581 = vadd.f32 %v402, %v580
        %v582 = vpop.f32.mrb[0].mxu0
        %v583 = vadd.f32 %v407, %v582
        %v584 = vpop.f32.mrb[0].mxu0
        %v585 = vadd.f32 %v407, %v584
        %586 = vmatprep.mubr.bf16.mxu0 0
        %587 = vmatmul.mubr.bf16.gmra.mrb[0].mxu0 %v489
        %v588 = vpop.f32.mrb[0].mxu0
        %v589 = vadd.f32 %v412, %v588
        %v590 = vpop.f32.mrb[0].mxu0
        %v591 = vadd.f32 %v412, %v590
        %v592 = vpop.f32.mrb[0].mxu0
        %v593 = vadd.f32 %v417, %v592
        %v594 = vpop.f32.mrb[0].mxu0
        %v595 = vadd.f32 %v417, %v594
        %596 = vmatprep.mubr.bf16.mxu0 0
        %597 = vmatmul.mubr.bf16.gmra.mrb[0].mxu0 %v492
        %v598 = vpop.f32.mrb[0].mxu0
        %v599 = vadd.f32 %v422, %v598
        %v600 = vpop.f32.mrb[0].mxu0
        %v601 = vadd.f32 %v422, %v600
        %v602 = vpop.f32.mrb[0].mxu0
        %v603 = vadd.f32 %v427, %v602
        %v604 = vpop.f32.mrb[0].mxu0
        %v605 = vadd.f32 %v427, %v604
        %606 = vdwg.mxu0
        %v607 = vmax.f32 %v529, 0.0
        %v608 = vmax.f32 %v531, 0.0
        %v609 = vmax.f32 %v533, 0.0
        %v610 = vmax.f32 %v535, 0.0
        %v611 = vmax.f32 %v539, 0.0
        %v612 = vmax.f32 %v541, 0.0
        %v613 = vmax.f32 %v543, 0.0
        %v614 = vmax.f32 %v545, 0.0
        %v615 = vmax.f32 %v549, 0.0
        %v616 = vmax.f32 %v551, 0.0
        %v617 = vmax.f32 %v553, 0.0
        %v618 = vmax.f32 %v555, 0.0
        %v619 = vmax.f32 %v559, 0.0
        %v620 = vmax.f32 %v561, 0.0
        %v621 = vmax.f32 %v563, 0.0
        %v622 = vmax.f32 %v565, 0.0
        %v623 = vmax.f32 %v569, 0.0
        %v624 = vmax.f32 %v571, 0.0
        %v625 = vmax.f32 %v573, 0.0
        %v626 = vmax.f32 %v575, 0.0
        %v627 = vmax.f32 %v579, 0.0
        %v628 = vmax.f32 %v581, 0.0
        %v629 = vmax.f32 %v583, 0.0
        %v630 = vmax.f32 %v585, 0.0
        %v631 = vmax.f32 %v589, 0.0
        %v632 = vmax.f32 %v591, 0.0
        %v633 = vmax.f32 %v593, 0.0
        %v634 = vmax.f32 %v595, 0.0
        %v635 = vmax.f32 %v599, 0.0
        %v636 = vmax.f32 %v601, 0.0
        %v637 = vmax.f32 %v603, 0.0
        %v638 = vmax.f32 %v605, 0.0
        %v639 = vmin.f32 %v607, 6.0
        %v640 = vmin.f32 %v608, 6.0
        %v641 = vmin.f32 %v609, 6.0
        %v642 = vmin.f32 %v610, 6.0
        %v643 = vmin.f32 %v611, 6.0
        %v644 = vmin.f32 %v612, 6.0
        %v645 = vmin.f32 %v613, 6.0
        %v646 = vmin.f32 %v614, 6.0
        %v647 = vmin.f32 %v615, 6.0
        %v648 = vmin.f32 %v616, 6.0
        %v649 = vmin.f32 %v617, 6.0
        %v650 = vmin.f32 %v618, 6.0
        %v651 = vmin.f32 %v619, 6.0
        %v652 = vmin.f32 %v620, 6.0
        %v653 = vmin.f32 %v621, 6.0
        %v654 = vmin.f32 %v622, 6.0
        %v655 = vmin.f32 %v623, 6.0
        %v656 = vmin.f32 %v624, 6.0
        %v657 = vmin.f32 %v625, 6.0
        %v658 = vmin.f32 %v626, 6.0
        %v659 = vmin.f32 %v627, 6.0
        %v660 = vmin.f32 %v628, 6.0
        %v661 = vmin.f32 %v629, 6.0
        %v662 = vmin.f32 %v630, 6.0
        %v663 = vmin.f32 %v631, 6.0
        %v664 = vmin.f32 %v632, 6.0
        %v665 = vmin.f32 %v633, 6.0
        %v666 = vmin.f32 %v634, 6.0
        %v667 = vmin.f32 %v635, 6.0
        %v668 = vmin.f32 %v636, 6.0
        %v669 = vmin.f32 %v637, 6.0
        %v670 = vmin.f32 %v638, 6.0
        %v671 = vld [vmem:[%s3] sm:$0xff]
        %v672 = vld [vmem:[%s3 + $0x8] sm:$0xff]
        %v673 = vld [vmem:[%s3 + $0x10] sm:$0xff]
        %v674 = vld [vmem:[%s3 + $0x18] sm:$0xff]
        %v675 = vld [vmem:[%s3 + $0x20] sm:$0xff]
        %v676 = vld [vmem:[%s3 + $0x28] sm:$0xff]
        %v677 = vld [vmem:[%s3 + $0x30] sm:$0xff]
        %v678 = vld [vmem:[%s3 + $0x38] sm:$0xff]
        %v679 = vld [vmem:[%s3 + $0x40] sm:$0xff]
        %v680 = vld [vmem:[%s3 + $0x48] sm:$0xff]
        %v681 = vld [vmem:[%s3 + $0x50] sm:$0xff]
        %v682 = vld [vmem:[%s3 + $0x58] sm:$0xff]
        %v683 = vld [vmem:[%s3 + $0x60] sm:$0xff]
        %v684 = vld [vmem:[%s3 + $0x68] sm:$0xff]
        %v685 = vld [vmem:[%s3 + $0x70] sm:$0xff]
        %v686 = vld [vmem:[%s3 + $0x78] sm:$0xff]
        %688 = vset.pattern.permute.xlu0 4
        %689 = vperm.xlu0 %688, %v671
        %v690 = vpop.permute.xlu0 %689
        %693 = vset.pattern.permute.xlu0 4
        %694 = vperm.xlu0 %693, %v672
        %v695 = vpop.permute.xlu0 %694
        %698 = vset.pattern.permute.xlu0 4
        %699 = vperm.xlu0 %698, %v673
        %v700 = vpop.permute.xlu0 %699
        %703 = vset.pattern.permute.xlu0 4
        %704 = vperm.xlu0 %703, %v674
        %v705 = vpop.permute.xlu0 %704
        %708 = vset.pattern.permute.xlu0 4
        %709 = vperm.xlu0 %708, %v675
        %v710 = vpop.permute.xlu0 %709
        %713 = vset.pattern.permute.xlu0 4
        %714 = vperm.xlu0 %713, %v676
        %v715 = vpop.permute.xlu0 %714
        %718 = vset.pattern.permute.xlu0 4
        %719 = vperm.xlu0 %718, %v677
        %v720 = vpop.permute.xlu0 %719
        %723 = vset.pattern.permute.xlu0 4
        %724 = vperm.xlu0 %723, %v678
        %v725 = vpop.permute.xlu0 %724
        %728 = vset.pattern.permute.xlu0 4
        %729 = vperm.xlu0 %728, %v679
        %v730 = vpop.permute.xlu0 %729
        %733 = vset.pattern.permute.xlu0 4
        %734 = vperm.xlu0 %733, %v680
        %v735 = vpop.permute.xlu0 %734
        %738 = vset.pattern.permute.xlu0 4
        %739 = vperm.xlu0 %738, %v681
        %v740 = vpop.permute.xlu0 %739
        %743 = vset.pattern.permute.xlu0 4
        %744 = vperm.xlu0 %743, %v682
        %v745 = vpop.permute.xlu0 %744
        %748 = vset.pattern.permute.xlu0 4
        %749 = vperm.xlu0 %748, %v683
        %v750 = vpop.permute.xlu0 %749
        %753 = vset.pattern.permute.xlu0 4
        %754 = vperm.xlu0 %753, %v684
        %v755 = vpop.permute.xlu0 %754
        %758 = vset.pattern.permute.xlu0 4
        %759 = vperm.xlu0 %758, %v685
        %v760 = vpop.permute.xlu0 %759
        %763 = vset.pattern.permute.xlu0 4
        %764 = vperm.xlu0 %763, %v686
        %v765 = vpop.permute.xlu0 %764
        %v767 = vmul.f32 %v639, %v690
        %v768 = vmul.f32 %v640, %v690
        %v769 = vmul.f32 %v641, %v695
        %v770 = vmul.f32 %v642, %v695
        %v771 = vmul.f32 %v643, %v700
        %v772 = vmul.f32 %v644, %v700
        %v773 = vmul.f32 %v645, %v705
        %v774 = vmul.f32 %v646, %v705
        %v775 = vmul.f32 %v647, %v710
        %v776 = vmul.f32 %v648, %v710
        %v777 = vmul.f32 %v649, %v715
        %v778 = vmul.f32 %v650, %v715
        %v779 = vmul.f32 %v651, %v720
        %v780 = vmul.f32 %v652, %v720
        %v781 = vmul.f32 %v653, %v725
        %v782 = vmul.f32 %v654, %v725
        %v783 = vmul.f32 %v655, %v730
        %v784 = vmul.f32 %v656, %v730
        %v785 = vmul.f32 %v657, %v735
        %v786 = vmul.f32 %v658, %v735
        %v787 = vmul.f32 %v659, %v740
        %v788 = vmul.f32 %v660, %v740
        %v789 = vmul.f32 %v661, %v745
        %v790 = vmul.f32 %v662, %v745
        %v791 = vmul.f32 %v663, %v750
        %v792 = vmul.f32 %v664, %v750
        %v793 = vmul.f32 %v665, %v755
        %v794 = vmul.f32 %v666, %v755
        %v795 = vmul.f32 %v667, %v760
        %v796 = vmul.f32 %v668, %v760
        %v797 = vmul.f32 %v669, %v765
        %v798 = vmul.f32 %v670, %v765
        %799 = vrot.lane.b32.xlu0 %v639, 17
        %v800 = vpop.permute.xlu0 %799
        %801 = vrot.lane.b32.xlu0 %v641, 17
        %v802 = vpop.permute.xlu0 %801
        %803 = vrot.lane.b32.xlu0 %v643, 17
        %v804 = vpop.permute.xlu0 %803
        %805 = vrot.lane.b32.xlu0 %v645, 17
        %v806 = vpop.permute.xlu0 %805
        %807 = vrot.lane.b32.xlu0 %v647, 17
        %v808 = vpop.permute.xlu0 %807
        %809 = vrot.lane.b32.xlu0 %v649, 17
        %v810 = vpop.permute.xlu0 %809
        %811 = vrot.lane.b32.xlu0 %v651, 17
        %v812 = vpop.permute.xlu0 %811
        %813 = vrot.lane.b32.xlu0 %v653, 17
        %v814 = vpop.permute.xlu0 %813
        %815 = vrot.lane.b32.xlu0 %v655, 17
        %v816 = vpop.permute.xlu0 %815
        %817 = vrot.lane.b32.xlu0 %v657, 17
        %v818 = vpop.permute.xlu0 %817
        %819 = vrot.lane.b32.xlu0 %v659, 17
        %v820 = vpop.permute.xlu0 %819
        %821 = vrot.lane.b32.xlu0 %v661, 17
        %v822 = vpop.permute.xlu0 %821
        %823 = vrot.lane.b32.xlu0 %v663, 17
        %v824 = vpop.permute.xlu0 %823
        %825 = vrot.lane.b32.xlu0 %v665, 17
        %v826 = vpop.permute.xlu0 %825
        %827 = vrot.lane.b32.xlu0 %v667, 17
        %v828 = vpop.permute.xlu0 %827
        %829 = vrot.lane.b32.xlu0 %v669, 17
        %v830 = vpop.permute.xlu0 %829
        %831 = vrot.lane.b32.xlu0 %v640, 17
        %v832 = vpop.permute.xlu0 %831
        %833 = vrot.lane.b32.xlu0 %v642, 17
        %v834 = vpop.permute.xlu0 %833
        %835 = vrot.lane.b32.xlu0 %v644, 17
        %v836 = vpop.permute.xlu0 %835
        %837 = vrot.lane.b32.xlu0 %v646, 17
        %v838 = vpop.permute.xlu0 %837
        %839 = vrot.lane.b32.xlu0 %v648, 17
        %v840 = vpop.permute.xlu0 %839
        %841 = vrot.lane.b32.xlu0 %v650, 17
        %v842 = vpop.permute.xlu0 %841
        %843 = vrot.lane.b32.xlu0 %v652, 17
        %v844 = vpop.permute.xlu0 %843
        %845 = vrot.lane.b32.xlu0 %v654, 17
        %v846 = vpop.permute.xlu0 %845
        %847 = vrot.lane.b32.xlu0 %v656, 17
        %v848 = vpop.permute.xlu0 %847
        %849 = vrot.lane.b32.xlu0 %v658, 17
        %v850 = vpop.permute.xlu0 %849
        %851 = vrot.lane.b32.xlu0 %v660, 17
        %v852 = vpop.permute.xlu0 %851
        %853 = vrot.lane.b32.xlu0 %v662, 17
        %v854 = vpop.permute.xlu0 %853
        %855 = vrot.lane.b32.xlu0 %v664, 17
        %v856 = vpop.permute.xlu0 %855
        %857 = vrot.lane.b32.xlu0 %v666, 17
        %v858 = vpop.permute.xlu0 %857
        %859 = vrot.lane.b32.xlu0 %v668, 17
        %v860 = vpop.permute.xlu0 %859
        %861 = vrot.lane.b32.xlu0 %v670, 17
        %v862 = vpop.permute.xlu0 %861
        %v863 = vlaneseq
        %v864 = vand.u32 %v863, 127
        %vm865 = vcmp.lt.s32.totalorder %v864, 17
        %v866 = vsel %vm865, %v800, %v832
        %v867 = vsel %vm865, %v802, %v834
        %v868 = vsel %vm865, %v804, %v836
        %v869 = vsel %vm865, %v806, %v838
        %v870 = vsel %vm865, %v808, %v840
        %v871 = vsel %vm865, %v810, %v842
        %v872 = vsel %vm865, %v812, %v844
        %v873 = vsel %vm865, %v814, %v846
        %v874 = vsel %vm865, %v816, %v848
        %v875 = vsel %vm865, %v818, %v850
        %v876 = vsel %vm865, %v820, %v852
        %v877 = vsel %vm865, %v822, %v854
        %v878 = vsel %vm865, %v824, %v856
        %v879 = vsel %vm865, %v826, %v858
        %v880 = vsel %vm865, %v828, %v860
        %v881 = vsel %vm865, %v830, %v862
        %v882 = vsel %vm865, %v832, %v800
        %v883 = vsel %vm865, %v834, %v802
        %v884 = vsel %vm865, %v836, %v804
        %v885 = vsel %vm865, %v838, %v806
        %v886 = vsel %vm865, %v840, %v808
        %v887 = vsel %vm865, %v842, %v810
        %v888 = vsel %vm865, %v844, %v812
        %v889 = vsel %vm865, %v846, %v814
        %v890 = vsel %vm865, %v848, %v816
        %v891 = vsel %vm865, %v850, %v818
        %v892 = vsel %vm865, %v852, %v820
        %v893 = vsel %vm865, %v854, %v822
        %v894 = vsel %vm865, %v856, %v824
        %v895 = vsel %vm865, %v858, %v826
        %v896 = vsel %vm865, %v860, %v828
        %v897 = vsel %vm865, %v862, %v830
        %898 = vset.pattern.permute.xlu0 0
        %899 = vperm.xlu0 %898, %v671
        %v900 = vpop.permute.xlu0 %899
        %902 = vset.pattern.permute.xlu0 0
        %903 = vperm.xlu0 %902, %v672
        %v904 = vpop.permute.xlu0 %903
        %906 = vset.pattern.permute.xlu0 0
        %907 = vperm.xlu0 %906, %v673
        %v908 = vpop.permute.xlu0 %907
        %910 = vset.pattern.permute.xlu0 0
        %911 = vperm.xlu0 %910, %v674
        %v912 = vpop.permute.xlu0 %911
        %914 = vset.pattern.permute.xlu0 0
        %915 = vperm.xlu0 %914, %v675
        %v916 = vpop.permute.xlu0 %915
        %918 = vset.pattern.permute.xlu0 0
        %919 = vperm.xlu0 %918, %v676
        %v920 = vpop.permute.xlu0 %919
        %922 = vset.pattern.permute.xlu0 0
        %923 = vperm.xlu0 %922, %v677
        %v924 = vpop.permute.xlu0 %923
        %926 = vset.pattern.permute.xlu0 0
        %927 = vperm.xlu0 %926, %v678
        %v928 = vpop.permute.xlu0 %927
        %930 = vset.pattern.permute.xlu0 0
        %931 = vperm.xlu0 %930, %v679
        %v932 = vpop.permute.xlu0 %931
        %934 = vset.pattern.permute.xlu0 0
        %935 = vperm.xlu0 %934, %v680
        %v936 = vpop.permute.xlu0 %935
        %938 = vset.pattern.permute.xlu0 0
        %939 = vperm.xlu0 %938, %v681
        %v940 = vpop.permute.xlu0 %939
        %942 = vset.pattern.permute.xlu0 0
        %943 = vperm.xlu0 %942, %v682
        %v944 = vpop.permute.xlu0 %943
        %946 = vset.pattern.permute.xlu0 0
        %947 = vperm.xlu0 %946, %v683
        %v948 = vpop.permute.xlu0 %947
        %950 = vset.pattern.permute.xlu0 0
        %951 = vperm.xlu0 %950, %v684
        %v952 = vpop.permute.xlu0 %951
        %954 = vset.pattern.permute.xlu0 0
        %955 = vperm.xlu0 %954, %v685
        %v956 = vpop.permute.xlu0 %955
        %958 = vset.pattern.permute.xlu0 0
        %959 = vperm.xlu0 %958, %v686
        %v960 = vpop.permute.xlu0 %959
        %v962 = vmul.f32 %v882, %v900
        %v963 = vmul.f32 %v866, %v900
        %v964 = vmul.f32 %v883, %v904
        %v965 = vmul.f32 %v867, %v904
        %v966 = vmul.f32 %v884, %v908
        %v967 = vmul.f32 %v868, %v908
        %v968 = vmul.f32 %v885, %v912
        %v969 = vmul.f32 %v869, %v912
        %v970 = vmul.f32 %v886, %v916
        %v971 = vmul.f32 %v870, %v916
        %v972 = vmul.f32 %v887, %v920
        %v973 = vmul.f32 %v871, %v920
        %v974 = vmul.f32 %v888, %v924
        %v975 = vmul.f32 %v872, %v924
        %v976 = vmul.f32 %v889, %v928
        %v977 = vmul.f32 %v873, %v928
        %v978 = vmul.f32 %v890, %v932
        %v979 = vmul.f32 %v874, %v932
        %v980 = vmul.f32 %v891, %v936
        %v981 = vmul.f32 %v875, %v936
        %v982 = vmul.f32 %v892, %v940
        %v983 = vmul.f32 %v876, %v940
        %v984 = vmul.f32 %v893, %v944
        %v985 = vmul.f32 %v877, %v944
        %v986 = vmul.f32 %v894, %v948
        %v987 = vmul.f32 %v878, %v948
        %v988 = vmul.f32 %v895, %v952
        %v989 = vmul.f32 %v879, %v952
        %v990 = vmul.f32 %v896, %v956
        %v991 = vmul.f32 %v880, %v956
        %v992 = vmul.f32 %v897, %v960
        %v993 = vmul.f32 %v881, %v960
        %v994 = vld [vmem:[%s5] ss:$8 sm:$0x3]
        %v996 = vlaneseq
        %v997 = vshrl.u32 %v996, 7
        %v998 = vsub.s32 0, %v997
        %v999 = vrot.slane %v994, %v998
        %v1000 = vlaneseq
        %v1001 = vshrl.u32 %v1000, 7
        %v1002 = vsub.s32 1, %v1001
        %v1003 = vrot.slane %v994, %v1002
        %v1006 = vmul.f32 %v962, %v999
        %v1007 = vmul.f32 %v963, %v1003
        %v1008 = vmul.f32 %v964, %v999
        %v1009 = vmul.f32 %v965, %v1003
        %v1010 = vmul.f32 %v966, %v999
        %v1011 = vmul.f32 %v967, %v1003
        %v1012 = vmul.f32 %v968, %v999
        %v1013 = vmul.f32 %v969, %v1003
        %v1014 = vmul.f32 %v970, %v999
        %v1015 = vmul.f32 %v971, %v1003
        %v1016 = vmul.f32 %v972, %v999
        %v1017 = vmul.f32 %v973, %v1003
        %v1018 = vmul.f32 %v974, %v999
        %v1019 = vmul.f32 %v975, %v1003
        %v1020 = vmul.f32 %v976, %v999
        %v1021 = vmul.f32 %v977, %v1003
        %v1022 = vmul.f32 %v978, %v999
        %v1023 = vmul.f32 %v979, %v1003
        %v1024 = vmul.f32 %v980, %v999
        %v1025 = vmul.f32 %v981, %v1003
        %v1026 = vmul.f32 %v982, %v999
        %v1027 = vmul.f32 %v983, %v1003
        %v1028 = vmul.f32 %v984, %v999
        %v1029 = vmul.f32 %v985, %v1003
        %v1030 = vmul.f32 %v986, %v999
        %v1031 = vmul.f32 %v987, %v1003
        %v1032 = vmul.f32 %v988, %v999
        %v1033 = vmul.f32 %v989, %v1003
        %v1034 = vmul.f32 %v990, %v999
        %v1035 = vmul.f32 %v991, %v1003
        %v1036 = vmul.f32 %v992, %v999
        %v1037 = vmul.f32 %v993, %v1003
        %v1038 = vadd.f32 %v767, %v1006
        %v1039 = vadd.f32 %v768, %v1007
        %v1040 = vadd.f32 %v769, %v1008
        %v1041 = vadd.f32 %v770, %v1009
        %v1042 = vadd.f32 %v771, %v1010
        %v1043 = vadd.f32 %v772, %v1011
        %v1044 = vadd.f32 %v773, %v1012
        %v1045 = vadd.f32 %v774, %v1013
        %v1046 = vadd.f32 %v775, %v1014
        %v1047 = vadd.f32 %v776, %v1015
        %v1048 = vadd.f32 %v777, %v1016
        %v1049 = vadd.f32 %v778, %v1017
        %v1050 = vadd.f32 %v779, %v1018
        %v1051 = vadd.f32 %v780, %v1019
        %v1052 = vadd.f32 %v781, %v1020
        %v1053 = vadd.f32 %v782, %v1021
        %v1054 = vadd.f32 %v783, %v1022
        %v1055 = vadd.f32 %v784, %v1023
        %v1056 = vadd.f32 %v785, %v1024
        %v1057 = vadd.f32 %v786, %v1025
        %v1058 = vadd.f32 %v787, %v1026
        %v1059 = vadd.f32 %v788, %v1027
        %v1060 = vadd.f32 %v789, %v1028
        %v1061 = vadd.f32 %v790, %v1029
        %v1062 = vadd.f32 %v791, %v1030
        %v1063 = vadd.f32 %v792, %v1031
        %v1064 = vadd.f32 %v793, %v1032
        %v1065 = vadd.f32 %v794, %v1033
        %v1066 = vadd.f32 %v795, %v1034
        %v1067 = vadd.f32 %v796, %v1035
        %v1068 = vadd.f32 %v797, %v1036
        %v1069 = vadd.f32 %v798, %v1037
        %1070 = vrot.lane.b32.xlu0 %v639, 16
        %v1071 = vpop.permute.xlu0 %1070
        %1072 = vrot.lane.b32.xlu0 %v641, 16
        %v1073 = vpop.permute.xlu0 %1072
        %1074 = vrot.lane.b32.xlu0 %v643, 16
        %v1075 = vpop.permute.xlu0 %1074
        %1076 = vrot.lane.b32.xlu0 %v645, 16
        %v1077 = vpop.permute.xlu0 %1076
        %1078 = vrot.lane.b32.xlu0 %v647, 16
        %v1079 = vpop.permute.xlu0 %1078
        %1080 = vrot.lane.b32.xlu0 %v649, 16
        %v1081 = vpop.permute.xlu0 %1080
        %1082 = vrot.lane.b32.xlu0 %v651, 16
        %v1083 = vpop.permute.xlu0 %1082
        %1084 = vrot.lane.b32.xlu0 %v653, 16
        %v1085 = vpop.permute.xlu0 %1084
        %1086 = vrot.lane.b32.xlu0 %v655, 16
        %v1087 = vpop.permute.xlu0 %1086
        %1088 = vrot.lane.b32.xlu0 %v657, 16
        %v1089 = vpop.permute.xlu0 %1088
        %1090 = vrot.lane.b32.xlu0 %v659, 16
        %v1091 = vpop.permute.xlu0 %1090
        %1092 = vrot.lane.b32.xlu0 %v661, 16
        %v1093 = vpop.permute.xlu0 %1092
        %1094 = vrot.lane.b32.xlu0 %v663, 16
        %v1095 = vpop.permute.xlu0 %1094
        %1096 = vrot.lane.b32.xlu0 %v665, 16
        %v1097 = vpop.permute.xlu0 %1096
        %1098 = vrot.lane.b32.xlu0 %v667, 16
        %v1099 = vpop.permute.xlu0 %1098
        %1100 = vrot.lane.b32.xlu0 %v669, 16
        %v1101 = vpop.permute.xlu0 %1100
        %1102 = vrot.lane.b32.xlu0 %v640, 16
        %v1103 = vpop.permute.xlu0 %1102
        %1104 = vrot.lane.b32.xlu0 %v642, 16
        %v1105 = vpop.permute.xlu0 %1104
        %1106 = vrot.lane.b32.xlu0 %v644, 16
        %v1107 = vpop.permute.xlu0 %1106
        %1108 = vrot.lane.b32.xlu0 %v646, 16
        %v1109 = vpop.permute.xlu0 %1108
        %1110 = vrot.lane.b32.xlu0 %v648, 16
        %v1111 = vpop.permute.xlu0 %1110
        %1112 = vrot.lane.b32.xlu0 %v650, 16
        %v1113 = vpop.permute.xlu0 %1112
        %1114 = vrot.lane.b32.xlu0 %v652, 16
        %v1115 = vpop.permute.xlu0 %1114
        %1116 = vrot.lane.b32.xlu0 %v654, 16
        %v1117 = vpop.permute.xlu0 %1116
        %1118 = vrot.lane.b32.xlu0 %v656, 16
        %v1119 = vpop.permute.xlu0 %1118
        %1120 = vrot.lane.b32.xlu0 %v658, 16
        %v1121 = vpop.permute.xlu0 %1120
        %1122 = vrot.lane.b32.xlu0 %v660, 16
        %v1123 = vpop.permute.xlu0 %1122
        %1124 = vrot.lane.b32.xlu0 %v662, 16
        %v1125 = vpop.permute.xlu0 %1124
        %1126 = vrot.lane.b32.xlu0 %v664, 16
        %v1127 = vpop.permute.xlu0 %1126
        %1128 = vrot.lane.b32.xlu0 %v666, 16
        %v1129 = vpop.permute.xlu0 %1128
        %1130 = vrot.lane.b32.xlu0 %v668, 16
        %v1131 = vpop.permute.xlu0 %1130
        %1132 = vrot.lane.b32.xlu0 %v670, 16
        %v1133 = vpop.permute.xlu0 %1132
        %vm1134 = vcmp.lt.s32.totalorder %v864, 16
        %v1135 = vsel %vm1134, %v1071, %v1103
        %v1136 = vsel %vm1134, %v1073, %v1105
        %v1137 = vsel %vm1134, %v1075, %v1107
        %v1138 = vsel %vm1134, %v1077, %v1109
        %v1139 = vsel %vm1134, %v1079, %v1111
        %v1140 = vsel %vm1134, %v1081, %v1113
        %v1141 = vsel %vm1134, %v1083, %v1115
        %v1142 = vsel %vm1134, %v1085, %v1117
        %v1143 = vsel %vm1134, %v1087, %v1119
        %v1144 = vsel %vm1134, %v1089, %v1121
        %v1145 = vsel %vm1134, %v1091, %v1123
        %v1146 = vsel %vm1134, %v1093, %v1125
        %v1147 = vsel %vm1134, %v1095, %v1127
        %v1148 = vsel %vm1134, %v1097, %v1129
        %v1149 = vsel %vm1134, %v1099, %v1131
        %v1150 = vsel %vm1134, %v1101, %v1133
        %v1151 = vsel %vm1134, %v1103, %v1071
        %v1152 = vsel %vm1134, %v1105, %v1073
        %v1153 = vsel %vm1134, %v1107, %v1075
        %v1154 = vsel %vm1134, %v1109, %v1077
        %v1155 = vsel %vm1134, %v1111, %v1079
        %v1156 = vsel %vm1134, %v1113, %v1081
        %v1157 = vsel %vm1134, %v1115, %v1083
        %v1158 = vsel %vm1134, %v1117, %v1085
        %v1159 = vsel %vm1134, %v1119, %v1087
        %v1160 = vsel %vm1134, %v1121, %v1089
        %v1161 = vsel %vm1134, %v1123, %v1091
        %v1162 = vsel %vm1134, %v1125, %v1093
        %v1163 = vsel %vm1134, %v1127, %v1095
        %v1164 = vsel %vm1134, %v1129, %v1097
        %v1165 = vsel %vm1134, %v1131, %v1099
        %v1166 = vsel %vm1134, %v1133, %v1101
        %1167 = vset.pattern.permute.xlu0 1
        %1168 = vperm.xlu0 %1167, %v671
        %v1169 = vpop.permute.xlu0 %1168
        %1171 = vset.pattern.permute.xlu0 1
        %1172 = vperm.xlu0 %1171, %v672
        %v1173 = vpop.permute.xlu0 %1172
        %1175 = vset.pattern.permute.xlu0 1
        %1176 = vperm.xlu0 %1175, %v673
        %v1177 = vpop.permute.xlu0 %1176
        %1179 = vset.pattern.permute.xlu0 1
        %1180 = vperm.xlu0 %1179, %v674
        %v1181 = vpop.permute.xlu0 %1180
        %1183 = vset.pattern.permute.xlu0 1
        %1184 = vperm.xlu0 %1183, %v675
        %v1185 = vpop.permute.xlu0 %1184
        %1187 = vset.pattern.permute.xlu0 1
        %1188 = vperm.xlu0 %1187, %v676
        %v1189 = vpop.permute.xlu0 %1188
        %1191 = vset.pattern.permute.xlu0 1
        %1192 = vperm.xlu0 %1191, %v677
        %v1193 = vpop.permute.xlu0 %1192
        %1195 = vset.pattern.permute.xlu0 1
        %1196 = vperm.xlu0 %1195, %v678
        %v1197 = vpop.permute.xlu0 %1196
        %1199 = vset.pattern.permute.xlu0 1
        %1200 = vperm.xlu0 %1199, %v679
        %v1201 = vpop.permute.xlu0 %1200
        %1203 = vset.pattern.permute.xlu0 1
        %1204 = vperm.xlu0 %1203, %v680
        %v1205 = vpop.permute.xlu0 %1204
        %1207 = vset.pattern.permute.xlu0 1
        %1208 = vperm.xlu0 %1207, %v681
        %v1209 = vpop.permute.xlu0 %1208
        %1211 = vset.pattern.permute.xlu0 1
        %1212 = vperm.xlu0 %1211, %v682
        %v1213 = vpop.permute.xlu0 %1212
        %1215 = vset.pattern.permute.xlu0 1
        %1216 = vperm.xlu0 %1215, %v683
        %v1217 = vpop.permute.xlu0 %1216
        %1219 = vset.pattern.permute.xlu0 1
        %1220 = vperm.xlu0 %1219, %v684
        %v1221 = vpop.permute.xlu0 %1220
        %1223 = vset.pattern.permute.xlu0 1
        %1224 = vperm.xlu0 %1223, %v685
        %v1225 = vpop.permute.xlu0 %1224
        %1227 = vset.pattern.permute.xlu0 1
        %1228 = vperm.xlu0 %1227, %v686
        %v1229 = vpop.permute.xlu0 %1228
        %v1231 = vmul.f32 %v1151, %v1169
        %v1232 = vmul.f32 %v1135, %v1169
        %v1233 = vmul.f32 %v1152, %v1173
        %v1234 = vmul.f32 %v1136, %v1173
        %v1235 = vmul.f32 %v1153, %v1177
        %v1236 = vmul.f32 %v1137, %v1177
        %v1237 = vmul.f32 %v1154, %v1181
        %v1238 = vmul.f32 %v1138, %v1181
        %v1239 = vmul.f32 %v1155, %v1185
        %v1240 = vmul.f32 %v1139, %v1185
        %v1241 = vmul.f32 %v1156, %v1189
        %v1242 = vmul.f32 %v1140, %v1189
        %v1243 = vmul.f32 %v1157, %v1193
        %v1244 = vmul.f32 %v1141, %v1193
        %v1245 = vmul.f32 %v1158, %v1197
        %v1246 = vmul.f32 %v1142, %v1197
        %v1247 = vmul.f32 %v1159, %v1201
        %v1248 = vmul.f32 %v1143, %v1201
        %v1249 = vmul.f32 %v1160, %v1205
        %v1250 = vmul.f32 %v1144, %v1205
        %v1251 = vmul.f32 %v1161, %v1209
        %v1252 = vmul.f32 %v1145, %v1209
        %v1253 = vmul.f32 %v1162, %v1213
        %v1254 = vmul.f32 %v1146, %v1213
        %v1255 = vmul.f32 %v1163, %v1217
        %v1256 = vmul.f32 %v1147, %v1217
        %v1257 = vmul.f32 %v1164, %v1221
        %v1258 = vmul.f32 %v1148, %v1221
        %v1259 = vmul.f32 %v1165, %v1225
        %v1260 = vmul.f32 %v1149, %v1225
        %v1261 = vmul.f32 %v1166, %v1229
        %v1262 = vmul.f32 %v1150, %v1229
        %s1263 = scalar_lea.vmem %s5, 1
        %v1264 = vld [vmem:[%s1263] ss:$8 sm:$0x3]
        %v1266 = vlaneseq
        %v1267 = vshrl.u32 %v1266, 7
        %v1268 = vsub.s32 0, %v1267
        %v1269 = vrot.slane %v1264, %v1268
        %v1270 = vlaneseq
        %v1271 = vshrl.u32 %v1270, 7
        %v1272 = vsub.s32 1, %v1271
        %v1273 = vrot.slane %v1264, %v1272
        %v1276 = vmul.f32 %v1231, %v1269
        %v1277 = vmul.f32 %v1232, %v1273
        %v1278 = vmul.f32 %v1233, %v1269
        %v1279 = vmul.f32 %v1234, %v1273
        %v1280 = vmul.f32 %v1235, %v1269
        %v1281 = vmul.f32 %v1236, %v1273
        %v1282 = vmul.f32 %v1237, %v1269
        %v1283 = vmul.f32 %v1238, %v1273
        %v1284 = vmul.f32 %v1239, %v1269
        %v1285 = vmul.f32 %v1240, %v1273
        %v1286 = vmul.f32 %v1241, %v1269
        %v1287 = vmul.f32 %v1242, %v1273
        %v1288 = vmul.f32 %v1243, %v1269
        %v1289 = vmul.f32 %v1244, %v1273
        %v1290 = vmul.f32 %v1245, %v1269
        %v1291 = vmul.f32 %v1246, %v1273
        %v1292 = vmul.f32 %v1247, %v1269
        %v1293 = vmul.f32 %v1248, %v1273
        %v1294 = vmul.f32 %v1249, %v1269
        %v1295 = vmul.f32 %v1250, %v1273
        %v1296 = vmul.f32 %v1251, %v1269
        %v1297 = vmul.f32 %v1252, %v1273
        %v1298 = vmul.f32 %v1253, %v1269
        %v1299 = vmul.f32 %v1254, %v1273
        %v1300 = vmul.f32 %v1255, %v1269
        %v1301 = vmul.f32 %v1256, %v1273
        %v1302 = vmul.f32 %v1257, %v1269
        %v1303 = vmul.f32 %v1258, %v1273
        %v1304 = vmul.f32 %v1259, %v1269
        %v1305 = vmul.f32 %v1260, %v1273
        %v1306 = vmul.f32 %v1261, %v1269
        %v1307 = vmul.f32 %v1262, %v1273
        %v1308 = vadd.f32 %v1038, %v1276
        %v1309 = vadd.f32 %v1039, %v1277
        %v1310 = vadd.f32 %v1040, %v1278
        %v1311 = vadd.f32 %v1041, %v1279
        %v1312 = vadd.f32 %v1042, %v1280
        %v1313 = vadd.f32 %v1043, %v1281
        %v1314 = vadd.f32 %v1044, %v1282
        %v1315 = vadd.f32 %v1045, %v1283
        %v1316 = vadd.f32 %v1046, %v1284
        %v1317 = vadd.f32 %v1047, %v1285
        %v1318 = vadd.f32 %v1048, %v1286
        %v1319 = vadd.f32 %v1049, %v1287
        %v1320 = vadd.f32 %v1050, %v1288
        %v1321 = vadd.f32 %v1051, %v1289
        %v1322 = vadd.f32 %v1052, %v1290
        %v1323 = vadd.f32 %v1053, %v1291
        %v1324 = vadd.f32 %v1054, %v1292
        %v1325 = vadd.f32 %v1055, %v1293
        %v1326 = vadd.f32 %v1056, %v1294
        %v1327 = vadd.f32 %v1057, %v1295
        %v1328 = vadd.f32 %v1058, %v1296
        %v1329 = vadd.f32 %v1059, %v1297
        %v1330 = vadd.f32 %v1060, %v1298
        %v1331 = vadd.f32 %v1061, %v1299
        %v1332 = vadd.f32 %v1062, %v1300
        %v1333 = vadd.f32 %v1063, %v1301
        %v1334 = vadd.f32 %v1064, %v1302
        %v1335 = vadd.f32 %v1065, %v1303
        %v1336 = vadd.f32 %v1066, %v1304
        %v1337 = vadd.f32 %v1067, %v1305
        %v1338 = vadd.f32 %v1068, %v1306
        %v1339 = vadd.f32 %v1069, %v1307
        %1340 = vrot.lane.b32.xlu0 %v639, 15
        %v1341 = vpop.permute.xlu0 %1340
        %1342 = vrot.lane.b32.xlu0 %v641, 15
        %v1343 = vpop.permute.xlu0 %1342
        %1344 = vrot.lane.b32.xlu0 %v643, 15
        %v1345 = vpop.permute.xlu0 %1344
        %1346 = vrot.lane.b32.xlu0 %v645, 15
        %v1347 = vpop.permute.xlu0 %1346
        %1348 = vrot.lane.b32.xlu0 %v647, 15
        %v1349 = vpop.permute.xlu0 %1348
        %1350 = vrot.lane.b32.xlu0 %v649, 15
        %v1351 = vpop.permute.xlu0 %1350
        %1352 = vrot.lane.b32.xlu0 %v651, 15
        %v1353 = vpop.permute.xlu0 %1352
        %1354 = vrot.lane.b32.xlu0 %v653, 15
        %v1355 = vpop.permute.xlu0 %1354
        %1356 = vrot.lane.b32.xlu0 %v655, 15
        %v1357 = vpop.permute.xlu0 %1356
        %1358 = vrot.lane.b32.xlu0 %v657, 15
        %v1359 = vpop.permute.xlu0 %1358
        %1360 = vrot.lane.b32.xlu0 %v659, 15
        %v1361 = vpop.permute.xlu0 %1360
        %1362 = vrot.lane.b32.xlu0 %v661, 15
        %v1363 = vpop.permute.xlu0 %1362
        %1364 = vrot.lane.b32.xlu0 %v663, 15
        %v1365 = vpop.permute.xlu0 %1364
        %1366 = vrot.lane.b32.xlu0 %v665, 15
        %v1367 = vpop.permute.xlu0 %1366
        %1368 = vrot.lane.b32.xlu0 %v667, 15
        %v1369 = vpop.permute.xlu0 %1368
        %1370 = vrot.lane.b32.xlu0 %v669, 15
        %v1371 = vpop.permute.xlu0 %1370
        %1372 = vrot.lane.b32.xlu0 %v640, 15
        %v1373 = vpop.permute.xlu0 %1372
        %1374 = vrot.lane.b32.xlu0 %v642, 15
        %v1375 = vpop.permute.xlu0 %1374
        %1376 = vrot.lane.b32.xlu0 %v644, 15
        %v1377 = vpop.permute.xlu0 %1376
        %1378 = vrot.lane.b32.xlu0 %v646, 15
        %v1379 = vpop.permute.xlu0 %1378
        %1380 = vrot.lane.b32.xlu0 %v648, 15
        %v1381 = vpop.permute.xlu0 %1380
        %1382 = vrot.lane.b32.xlu0 %v650, 15
        %v1383 = vpop.permute.xlu0 %1382
        %1384 = vrot.lane.b32.xlu0 %v652, 15
        %v1385 = vpop.permute.xlu0 %1384
        %1386 = vrot.lane.b32.xlu0 %v654, 15
        %v1387 = vpop.permute.xlu0 %1386
        %1388 = vrot.lane.b32.xlu0 %v656, 15
        %v1389 = vpop.permute.xlu0 %1388
        %1390 = vrot.lane.b32.xlu0 %v658, 15
        %v1391 = vpop.permute.xlu0 %1390
        %1392 = vrot.lane.b32.xlu0 %v660, 15
        %v1393 = vpop.permute.xlu0 %1392
        %1394 = vrot.lane.b32.xlu0 %v662, 15
        %v1395 = vpop.permute.xlu0 %1394
        %1396 = vrot.lane.b32.xlu0 %v664, 15
        %v1397 = vpop.permute.xlu0 %1396
        %1398 = vrot.lane.b32.xlu0 %v666, 15
        %v1399 = vpop.permute.xlu0 %1398
        %1400 = vrot.lane.b32.xlu0 %v668, 15
        %v1401 = vpop.permute.xlu0 %1400
        %1402 = vrot.lane.b32.xlu0 %v670, 15
        %v1403 = vpop.permute.xlu0 %1402
        %vm1404 = vcmp.lt.s32.totalorder %v864, 15
        %v1405 = vsel %vm1404, %v1341, %v1373
        %v1406 = vsel %vm1404, %v1343, %v1375
        %v1407 = vsel %vm1404, %v1345, %v1377
        %v1408 = vsel %vm1404, %v1347, %v1379
        %v1409 = vsel %vm1404, %v1349, %v1381
        %v1410 = vsel %vm1404, %v1351, %v1383
        %v1411 = vsel %vm1404, %v1353, %v1385
        %v1412 = vsel %vm1404, %v1355, %v1387
        %v1413 = vsel %vm1404, %v1357, %v1389
        %v1414 = vsel %vm1404, %v1359, %v1391
        %v1415 = vsel %vm1404, %v1361, %v1393
        %v1416 = vsel %vm1404, %v1363, %v1395
        %v1417 = vsel %vm1404, %v1365, %v1397
        %v1418 = vsel %vm1404, %v1367, %v1399
        %v1419 = vsel %vm1404, %v1369, %v1401
        %v1420 = vsel %vm1404, %v1371, %v1403
        %v1421 = vsel %vm1404, %v1373, %v1341
        %v1422 = vsel %vm1404, %v1375, %v1343
        %v1423 = vsel %vm1404, %v1377, %v1345
        %v1424 = vsel %vm1404, %v1379, %v1347
        %v1425 = vsel %vm1404, %v1381, %v1349
        %v1426 = vsel %vm1404, %v1383, %v1351
        %v1427 = vsel %vm1404, %v1385, %v1353
        %v1428 = vsel %vm1404, %v1387, %v1355
        %v1429 = vsel %vm1404, %v1389, %v1357
        %v1430 = vsel %vm1404, %v1391, %v1359
        %v1431 = vsel %vm1404, %v1393, %v1361
        %v1432 = vsel %vm1404, %v1395, %v1363
        %v1433 = vsel %vm1404, %v1397, %v1365
        %v1434 = vsel %vm1404, %v1399, %v1367
        %v1435 = vsel %vm1404, %v1401, %v1369
        %v1436 = vsel %vm1404, %v1403, %v1371
        %1437 = vset.pattern.permute.xlu0 2
        %1438 = vperm.xlu0 %1437, %v671
        %v1439 = vpop.permute.xlu0 %1438
        %1441 = vset.pattern.permute.xlu0 2
        %1442 = vperm.xlu0 %1441, %v672
        %v1443 = vpop.permute.xlu0 %1442
        %1445 = vset.pattern.permute.xlu0 2
        %1446 = vperm.xlu0 %1445, %v673
        %v1447 = vpop.permute.xlu0 %1446
        %1449 = vset.pattern.permute.xlu0 2
        %1450 = vperm.xlu0 %1449, %v674
        %v1451 = vpop.permute.xlu0 %1450
        %1453 = vset.pattern.permute.xlu0 2
        %1454 = vperm.xlu0 %1453, %v675
        %v1455 = vpop.permute.xlu0 %1454
        %1457 = vset.pattern.permute.xlu0 2
        %1458 = vperm.xlu0 %1457, %v676
        %v1459 = vpop.permute.xlu0 %1458
        %1461 = vset.pattern.permute.xlu0 2
        %1462 = vperm.xlu0 %1461, %v677
        %v1463 = vpop.permute.xlu0 %1462
        %1465 = vset.pattern.permute.xlu0 2
        %1466 = vperm.xlu0 %1465, %v678
        %v1467 = vpop.permute.xlu0 %1466
        %1469 = vset.pattern.permute.xlu0 2
        %1470 = vperm.xlu0 %1469, %v679
        %v1471 = vpop.permute.xlu0 %1470
        %1473 = vset.pattern.permute.xlu0 2
        %1474 = vperm.xlu0 %1473, %v680
        %v1475 = vpop.permute.xlu0 %1474
        %1477 = vset.pattern.permute.xlu0 2
        %1478 = vperm.xlu0 %1477, %v681
        %v1479 = vpop.permute.xlu0 %1478
        %1481 = vset.pattern.permute.xlu0 2
        %1482 = vperm.xlu0 %1481, %v682
        %v1483 = vpop.permute.xlu0 %1482
        %1485 = vset.pattern.permute.xlu0 2
        %1486 = vperm.xlu0 %1485, %v683
        %v1487 = vpop.permute.xlu0 %1486
        %1489 = vset.pattern.permute.xlu0 2
        %1490 = vperm.xlu0 %1489, %v684
        %v1491 = vpop.permute.xlu0 %1490
        %1493 = vset.pattern.permute.xlu0 2
        %1494 = vperm.xlu0 %1493, %v685
        %v1495 = vpop.permute.xlu0 %1494
        %1497 = vset.pattern.permute.xlu0 2
        %1498 = vperm.xlu0 %1497, %v686
        %v1499 = vpop.permute.xlu0 %1498
        %v1501 = vmul.f32 %v1421, %v1439
        %v1502 = vmul.f32 %v1405, %v1439
        %v1503 = vmul.f32 %v1422, %v1443
        %v1504 = vmul.f32 %v1406, %v1443
        %v1505 = vmul.f32 %v1423, %v1447
        %v1506 = vmul.f32 %v1407, %v1447
        %v1507 = vmul.f32 %v1424, %v1451
        %v1508 = vmul.f32 %v1408, %v1451
        %v1509 = vmul.f32 %v1425, %v1455
        %v1510 = vmul.f32 %v1409, %v1455
        %v1511 = vmul.f32 %v1426, %v1459
        %v1512 = vmul.f32 %v1410, %v1459
        %v1513 = vmul.f32 %v1427, %v1463
        %v1514 = vmul.f32 %v1411, %v1463
        %v1515 = vmul.f32 %v1428, %v1467
        %v1516 = vmul.f32 %v1412, %v1467
        %v1517 = vmul.f32 %v1429, %v1471
        %v1518 = vmul.f32 %v1413, %v1471
        %v1519 = vmul.f32 %v1430, %v1475
        %v1520 = vmul.f32 %v1414, %v1475
        %v1521 = vmul.f32 %v1431, %v1479
        %v1522 = vmul.f32 %v1415, %v1479
        %v1523 = vmul.f32 %v1432, %v1483
        %v1524 = vmul.f32 %v1416, %v1483
        %v1525 = vmul.f32 %v1433, %v1487
        %v1526 = vmul.f32 %v1417, %v1487
        %v1527 = vmul.f32 %v1434, %v1491
        %v1528 = vmul.f32 %v1418, %v1491
        %v1529 = vmul.f32 %v1435, %v1495
        %v1530 = vmul.f32 %v1419, %v1495
        %v1531 = vmul.f32 %v1436, %v1499
        %v1532 = vmul.f32 %v1420, %v1499
        %s1533 = scalar_lea.vmem %s5, 2
        %v1534 = vld [vmem:[%s1533] ss:$8 sm:$0x3]
        %v1536 = vlaneseq
        %v1537 = vshrl.u32 %v1536, 7
        %v1538 = vsub.s32 0, %v1537
        %v1539 = vrot.slane %v1534, %v1538
        %v1540 = vlaneseq
        %v1541 = vshrl.u32 %v1540, 7
        %v1542 = vsub.s32 1, %v1541
        %v1543 = vrot.slane %v1534, %v1542
        %v1546 = vmul.f32 %v1501, %v1539
        %v1547 = vmul.f32 %v1502, %v1543
        %v1548 = vmul.f32 %v1503, %v1539
        %v1549 = vmul.f32 %v1504, %v1543
        %v1550 = vmul.f32 %v1505, %v1539
        %v1551 = vmul.f32 %v1506, %v1543
        %v1552 = vmul.f32 %v1507, %v1539
        %v1553 = vmul.f32 %v1508, %v1543
        %v1554 = vmul.f32 %v1509, %v1539
        %v1555 = vmul.f32 %v1510, %v1543
        %v1556 = vmul.f32 %v1511, %v1539
        %v1557 = vmul.f32 %v1512, %v1543
        %v1558 = vmul.f32 %v1513, %v1539
        %v1559 = vmul.f32 %v1514, %v1543
        %v1560 = vmul.f32 %v1515, %v1539
        %v1561 = vmul.f32 %v1516, %v1543
        %v1562 = vmul.f32 %v1517, %v1539
        %v1563 = vmul.f32 %v1518, %v1543
        %v1564 = vmul.f32 %v1519, %v1539
        %v1565 = vmul.f32 %v1520, %v1543
        %v1566 = vmul.f32 %v1521, %v1539
        %v1567 = vmul.f32 %v1522, %v1543
        %v1568 = vmul.f32 %v1523, %v1539
        %v1569 = vmul.f32 %v1524, %v1543
        %v1570 = vmul.f32 %v1525, %v1539
        %v1571 = vmul.f32 %v1526, %v1543
        %v1572 = vmul.f32 %v1527, %v1539
        %v1573 = vmul.f32 %v1528, %v1543
        %v1574 = vmul.f32 %v1529, %v1539
        %v1575 = vmul.f32 %v1530, %v1543
        %v1576 = vmul.f32 %v1531, %v1539
        %v1577 = vmul.f32 %v1532, %v1543
        %v1578 = vadd.f32 %v1308, %v1546
        %v1579 = vadd.f32 %v1309, %v1547
        %v1580 = vadd.f32 %v1310, %v1548
        %v1581 = vadd.f32 %v1311, %v1549
        %v1582 = vadd.f32 %v1312, %v1550
        %v1583 = vadd.f32 %v1313, %v1551
        %v1584 = vadd.f32 %v1314, %v1552
        %v1585 = vadd.f32 %v1315, %v1553
        %v1586 = vadd.f32 %v1316, %v1554
        %v1587 = vadd.f32 %v1317, %v1555
        %v1588 = vadd.f32 %v1318, %v1556
        %v1589 = vadd.f32 %v1319, %v1557
        %v1590 = vadd.f32 %v1320, %v1558
        %v1591 = vadd.f32 %v1321, %v1559
        %v1592 = vadd.f32 %v1322, %v1560
        %v1593 = vadd.f32 %v1323, %v1561
        %v1594 = vadd.f32 %v1324, %v1562
        %v1595 = vadd.f32 %v1325, %v1563
        %v1596 = vadd.f32 %v1326, %v1564
        %v1597 = vadd.f32 %v1327, %v1565
        %v1598 = vadd.f32 %v1328, %v1566
        %v1599 = vadd.f32 %v1329, %v1567
        %v1600 = vadd.f32 %v1330, %v1568
        %v1601 = vadd.f32 %v1331, %v1569
        %v1602 = vadd.f32 %v1332, %v1570
        %v1603 = vadd.f32 %v1333, %v1571
        %v1604 = vadd.f32 %v1334, %v1572
        %v1605 = vadd.f32 %v1335, %v1573
        %v1606 = vadd.f32 %v1336, %v1574
        %v1607 = vadd.f32 %v1337, %v1575
        %v1608 = vadd.f32 %v1338, %v1576
        %v1609 = vadd.f32 %v1339, %v1577
        %1610 = vrot.lane.b32.xlu0 %v639, 1
        %v1611 = vpop.permute.xlu0 %1610
        %1612 = vrot.lane.b32.xlu0 %v641, 1
        %v1613 = vpop.permute.xlu0 %1612
        %1614 = vrot.lane.b32.xlu0 %v643, 1
        %v1615 = vpop.permute.xlu0 %1614
        %1616 = vrot.lane.b32.xlu0 %v645, 1
        %v1617 = vpop.permute.xlu0 %1616
        %1618 = vrot.lane.b32.xlu0 %v647, 1
        %v1619 = vpop.permute.xlu0 %1618
        %1620 = vrot.lane.b32.xlu0 %v649, 1
        %v1621 = vpop.permute.xlu0 %1620
        %1622 = vrot.lane.b32.xlu0 %v651, 1
        %v1623 = vpop.permute.xlu0 %1622
        %1624 = vrot.lane.b32.xlu0 %v653, 1
        %v1625 = vpop.permute.xlu0 %1624
        %1626 = vrot.lane.b32.xlu0 %v655, 1
        %v1627 = vpop.permute.xlu0 %1626
        %1628 = vrot.lane.b32.xlu0 %v657, 1
        %v1629 = vpop.permute.xlu0 %1628
        %1630 = vrot.lane.b32.xlu0 %v659, 1
        %v1631 = vpop.permute.xlu0 %1630
        %1632 = vrot.lane.b32.xlu0 %v661, 1
        %v1633 = vpop.permute.xlu0 %1632
        %1634 = vrot.lane.b32.xlu0 %v663, 1
        %v1635 = vpop.permute.xlu0 %1634
        %1636 = vrot.lane.b32.xlu0 %v665, 1
        %v1637 = vpop.permute.xlu0 %1636
        %1638 = vrot.lane.b32.xlu0 %v667, 1
        %v1639 = vpop.permute.xlu0 %1638
        %1640 = vrot.lane.b32.xlu0 %v669, 1
        %v1641 = vpop.permute.xlu0 %1640
        %1642 = vrot.lane.b32.xlu0 %v640, 1
        %v1643 = vpop.permute.xlu0 %1642
        %1644 = vrot.lane.b32.xlu0 %v642, 1
        %v1645 = vpop.permute.xlu0 %1644
        %1646 = vrot.lane.b32.xlu0 %v644, 1
        %v1647 = vpop.permute.xlu0 %1646
        %1648 = vrot.lane.b32.xlu0 %v646, 1
        %v1649 = vpop.permute.xlu0 %1648
        %1650 = vrot.lane.b32.xlu0 %v648, 1
        %v1651 = vpop.permute.xlu0 %1650
        %1652 = vrot.lane.b32.xlu0 %v650, 1
        %v1653 = vpop.permute.xlu0 %1652
        %1654 = vrot.lane.b32.xlu0 %v652, 1
        %v1655 = vpop.permute.xlu0 %1654
        %1656 = vrot.lane.b32.xlu0 %v654, 1
        %v1657 = vpop.permute.xlu0 %1656
        %1658 = vrot.lane.b32.xlu0 %v656, 1
        %v1659 = vpop.permute.xlu0 %1658
        %1660 = vrot.lane.b32.xlu0 %v658, 1
        %v1661 = vpop.permute.xlu0 %1660
        %1662 = vrot.lane.b32.xlu0 %v660, 1
        %v1663 = vpop.permute.xlu0 %1662
        %1664 = vrot.lane.b32.xlu0 %v662, 1
        %v1665 = vpop.permute.xlu0 %1664
        %1666 = vrot.lane.b32.xlu0 %v664, 1
        %v1667 = vpop.permute.xlu0 %1666
        %1668 = vrot.lane.b32.xlu0 %v666, 1
        %v1669 = vpop.permute.xlu0 %1668
        %1670 = vrot.lane.b32.xlu0 %v668, 1
        %v1671 = vpop.permute.xlu0 %1670
        %1672 = vrot.lane.b32.xlu0 %v670, 1
        %v1673 = vpop.permute.xlu0 %1672
        %vm1674 = vcmp.lt.s32.totalorder %v864, 1
        %v1675 = vsel %vm1674, %v1611, %v1643
        %v1676 = vsel %vm1674, %v1613, %v1645
        %v1677 = vsel %vm1674, %v1615, %v1647
        %v1678 = vsel %vm1674, %v1617, %v1649
        %v1679 = vsel %vm1674, %v1619, %v1651
        %v1680 = vsel %vm1674, %v1621, %v1653
        %v1681 = vsel %vm1674, %v1623, %v1655
        %v1682 = vsel %vm1674, %v1625, %v1657
        %v1683 = vsel %vm1674, %v1627, %v1659
        %v1684 = vsel %vm1674, %v1629, %v1661
        %v1685 = vsel %vm1674, %v1631, %v1663
        %v1686 = vsel %vm1674, %v1633, %v1665
        %v1687 = vsel %vm1674, %v1635, %v1667
        %v1688 = vsel %vm1674, %v1637, %v1669
        %v1689 = vsel %vm1674, %v1639, %v1671
        %v1690 = vsel %vm1674, %v1641, %v1673
        %v1691 = vsel %vm1674, %v1643, %v1611
        %v1692 = vsel %vm1674, %v1645, %v1613
        %v1693 = vsel %vm1674, %v1647, %v1615
        %v1694 = vsel %vm1674, %v1649, %v1617
        %v1695 = vsel %vm1674, %v1651, %v1619
        %v1696 = vsel %vm1674, %v1653, %v1621
        %v1697 = vsel %vm1674, %v1655, %v1623
        %v1698 = vsel %vm1674, %v1657, %v1625
        %v1699 = vsel %vm1674, %v1659, %v1627
        %v1700 = vsel %vm1674, %v1661, %v1629
        %v1701 = vsel %vm1674, %v1663, %v1631
        %v1702 = vsel %vm1674, %v1665, %v1633
        %v1703 = vsel %vm1674, %v1667, %v1635
        %v1704 = vsel %vm1674, %v1669, %v1637
        %v1705 = vsel %vm1674, %v1671, %v1639
        %v1706 = vsel %vm1674, %v1673, %v1641
        %1707 = vset.pattern.permute.xlu0 3
        %1708 = vperm.xlu0 %1707, %v671
        %v1709 = vpop.permute.xlu0 %1708
        %1711 = vset.pattern.permute.xlu0 3
        %1712 = vperm.xlu0 %1711, %v672
        %v1713 = vpop.permute.xlu0 %1712
        %1715 = vset.pattern.permute.xlu0 3
        %1716 = vperm.xlu0 %1715, %v673
        %v1717 = vpop.permute.xlu0 %1716
        %1719 = vset.pattern.permute.xlu0 3
        %1720 = vperm.xlu0 %1719, %v674
        %v1721 = vpop.permute.xlu0 %1720
        %1723 = vset.pattern.permute.xlu0 3
        %1724 = vperm.xlu0 %1723, %v675
        %v1725 = vpop.permute.xlu0 %1724
        %1727 = vset.pattern.permute.xlu0 3
        %1728 = vperm.xlu0 %1727, %v676
        %v1729 = vpop.permute.xlu0 %1728
        %1731 = vset.pattern.permute.xlu0 3
        %1732 = vperm.xlu0 %1731, %v677
        %v1733 = vpop.permute.xlu0 %1732
        %1735 = vset.pattern.permute.xlu0 3
        %1736 = vperm.xlu0 %1735, %v678
        %v1737 = vpop.permute.xlu0 %1736
        %1739 = vset.pattern.permute.xlu0 3
        %1740 = vperm.xlu0 %1739, %v679
        %v1741 = vpop.permute.xlu0 %1740
        %1743 = vset.pattern.permute.xlu0 3
        %1744 = vperm.xlu0 %1743, %v680
        %v1745 = vpop.permute.xlu0 %1744
        %1747 = vset.pattern.permute.xlu0 3
        %1748 = vperm.xlu0 %1747, %v681
        %v1749 = vpop.permute.xlu0 %1748
        %1751 = vset.pattern.permute.xlu0 3
        %1752 = vperm.xlu0 %1751, %v682
        %v1753 = vpop.permute.xlu0 %1752
        %1755 = vset.pattern.permute.xlu0 3
        %1756 = vperm.xlu0 %1755, %v683
        %v1757 = vpop.permute.xlu0 %1756
        %1759 = vset.pattern.permute.xlu0 3
        %1760 = vperm.xlu0 %1759, %v684
        %v1761 = vpop.permute.xlu0 %1760
        %1763 = vset.pattern.permute.xlu0 3
        %1764 = vperm.xlu0 %1763, %v685
        %v1765 = vpop.permute.xlu0 %1764
        %1767 = vset.pattern.permute.xlu0 3
        %1768 = vperm.xlu0 %1767, %v686
        %v1769 = vpop.permute.xlu0 %1768
        %v1771 = vmul.f32 %v1691, %v1709
        %v1772 = vmul.f32 %v1675, %v1709
        %v1773 = vmul.f32 %v1692, %v1713
        %v1774 = vmul.f32 %v1676, %v1713
        %v1775 = vmul.f32 %v1693, %v1717
        %v1776 = vmul.f32 %v1677, %v1717
        %v1777 = vmul.f32 %v1694, %v1721
        %v1778 = vmul.f32 %v1678, %v1721
        %v1779 = vmul.f32 %v1695, %v1725
        %v1780 = vmul.f32 %v1679, %v1725
        %v1781 = vmul.f32 %v1696, %v1729
        %v1782 = vmul.f32 %v1680, %v1729
        %v1783 = vmul.f32 %v1697, %v1733
        %v1784 = vmul.f32 %v1681, %v1733
        %v1785 = vmul.f32 %v1698, %v1737
        %v1786 = vmul.f32 %v1682, %v1737
        %v1787 = vmul.f32 %v1699, %v1741
        %v1788 = vmul.f32 %v1683, %v1741
        %v1789 = vmul.f32 %v1700, %v1745
        %v1790 = vmul.f32 %v1684, %v1745
        %v1791 = vmul.f32 %v1701, %v1749
        %v1792 = vmul.f32 %v1685, %v1749
        %v1793 = vmul.f32 %v1702, %v1753
        %v1794 = vmul.f32 %v1686, %v1753
        %v1795 = vmul.f32 %v1703, %v1757
        %v1796 = vmul.f32 %v1687, %v1757
        %v1797 = vmul.f32 %v1704, %v1761
        %v1798 = vmul.f32 %v1688, %v1761
        %v1799 = vmul.f32 %v1705, %v1765
        %v1800 = vmul.f32 %v1689, %v1765
        %v1801 = vmul.f32 %v1706, %v1769
        %v1802 = vmul.f32 %v1690, %v1769
        %s1803 = scalar_lea.vmem %s5, 3
        %v1804 = vld [vmem:[%s1803] ss:$8 sm:$0x3]
        %v1806 = vlaneseq
        %v1807 = vshrl.u32 %v1806, 7
        %v1808 = vsub.s32 0, %v1807
        %v1809 = vrot.slane %v1804, %v1808
        %v1810 = vlaneseq
        %v1811 = vshrl.u32 %v1810, 7
        %v1812 = vsub.s32 1, %v1811
        %v1813 = vrot.slane %v1804, %v1812
        %v1816 = vmul.f32 %v1771, %v1809
        %v1817 = vmul.f32 %v1772, %v1813
        %v1818 = vmul.f32 %v1773, %v1809
        %v1819 = vmul.f32 %v1774, %v1813
        %v1820 = vmul.f32 %v1775, %v1809
        %v1821 = vmul.f32 %v1776, %v1813
        %v1822 = vmul.f32 %v1777, %v1809
        %v1823 = vmul.f32 %v1778, %v1813
        %v1824 = vmul.f32 %v1779, %v1809
        %v1825 = vmul.f32 %v1780, %v1813
        %v1826 = vmul.f32 %v1781, %v1809
        %v1827 = vmul.f32 %v1782, %v1813
        %v1828 = vmul.f32 %v1783, %v1809
        %v1829 = vmul.f32 %v1784, %v1813
        %v1830 = vmul.f32 %v1785, %v1809
        %v1831 = vmul.f32 %v1786, %v1813
        %v1832 = vmul.f32 %v1787, %v1809
        %v1833 = vmul.f32 %v1788, %v1813
        %v1834 = vmul.f32 %v1789, %v1809
        %v1835 = vmul.f32 %v1790, %v1813
        %v1836 = vmul.f32 %v1791, %v1809
        %v1837 = vmul.f32 %v1792, %v1813
        %v1838 = vmul.f32 %v1793, %v1809
        %v1839 = vmul.f32 %v1794, %v1813
        %v1840 = vmul.f32 %v1795, %v1809
        %v1841 = vmul.f32 %v1796, %v1813
        %v1842 = vmul.f32 %v1797, %v1809
        %v1843 = vmul.f32 %v1798, %v1813
        %v1844 = vmul.f32 %v1799, %v1809
        %v1845 = vmul.f32 %v1800, %v1813
        %v1846 = vmul.f32 %v1801, %v1809
        %v1847 = vmul.f32 %v1802, %v1813
        %v1848 = vadd.f32 %v1578, %v1816
        %v1849 = vadd.f32 %v1579, %v1817
        %v1850 = vadd.f32 %v1580, %v1818
        %v1851 = vadd.f32 %v1581, %v1819
        %v1852 = vadd.f32 %v1582, %v1820
        %v1853 = vadd.f32 %v1583, %v1821
        %v1854 = vadd.f32 %v1584, %v1822
        %v1855 = vadd.f32 %v1585, %v1823
        %v1856 = vadd.f32 %v1586, %v1824
        %v1857 = vadd.f32 %v1587, %v1825
        %v1858 = vadd.f32 %v1588, %v1826
        %v1859 = vadd.f32 %v1589, %v1827
        %v1860 = vadd.f32 %v1590, %v1828
        %v1861 = vadd.f32 %v1591, %v1829
        %v1862 = vadd.f32 %v1592, %v1830
        %v1863 = vadd.f32 %v1593, %v1831
        %v1864 = vadd.f32 %v1594, %v1832
        %v1865 = vadd.f32 %v1595, %v1833
        %v1866 = vadd.f32 %v1596, %v1834
        %v1867 = vadd.f32 %v1597, %v1835
        %v1868 = vadd.f32 %v1598, %v1836
        %v1869 = vadd.f32 %v1599, %v1837
        %v1870 = vadd.f32 %v1600, %v1838
        %v1871 = vadd.f32 %v1601, %v1839
        %v1872 = vadd.f32 %v1602, %v1840
        %v1873 = vadd.f32 %v1603, %v1841
        %v1874 = vadd.f32 %v1604, %v1842
        %v1875 = vadd.f32 %v1605, %v1843
        %v1876 = vadd.f32 %v1606, %v1844
        %v1877 = vadd.f32 %v1607, %v1845
        %v1878 = vadd.f32 %v1608, %v1846
        %v1879 = vadd.f32 %v1609, %v1847
        %1880 = vrot.lane.b32.xlu0 %v639, 127
        %v1881 = vpop.permute.xlu0 %1880
        %1882 = vrot.lane.b32.xlu0 %v641, 127
        %v1883 = vpop.permute.xlu0 %1882
        %1884 = vrot.lane.b32.xlu0 %v643, 127
        %v1885 = vpop.permute.xlu0 %1884
        %1886 = vrot.lane.b32.xlu0 %v645, 127
        %v1887 = vpop.permute.xlu0 %1886
        %1888 = vrot.lane.b32.xlu0 %v647, 127
        %v1889 = vpop.permute.xlu0 %1888
        %1890 = vrot.lane.b32.xlu0 %v649, 127
        %v1891 = vpop.permute.xlu0 %1890
        %1892 = vrot.lane.b32.xlu0 %v651, 127
        %v1893 = vpop.permute.xlu0 %1892
        %1894 = vrot.lane.b32.xlu0 %v653, 127
        %v1895 = vpop.permute.xlu0 %1894
        %1896 = vrot.lane.b32.xlu0 %v655, 127
        %v1897 = vpop.permute.xlu0 %1896
        %1898 = vrot.lane.b32.xlu0 %v657, 127
        %v1899 = vpop.permute.xlu0 %1898
        %1900 = vrot.lane.b32.xlu0 %v659, 127
        %v1901 = vpop.permute.xlu0 %1900
        %1902 = vrot.lane.b32.xlu0 %v661, 127
        %v1903 = vpop.permute.xlu0 %1902
        %1904 = vrot.lane.b32.xlu0 %v663, 127
        %v1905 = vpop.permute.xlu0 %1904
        %1906 = vrot.lane.b32.xlu0 %v665, 127
        %v1907 = vpop.permute.xlu0 %1906
        %1908 = vrot.lane.b32.xlu0 %v667, 127
        %v1909 = vpop.permute.xlu0 %1908
        %1910 = vrot.lane.b32.xlu0 %v669, 127
        %v1911 = vpop.permute.xlu0 %1910
        %1912 = vrot.lane.b32.xlu0 %v640, 127
        %v1913 = vpop.permute.xlu0 %1912
        %1914 = vrot.lane.b32.xlu0 %v642, 127
        %v1915 = vpop.permute.xlu0 %1914
        %1916 = vrot.lane.b32.xlu0 %v644, 127
        %v1917 = vpop.permute.xlu0 %1916
        %1918 = vrot.lane.b32.xlu0 %v646, 127
        %v1919 = vpop.permute.xlu0 %1918
        %1920 = vrot.lane.b32.xlu0 %v648, 127
        %v1921 = vpop.permute.xlu0 %1920
        %1922 = vrot.lane.b32.xlu0 %v650, 127
        %v1923 = vpop.permute.xlu0 %1922
        %1924 = vrot.lane.b32.xlu0 %v652, 127
        %v1925 = vpop.permute.xlu0 %1924
        %1926 = vrot.lane.b32.xlu0 %v654, 127
        %v1927 = vpop.permute.xlu0 %1926
        %1928 = vrot.lane.b32.xlu0 %v656, 127
        %v1929 = vpop.permute.xlu0 %1928
        %1930 = vrot.lane.b32.xlu0 %v658, 127
        %v1931 = vpop.permute.xlu0 %1930
        %1932 = vrot.lane.b32.xlu0 %v660, 127
        %v1933 = vpop.permute.xlu0 %1932
        %1934 = vrot.lane.b32.xlu0 %v662, 127
        %v1935 = vpop.permute.xlu0 %1934
        %1936 = vrot.lane.b32.xlu0 %v664, 127
        %v1937 = vpop.permute.xlu0 %1936
        %1938 = vrot.lane.b32.xlu0 %v666, 127
        %v1939 = vpop.permute.xlu0 %1938
        %1940 = vrot.lane.b32.xlu0 %v668, 127
        %v1941 = vpop.permute.xlu0 %1940
        %1942 = vrot.lane.b32.xlu0 %v670, 127
        %v1943 = vpop.permute.xlu0 %1942
        %vm1944 = vcmp.lt.s32.totalorder %v864, 127
        %v1945 = vsel %vm1944, %v1881, %v1913
        %v1946 = vsel %vm1944, %v1883, %v1915
        %v1947 = vsel %vm1944, %v1885, %v1917
        %v1948 = vsel %vm1944, %v1887, %v1919
        %v1949 = vsel %vm1944, %v1889, %v1921
        %v1950 = vsel %vm1944, %v1891, %v1923
        %v1951 = vsel %vm1944, %v1893, %v1925
        %v1952 = vsel %vm1944, %v1895, %v1927
        %v1953 = vsel %vm1944, %v1897, %v1929
        %v1954 = vsel %vm1944, %v1899, %v1931
        %v1955 = vsel %vm1944, %v1901, %v1933
        %v1956 = vsel %vm1944, %v1903, %v1935
        %v1957 = vsel %vm1944, %v1905, %v1937
        %v1958 = vsel %vm1944, %v1907, %v1939
        %v1959 = vsel %vm1944, %v1909, %v1941
        %v1960 = vsel %vm1944, %v1911, %v1943
        %v1961 = vsel %vm1944, %v1913, %v1881
        %v1962 = vsel %vm1944, %v1915, %v1883
        %v1963 = vsel %vm1944, %v1917, %v1885
        %v1964 = vsel %vm1944, %v1919, %v1887
        %v1965 = vsel %vm1944, %v1921, %v1889
        %v1966 = vsel %vm1944, %v1923, %v1891
        %v1967 = vsel %vm1944, %v1925, %v1893
        %v1968 = vsel %vm1944, %v1927, %v1895
        %v1969 = vsel %vm1944, %v1929, %v1897
        %v1970 = vsel %vm1944, %v1931, %v1899
        %v1971 = vsel %vm1944, %v1933, %v1901
        %v1972 = vsel %vm1944, %v1935, %v1903
        %v1973 = vsel %vm1944, %v1937, %v1905
        %v1974 = vsel %vm1944, %v1939, %v1907
        %v1975 = vsel %vm1944, %v1941, %v1909
        %v1976 = vsel %vm1944, %v1943, %v1911
        %1977 = vset.pattern.permute.xlu0 5
        %1978 = vperm.xlu0 %1977, %v671
        %v1979 = vpop.permute.xlu0 %1978
        %1981 = vset.pattern.permute.xlu0 5
        %1982 = vperm.xlu0 %1981, %v672
        %v1983 = vpop.permute.xlu0 %1982
        %1985 = vset.pattern.permute.xlu0 5
        %1986 = vperm.xlu0 %1985, %v673
        %v1987 = vpop.permute.xlu0 %1986
        %1989 = vset.pattern.permute.xlu0 5
        %1990 = vperm.xlu0 %1989, %v674
        %v1991 = vpop.permute.xlu0 %1990
        %1993 = vset.pattern.permute.xlu0 5
        %1994 = vperm.xlu0 %1993, %v675
        %v1995 = vpop.permute.xlu0 %1994
        %1997 = vset.pattern.permute.xlu0 5
        %1998 = vperm.xlu0 %1997, %v676
        %v1999 = vpop.permute.xlu0 %1998
        %2001 = vset.pattern.permute.xlu0 5
        %2002 = vperm.xlu0 %2001, %v677
        %v2003 = vpop.permute.xlu0 %2002
        %2005 = vset.pattern.permute.xlu0 5
        %2006 = vperm.xlu0 %2005, %v678
        %v2007 = vpop.permute.xlu0 %2006
        %2009 = vset.pattern.permute.xlu0 5
        %2010 = vperm.xlu0 %2009, %v679
        %v2011 = vpop.permute.xlu0 %2010
        %2013 = vset.pattern.permute.xlu0 5
        %2014 = vperm.xlu0 %2013, %v680
        %v2015 = vpop.permute.xlu0 %2014
        %2017 = vset.pattern.permute.xlu0 5
        %2018 = vperm.xlu0 %2017, %v681
        %v2019 = vpop.permute.xlu0 %2018
        %2021 = vset.pattern.permute.xlu0 5
        %2022 = vperm.xlu0 %2021, %v682
        %v2023 = vpop.permute.xlu0 %2022
        %2025 = vset.pattern.permute.xlu0 5
        %2026 = vperm.xlu0 %2025, %v683
        %v2027 = vpop.permute.xlu0 %2026
        %2029 = vset.pattern.permute.xlu0 5
        %2030 = vperm.xlu0 %2029, %v684
        %v2031 = vpop.permute.xlu0 %2030
        %2033 = vset.pattern.permute.xlu0 5
        %2034 = vperm.xlu0 %2033, %v685
        %v2035 = vpop.permute.xlu0 %2034
        %2037 = vset.pattern.permute.xlu0 5
        %2038 = vperm.xlu0 %2037, %v686
        %v2039 = vpop.permute.xlu0 %2038
        %v2041 = vmul.f32 %v1945, %v1979
        %v2042 = vmul.f32 %v1961, %v1979
        %v2043 = vmul.f32 %v1946, %v1983
        %v2044 = vmul.f32 %v1962, %v1983
        %v2045 = vmul.f32 %v1947, %v1987
        %v2046 = vmul.f32 %v1963, %v1987
        %v2047 = vmul.f32 %v1948, %v1991
        %v2048 = vmul.f32 %v1964, %v1991
        %v2049 = vmul.f32 %v1949, %v1995
        %v2050 = vmul.f32 %v1965, %v1995
        %v2051 = vmul.f32 %v1950, %v1999
        %v2052 = vmul.f32 %v1966, %v1999
        %v2053 = vmul.f32 %v1951, %v2003
        %v2054 = vmul.f32 %v1967, %v2003
        %v2055 = vmul.f32 %v1952, %v2007
        %v2056 = vmul.f32 %v1968, %v2007
        %v2057 = vmul.f32 %v1953, %v2011
        %v2058 = vmul.f32 %v1969, %v2011
        %v2059 = vmul.f32 %v1954, %v2015
        %v2060 = vmul.f32 %v1970, %v2015
        %v2061 = vmul.f32 %v1955, %v2019
        %v2062 = vmul.f32 %v1971, %v2019
        %v2063 = vmul.f32 %v1956, %v2023
        %v2064 = vmul.f32 %v1972, %v2023
        %v2065 = vmul.f32 %v1957, %v2027
        %v2066 = vmul.f32 %v1973, %v2027
        %v2067 = vmul.f32 %v1958, %v2031
        %v2068 = vmul.f32 %v1974, %v2031
        %v2069 = vmul.f32 %v1959, %v2035
        %v2070 = vmul.f32 %v1975, %v2035
        %v2071 = vmul.f32 %v1960, %v2039
        %v2072 = vmul.f32 %v1976, %v2039
        %s2073 = scalar_lea.vmem %s5, 5
        %v2074 = vld [vmem:[%s2073] ss:$8 sm:$0x3]
        %v2076 = vlaneseq
        %v2077 = vshrl.u32 %v2076, 7
        %v2078 = vsub.s32 0, %v2077
        %v2079 = vrot.slane %v2074, %v2078
        %v2080 = vlaneseq
        %v2081 = vshrl.u32 %v2080, 7
        %v2082 = vsub.s32 1, %v2081
        %v2083 = vrot.slane %v2074, %v2082
        %v2086 = vmul.f32 %v2041, %v2079
        %v2087 = vmul.f32 %v2042, %v2083
        %v2088 = vmul.f32 %v2043, %v2079
        %v2089 = vmul.f32 %v2044, %v2083
        %v2090 = vmul.f32 %v2045, %v2079
        %v2091 = vmul.f32 %v2046, %v2083
        %v2092 = vmul.f32 %v2047, %v2079
        %v2093 = vmul.f32 %v2048, %v2083
        %v2094 = vmul.f32 %v2049, %v2079
        %v2095 = vmul.f32 %v2050, %v2083
        %v2096 = vmul.f32 %v2051, %v2079
        %v2097 = vmul.f32 %v2052, %v2083
        %v2098 = vmul.f32 %v2053, %v2079
        %v2099 = vmul.f32 %v2054, %v2083
        %v2100 = vmul.f32 %v2055, %v2079
        %v2101 = vmul.f32 %v2056, %v2083
        %v2102 = vmul.f32 %v2057, %v2079
        %v2103 = vmul.f32 %v2058, %v2083
        %v2104 = vmul.f32 %v2059, %v2079
        %v2105 = vmul.f32 %v2060, %v2083
        %v2106 = vmul.f32 %v2061, %v2079
        %v2107 = vmul.f32 %v2062, %v2083
        %v2108 = vmul.f32 %v2063, %v2079
        %v2109 = vmul.f32 %v2064, %v2083
        %v2110 = vmul.f32 %v2065, %v2079
        %v2111 = vmul.f32 %v2066, %v2083
        %v2112 = vmul.f32 %v2067, %v2079
        %v2113 = vmul.f32 %v2068, %v2083
        %v2114 = vmul.f32 %v2069, %v2079
        %v2115 = vmul.f32 %v2070, %v2083
        %v2116 = vmul.f32 %v2071, %v2079
        %v2117 = vmul.f32 %v2072, %v2083
        %v2118 = vadd.f32 %v1848, %v2086
        %v2119 = vadd.f32 %v1849, %v2087
        %v2120 = vadd.f32 %v1850, %v2088
        %v2121 = vadd.f32 %v1851, %v2089
        %v2122 = vadd.f32 %v1852, %v2090
        %v2123 = vadd.f32 %v1853, %v2091
        %v2124 = vadd.f32 %v1854, %v2092
        %v2125 = vadd.f32 %v1855, %v2093
        %v2126 = vadd.f32 %v1856, %v2094
        %v2127 = vadd.f32 %v1857, %v2095
        %v2128 = vadd.f32 %v1858, %v2096
        %v2129 = vadd.f32 %v1859, %v2097
        %v2130 = vadd.f32 %v1860, %v2098
        %v2131 = vadd.f32 %v1861, %v2099
        %v2132 = vadd.f32 %v1862, %v2100
        %v2133 = vadd.f32 %v1863, %v2101
        %v2134 = vadd.f32 %v1864, %v2102
        %v2135 = vadd.f32 %v1865, %v2103
        %v2136 = vadd.f32 %v1866, %v2104
        %v2137 = vadd.f32 %v1867, %v2105
        %v2138 = vadd.f32 %v1868, %v2106
        %v2139 = vadd.f32 %v1869, %v2107
        %v2140 = vadd.f32 %v1870, %v2108
        %v2141 = vadd.f32 %v1871, %v2109
        %v2142 = vadd.f32 %v1872, %v2110
        %v2143 = vadd.f32 %v1873, %v2111
        %v2144 = vadd.f32 %v1874, %v2112
        %v2145 = vadd.f32 %v1875, %v2113
        %v2146 = vadd.f32 %v1876, %v2114
        %v2147 = vadd.f32 %v1877, %v2115
        %v2148 = vadd.f32 %v1878, %v2116
        %v2149 = vadd.f32 %v1879, %v2117
        %2150 = vrot.lane.b32.xlu0 %v639, 113
        %v2151 = vpop.permute.xlu0 %2150
        %2152 = vrot.lane.b32.xlu0 %v641, 113
        %v2153 = vpop.permute.xlu0 %2152
        %2154 = vrot.lane.b32.xlu0 %v643, 113
        %v2155 = vpop.permute.xlu0 %2154
        %2156 = vrot.lane.b32.xlu0 %v645, 113
        %v2157 = vpop.permute.xlu0 %2156
        %2158 = vrot.lane.b32.xlu0 %v647, 113
        %v2159 = vpop.permute.xlu0 %2158
        %2160 = vrot.lane.b32.xlu0 %v649, 113
        %v2161 = vpop.permute.xlu0 %2160
        %2162 = vrot.lane.b32.xlu0 %v651, 113
        %v2163 = vpop.permute.xlu0 %2162
        %2164 = vrot.lane.b32.xlu0 %v653, 113
        %v2165 = vpop.permute.xlu0 %2164
        %2166 = vrot.lane.b32.xlu0 %v655, 113
        %v2167 = vpop.permute.xlu0 %2166
        %2168 = vrot.lane.b32.xlu0 %v657, 113
        %v2169 = vpop.permute.xlu0 %2168
        %2170 = vrot.lane.b32.xlu0 %v659, 113
        %v2171 = vpop.permute.xlu0 %2170
        %2172 = vrot.lane.b32.xlu0 %v661, 113
        %v2173 = vpop.permute.xlu0 %2172
        %2174 = vrot.lane.b32.xlu0 %v663, 113
        %v2175 = vpop.permute.xlu0 %2174
        %2176 = vrot.lane.b32.xlu0 %v665, 113
        %v2177 = vpop.permute.xlu0 %2176
        %2178 = vrot.lane.b32.xlu0 %v667, 113
        %v2179 = vpop.permute.xlu0 %2178
        %2180 = vrot.lane.b32.xlu0 %v669, 113
        %v2181 = vpop.permute.xlu0 %2180
        %2182 = vrot.lane.b32.xlu0 %v640, 113
        %v2183 = vpop.permute.xlu0 %2182
        %2184 = vrot.lane.b32.xlu0 %v642, 113
        %v2185 = vpop.permute.xlu0 %2184
        %2186 = vrot.lane.b32.xlu0 %v644, 113
        %v2187 = vpop.permute.xlu0 %2186
        %2188 = vrot.lane.b32.xlu0 %v646, 113
        %v2189 = vpop.permute.xlu0 %2188
        %2190 = vrot.lane.b32.xlu0 %v648, 113
        %v2191 = vpop.permute.xlu0 %2190
        %2192 = vrot.lane.b32.xlu0 %v650, 113
        %v2193 = vpop.permute.xlu0 %2192
        %2194 = vrot.lane.b32.xlu0 %v652, 113
        %v2195 = vpop.permute.xlu0 %2194
        %2196 = vrot.lane.b32.xlu0 %v654, 113
        %v2197 = vpop.permute.xlu0 %2196
        %2198 = vrot.lane.b32.xlu0 %v656, 113
        %v2199 = vpop.permute.xlu0 %2198
        %2200 = vrot.lane.b32.xlu0 %v658, 113
        %v2201 = vpop.permute.xlu0 %2200
        %2202 = vrot.lane.b32.xlu0 %v660, 113
        %v2203 = vpop.permute.xlu0 %2202
        %2204 = vrot.lane.b32.xlu0 %v662, 113
        %v2205 = vpop.permute.xlu0 %2204
        %2206 = vrot.lane.b32.xlu0 %v664, 113
        %v2207 = vpop.permute.xlu0 %2206
        %2208 = vrot.lane.b32.xlu0 %v666, 113
        %v2209 = vpop.permute.xlu0 %2208
        %2210 = vrot.lane.b32.xlu0 %v668, 113
        %v2211 = vpop.permute.xlu0 %2210
        %2212 = vrot.lane.b32.xlu0 %v670, 113
        %v2213 = vpop.permute.xlu0 %2212
        %vm2214 = vcmp.lt.s32.totalorder %v864, 113
        %v2215 = vsel %vm2214, %v2151, %v2183
        %v2216 = vsel %vm2214, %v2153, %v2185
        %v2217 = vsel %vm2214, %v2155, %v2187
        %v2218 = vsel %vm2214, %v2157, %v2189
        %v2219 = vsel %vm2214, %v2159, %v2191
        %v2220 = vsel %vm2214, %v2161, %v2193
        %v2221 = vsel %vm2214, %v2163, %v2195
        %v2222 = vsel %vm2214, %v2165, %v2197
        %v2223 = vsel %vm2214, %v2167, %v2199
        %v2224 = vsel %vm2214, %v2169, %v2201
        %v2225 = vsel %vm2214, %v2171, %v2203
        %v2226 = vsel %vm2214, %v2173, %v2205
        %v2227 = vsel %vm2214, %v2175, %v2207
        %v2228 = vsel %vm2214, %v2177, %v2209
        %v2229 = vsel %vm2214, %v2179, %v2211
        %v2230 = vsel %vm2214, %v2181, %v2213
        %v2231 = vsel %vm2214, %v2183, %v2151
        %v2232 = vsel %vm2214, %v2185, %v2153
        %v2233 = vsel %vm2214, %v2187, %v2155
        %v2234 = vsel %vm2214, %v2189, %v2157
        %v2235 = vsel %vm2214, %v2191, %v2159
        %v2236 = vsel %vm2214, %v2193, %v2161
        %v2237 = vsel %vm2214, %v2195, %v2163
        %v2238 = vsel %vm2214, %v2197, %v2165
        %v2239 = vsel %vm2214, %v2199, %v2167
        %v2240 = vsel %vm2214, %v2201, %v2169
        %v2241 = vsel %vm2214, %v2203, %v2171
        %v2242 = vsel %vm2214, %v2205, %v2173
        %v2243 = vsel %vm2214, %v2207, %v2175
        %v2244 = vsel %vm2214, %v2209, %v2177
        %v2245 = vsel %vm2214, %v2211, %v2179
        %v2246 = vsel %vm2214, %v2213, %v2181
        %2247 = vset.pattern.permute.xlu0 6
        %2248 = vperm.xlu0 %2247, %v671
        %v2249 = vpop.permute.xlu0 %2248
        %2251 = vset.pattern.permute.xlu0 6
        %2252 = vperm.xlu0 %2251, %v672
        %v2253 = vpop.permute.xlu0 %2252
        %2255 = vset.pattern.permute.xlu0 6
        %2256 = vperm.xlu0 %2255, %v673
        %v2257 = vpop.permute.xlu0 %2256
        %2259 = vset.pattern.permute.xlu0 6
        %2260 = vperm.xlu0 %2259, %v674
        %v2261 = vpop.permute.xlu0 %2260
        %2263 = vset.pattern.permute.xlu0 6
        %2264 = vperm.xlu0 %2263, %v675
        %v2265 = vpop.permute.xlu0 %2264
        %2267 = vset.pattern.permute.xlu0 6
        %2268 = vperm.xlu0 %2267, %v676
        %v2269 = vpop.permute.xlu0 %2268
        %2271 = vset.pattern.permute.xlu0 6
        %2272 = vperm.xlu0 %2271, %v677
        %v2273 = vpop.permute.xlu0 %2272
        %2275 = vset.pattern.permute.xlu0 6
        %2276 = vperm.xlu0 %2275, %v678
        %v2277 = vpop.permute.xlu0 %2276
        %2279 = vset.pattern.permute.xlu0 6
        %2280 = vperm.xlu0 %2279, %v679
        %v2281 = vpop.permute.xlu0 %2280
        %2283 = vset.pattern.permute.xlu0 6
        %2284 = vperm.xlu0 %2283, %v680
        %v2285 = vpop.permute.xlu0 %2284
        %2287 = vset.pattern.permute.xlu0 6
        %2288 = vperm.xlu0 %2287, %v681
        %v2289 = vpop.permute.xlu0 %2288
        %2291 = vset.pattern.permute.xlu0 6
        %2292 = vperm.xlu0 %2291, %v682
        %v2293 = vpop.permute.xlu0 %2292
        %2295 = vset.pattern.permute.xlu0 6
        %2296 = vperm.xlu0 %2295, %v683
        %v2297 = vpop.permute.xlu0 %2296
        %2299 = vset.pattern.permute.xlu0 6
        %2300 = vperm.xlu0 %2299, %v684
        %v2301 = vpop.permute.xlu0 %2300
        %2303 = vset.pattern.permute.xlu0 6
        %2304 = vperm.xlu0 %2303, %v685
        %v2305 = vpop.permute.xlu0 %2304
        %2307 = vset.pattern.permute.xlu0 6
        %2308 = vperm.xlu0 %2307, %v686
        %v2309 = vpop.permute.xlu0 %2308
        %v2311 = vmul.f32 %v2215, %v2249
        %v2312 = vmul.f32 %v2231, %v2249
        %v2313 = vmul.f32 %v2216, %v2253
        %v2314 = vmul.f32 %v2232, %v2253
        %v2315 = vmul.f32 %v2217, %v2257
        %v2316 = vmul.f32 %v2233, %v2257
        %v2317 = vmul.f32 %v2218, %v2261
        %v2318 = vmul.f32 %v2234, %v2261
        %v2319 = vmul.f32 %v2219, %v2265
        %v2320 = vmul.f32 %v2235, %v2265
        %v2321 = vmul.f32 %v2220, %v2269
        %v2322 = vmul.f32 %v2236, %v2269
        %v2323 = vmul.f32 %v2221, %v2273
        %v2324 = vmul.f32 %v2237, %v2273
        %v2325 = vmul.f32 %v2222, %v2277
        %v2326 = vmul.f32 %v2238, %v2277
        %v2327 = vmul.f32 %v2223, %v2281
        %v2328 = vmul.f32 %v2239, %v2281
        %v2329 = vmul.f32 %v2224, %v2285
        %v2330 = vmul.f32 %v2240, %v2285
        %v2331 = vmul.f32 %v2225, %v2289
        %v2332 = vmul.f32 %v2241, %v2289
        %v2333 = vmul.f32 %v2226, %v2293
        %v2334 = vmul.f32 %v2242, %v2293
        %v2335 = vmul.f32 %v2227, %v2297
        %v2336 = vmul.f32 %v2243, %v2297
        %v2337 = vmul.f32 %v2228, %v2301
        %v2338 = vmul.f32 %v2244, %v2301
        %v2339 = vmul.f32 %v2229, %v2305
        %v2340 = vmul.f32 %v2245, %v2305
        %v2341 = vmul.f32 %v2230, %v2309
        %v2342 = vmul.f32 %v2246, %v2309
        %s2343 = scalar_lea.vmem %s5, 6
        %v2344 = vld [vmem:[%s2343] ss:$8 sm:$0x3]
        %v2346 = vlaneseq
        %v2347 = vshrl.u32 %v2346, 7
        %v2348 = vsub.s32 0, %v2347
        %v2349 = vrot.slane %v2344, %v2348
        %v2350 = vlaneseq
        %v2351 = vshrl.u32 %v2350, 7
        %v2352 = vsub.s32 1, %v2351
        %v2353 = vrot.slane %v2344, %v2352
        %v2356 = vmul.f32 %v2311, %v2349
        %v2357 = vmul.f32 %v2312, %v2353
        %v2358 = vmul.f32 %v2313, %v2349
        %v2359 = vmul.f32 %v2314, %v2353
        %v2360 = vmul.f32 %v2315, %v2349
        %v2361 = vmul.f32 %v2316, %v2353
        %v2362 = vmul.f32 %v2317, %v2349
        %v2363 = vmul.f32 %v2318, %v2353
        %v2364 = vmul.f32 %v2319, %v2349
        %v2365 = vmul.f32 %v2320, %v2353
        %v2366 = vmul.f32 %v2321, %v2349
        %v2367 = vmul.f32 %v2322, %v2353
        %v2368 = vmul.f32 %v2323, %v2349
        %v2369 = vmul.f32 %v2324, %v2353
        %v2370 = vmul.f32 %v2325, %v2349
        %v2371 = vmul.f32 %v2326, %v2353
        %v2372 = vmul.f32 %v2327, %v2349
        %v2373 = vmul.f32 %v2328, %v2353
        %v2374 = vmul.f32 %v2329, %v2349
        %v2375 = vmul.f32 %v2330, %v2353
        %v2376 = vmul.f32 %v2331, %v2349
        %v2377 = vmul.f32 %v2332, %v2353
        %v2378 = vmul.f32 %v2333, %v2349
        %v2379 = vmul.f32 %v2334, %v2353
        %v2380 = vmul.f32 %v2335, %v2349
        %v2381 = vmul.f32 %v2336, %v2353
        %v2382 = vmul.f32 %v2337, %v2349
        %v2383 = vmul.f32 %v2338, %v2353
        %v2384 = vmul.f32 %v2339, %v2349
        %v2385 = vmul.f32 %v2340, %v2353
        %v2386 = vmul.f32 %v2341, %v2349
        %v2387 = vmul.f32 %v2342, %v2353
        %v2388 = vadd.f32 %v2118, %v2356
        %v2389 = vadd.f32 %v2119, %v2357
        %v2390 = vadd.f32 %v2120, %v2358
        %v2391 = vadd.f32 %v2121, %v2359
        %v2392 = vadd.f32 %v2122, %v2360
        %v2393 = vadd.f32 %v2123, %v2361
        %v2394 = vadd.f32 %v2124, %v2362
        %v2395 = vadd.f32 %v2125, %v2363
        %v2396 = vadd.f32 %v2126, %v2364
        %v2397 = vadd.f32 %v2127, %v2365
        %v2398 = vadd.f32 %v2128, %v2366
        %v2399 = vadd.f32 %v2129, %v2367
        %v2400 = vadd.f32 %v2130, %v2368
        %v2401 = vadd.f32 %v2131, %v2369
        %v2402 = vadd.f32 %v2132, %v2370
        %v2403 = vadd.f32 %v2133, %v2371
        %v2404 = vadd.f32 %v2134, %v2372
        %v2405 = vadd.f32 %v2135, %v2373
        %v2406 = vadd.f32 %v2136, %v2374
        %v2407 = vadd.f32 %v2137, %v2375
        %v2408 = vadd.f32 %v2138, %v2376
        %v2409 = vadd.f32 %v2139, %v2377
        %v2410 = vadd.f32 %v2140, %v2378
        %v2411 = vadd.f32 %v2141, %v2379
        %v2412 = vadd.f32 %v2142, %v2380
        %v2413 = vadd.f32 %v2143, %v2381
        %v2414 = vadd.f32 %v2144, %v2382
        %v2415 = vadd.f32 %v2145, %v2383
        %v2416 = vadd.f32 %v2146, %v2384
        %v2417 = vadd.f32 %v2147, %v2385
        %v2418 = vadd.f32 %v2148, %v2386
        %v2419 = vadd.f32 %v2149, %v2387
        %2420 = vrot.lane.b32.xlu0 %v639, 112
        %v2421 = vpop.permute.xlu0 %2420
        %2422 = vrot.lane.b32.xlu0 %v641, 112
        %v2423 = vpop.permute.xlu0 %2422
        %2424 = vrot.lane.b32.xlu0 %v643, 112
        %v2425 = vpop.permute.xlu0 %2424
        %2426 = vrot.lane.b32.xlu0 %v645, 112
        %v2427 = vpop.permute.xlu0 %2426
        %2428 = vrot.lane.b32.xlu0 %v647, 112
        %v2429 = vpop.permute.xlu0 %2428
        %2430 = vrot.lane.b32.xlu0 %v649, 112
        %v2431 = vpop.permute.xlu0 %2430
        %2432 = vrot.lane.b32.xlu0 %v651, 112
        %v2433 = vpop.permute.xlu0 %2432
        %2434 = vrot.lane.b32.xlu0 %v653, 112
        %v2435 = vpop.permute.xlu0 %2434
        %2436 = vrot.lane.b32.xlu0 %v655, 112
        %v2437 = vpop.permute.xlu0 %2436
        %2438 = vrot.lane.b32.xlu0 %v657, 112
        %v2439 = vpop.permute.xlu0 %2438
        %2440 = vrot.lane.b32.xlu0 %v659, 112
        %v2441 = vpop.permute.xlu0 %2440
        %2442 = vrot.lane.b32.xlu0 %v661, 112
        %v2443 = vpop.permute.xlu0 %2442
        %2444 = vrot.lane.b32.xlu0 %v663, 112
        %v2445 = vpop.permute.xlu0 %2444
        %2446 = vrot.lane.b32.xlu0 %v665, 112
        %v2447 = vpop.permute.xlu0 %2446
        %2448 = vrot.lane.b32.xlu0 %v667, 112
        %v2449 = vpop.permute.xlu0 %2448
        %2450 = vrot.lane.b32.xlu0 %v669, 112
        %v2451 = vpop.permute.xlu0 %2450
        %2452 = vrot.lane.b32.xlu0 %v640, 112
        %v2453 = vpop.permute.xlu0 %2452
        %2454 = vrot.lane.b32.xlu0 %v642, 112
        %v2455 = vpop.permute.xlu0 %2454
        %2456 = vrot.lane.b32.xlu0 %v644, 112
        %v2457 = vpop.permute.xlu0 %2456
        %2458 = vrot.lane.b32.xlu0 %v646, 112
        %v2459 = vpop.permute.xlu0 %2458
        %2460 = vrot.lane.b32.xlu0 %v648, 112
        %v2461 = vpop.permute.xlu0 %2460
        %2462 = vrot.lane.b32.xlu0 %v650, 112
        %v2463 = vpop.permute.xlu0 %2462
        %2464 = vrot.lane.b32.xlu0 %v652, 112
        %v2465 = vpop.permute.xlu0 %2464
        %2466 = vrot.lane.b32.xlu0 %v654, 112
        %v2467 = vpop.permute.xlu0 %2466
        %2468 = vrot.lane.b32.xlu0 %v656, 112
        %v2469 = vpop.permute.xlu0 %2468
        %2470 = vrot.lane.b32.xlu0 %v658, 112
        %v2471 = vpop.permute.xlu0 %2470
        %2472 = vrot.lane.b32.xlu0 %v660, 112
        %v2473 = vpop.permute.xlu0 %2472
        %2474 = vrot.lane.b32.xlu0 %v662, 112
        %v2475 = vpop.permute.xlu0 %2474
        %2476 = vrot.lane.b32.xlu0 %v664, 112
        %v2477 = vpop.permute.xlu0 %2476
        %2478 = vrot.lane.b32.xlu0 %v666, 112
        %v2479 = vpop.permute.xlu0 %2478
        %2480 = vrot.lane.b32.xlu0 %v668, 112
        %v2481 = vpop.permute.xlu0 %2480
        %2482 = vrot.lane.b32.xlu0 %v670, 112
        %v2483 = vpop.permute.xlu0 %2482
        %vm2484 = vcmp.lt.s32.totalorder %v864, 112
        %v2485 = vsel %vm2484, %v2421, %v2453
        %v2486 = vsel %vm2484, %v2423, %v2455
        %v2487 = vsel %vm2484, %v2425, %v2457
        %v2488 = vsel %vm2484, %v2427, %v2459
        %v2489 = vsel %vm2484, %v2429, %v2461
        %v2490 = vsel %vm2484, %v2431, %v2463
        %v2491 = vsel %vm2484, %v2433, %v2465
        %v2492 = vsel %vm2484, %v2435, %v2467
        %v2493 = vsel %vm2484, %v2437, %v2469
        %v2494 = vsel %vm2484, %v2439, %v2471
        %v2495 = vsel %vm2484, %v2441, %v2473
        %v2496 = vsel %vm2484, %v2443, %v2475
        %v2497 = vsel %vm2484, %v2445, %v2477
        %v2498 = vsel %vm2484, %v2447, %v2479
        %v2499 = vsel %vm2484, %v2449, %v2481
        %v2500 = vsel %vm2484, %v2451, %v2483
        %v2501 = vsel %vm2484, %v2453, %v2421
        %v2502 = vsel %vm2484, %v2455, %v2423
        %v2503 = vsel %vm2484, %v2457, %v2425
        %v2504 = vsel %vm2484, %v2459, %v2427
        %v2505 = vsel %vm2484, %v2461, %v2429
        %v2506 = vsel %vm2484, %v2463, %v2431
        %v2507 = vsel %vm2484, %v2465, %v2433
        %v2508 = vsel %vm2484, %v2467, %v2435
        %v2509 = vsel %vm2484, %v2469, %v2437
        %v2510 = vsel %vm2484, %v2471, %v2439
        %v2511 = vsel %vm2484, %v2473, %v2441
        %v2512 = vsel %vm2484, %v2475, %v2443
        %v2513 = vsel %vm2484, %v2477, %v2445
        %v2514 = vsel %vm2484, %v2479, %v2447
        %v2515 = vsel %vm2484, %v2481, %v2449
        %v2516 = vsel %vm2484, %v2483, %v2451
        %2517 = vset.pattern.permute.xlu0 7
        %2518 = vperm.xlu0 %2517, %v671
        %v2519 = vpop.permute.xlu0 %2518
        %2521 = vset.pattern.permute.xlu0 7
        %2522 = vperm.xlu0 %2521, %v672
        %v2523 = vpop.permute.xlu0 %2522
        %2525 = vset.pattern.permute.xlu0 7
        %2526 = vperm.xlu0 %2525, %v673
        %v2527 = vpop.permute.xlu0 %2526
        %2529 = vset.pattern.permute.xlu0 7
        %2530 = vperm.xlu0 %2529, %v674
        %v2531 = vpop.permute.xlu0 %2530
        %2533 = vset.pattern.permute.xlu0 7
        %2534 = vperm.xlu0 %2533, %v675
        %v2535 = vpop.permute.xlu0 %2534
        %2537 = vset.pattern.permute.xlu0 7
        %2538 = vperm.xlu0 %2537, %v676
        %v2539 = vpop.permute.xlu0 %2538
        %2541 = vset.pattern.permute.xlu0 7
        %2542 = vperm.xlu0 %2541, %v677
        %v2543 = vpop.permute.xlu0 %2542
        %2545 = vset.pattern.permute.xlu0 7
        %2546 = vperm.xlu0 %2545, %v678
        %v2547 = vpop.permute.xlu0 %2546
        %2549 = vset.pattern.permute.xlu0 7
        %2550 = vperm.xlu0 %2549, %v679
        %v2551 = vpop.permute.xlu0 %2550
        %2553 = vset.pattern.permute.xlu0 7
        %2554 = vperm.xlu0 %2553, %v680
        %v2555 = vpop.permute.xlu0 %2554
        %2557 = vset.pattern.permute.xlu0 7
        %2558 = vperm.xlu0 %2557, %v681
        %v2559 = vpop.permute.xlu0 %2558
        %2561 = vset.pattern.permute.xlu0 7
        %2562 = vperm.xlu0 %2561, %v682
        %v2563 = vpop.permute.xlu0 %2562
        %2565 = vset.pattern.permute.xlu0 7
        %2566 = vperm.xlu0 %2565, %v683
        %v2567 = vpop.permute.xlu0 %2566
        %2569 = vset.pattern.permute.xlu0 7
        %2570 = vperm.xlu0 %2569, %v684
        %v2571 = vpop.permute.xlu0 %2570
        %2573 = vset.pattern.permute.xlu0 7
        %2574 = vperm.xlu0 %2573, %v685
        %v2575 = vpop.permute.xlu0 %2574
        %2577 = vset.pattern.permute.xlu0 7
        %2578 = vperm.xlu0 %2577, %v686
        %v2579 = vpop.permute.xlu0 %2578
        %v2581 = vmul.f32 %v2485, %v2519
        %v2582 = vmul.f32 %v2501, %v2519
        %v2583 = vmul.f32 %v2486, %v2523
        %v2584 = vmul.f32 %v2502, %v2523
        %v2585 = vmul.f32 %v2487, %v2527
        %v2586 = vmul.f32 %v2503, %v2527
        %v2587 = vmul.f32 %v2488, %v2531
        %v2588 = vmul.f32 %v2504, %v2531
        %v2589 = vmul.f32 %v2489, %v2535
        %v2590 = vmul.f32 %v2505, %v2535
        %v2591 = vmul.f32 %v2490, %v2539
        %v2592 = vmul.f32 %v2506, %v2539
        %v2593 = vmul.f32 %v2491, %v2543
        %v2594 = vmul.f32 %v2507, %v2543
        %v2595 = vmul.f32 %v2492, %v2547
        %v2596 = vmul.f32 %v2508, %v2547
        %v2597 = vmul.f32 %v2493, %v2551
        %v2598 = vmul.f32 %v2509, %v2551
        %v2599 = vmul.f32 %v2494, %v2555
        %v2600 = vmul.f32 %v2510, %v2555
        %v2601 = vmul.f32 %v2495, %v2559
        %v2602 = vmul.f32 %v2511, %v2559
        %v2603 = vmul.f32 %v2496, %v2563
        %v2604 = vmul.f32 %v2512, %v2563
        %v2605 = vmul.f32 %v2497, %v2567
        %v2606 = vmul.f32 %v2513, %v2567
        %v2607 = vmul.f32 %v2498, %v2571
        %v2608 = vmul.f32 %v2514, %v2571
        %v2609 = vmul.f32 %v2499, %v2575
        %v2610 = vmul.f32 %v2515, %v2575
        %v2611 = vmul.f32 %v2500, %v2579
        %v2612 = vmul.f32 %v2516, %v2579
        %s2613 = scalar_lea.vmem %s5, 7
        %v2614 = vld [vmem:[%s2613] ss:$8 sm:$0x3]
        %v2616 = vlaneseq
        %v2617 = vshrl.u32 %v2616, 7
        %v2618 = vsub.s32 0, %v2617
        %v2619 = vrot.slane %v2614, %v2618
        %v2620 = vlaneseq
        %v2621 = vshrl.u32 %v2620, 7
        %v2622 = vsub.s32 1, %v2621
        %v2623 = vrot.slane %v2614, %v2622
        %v2626 = vmul.f32 %v2581, %v2619
        %v2627 = vmul.f32 %v2582, %v2623
        %v2628 = vmul.f32 %v2583, %v2619
        %v2629 = vmul.f32 %v2584, %v2623
        %v2630 = vmul.f32 %v2585, %v2619
        %v2631 = vmul.f32 %v2586, %v2623
        %v2632 = vmul.f32 %v2587, %v2619
        %v2633 = vmul.f32 %v2588, %v2623
        %v2634 = vmul.f32 %v2589, %v2619
        %v2635 = vmul.f32 %v2590, %v2623
        %v2636 = vmul.f32 %v2591, %v2619
        %v2637 = vmul.f32 %v2592, %v2623
        %v2638 = vmul.f32 %v2593, %v2619
        %v2639 = vmul.f32 %v2594, %v2623
        %v2640 = vmul.f32 %v2595, %v2619
        %v2641 = vmul.f32 %v2596, %v2623
        %v2642 = vmul.f32 %v2597, %v2619
        %v2643 = vmul.f32 %v2598, %v2623
        %v2644 = vmul.f32 %v2599, %v2619
        %v2645 = vmul.f32 %v2600, %v2623
        %v2646 = vmul.f32 %v2601, %v2619
        %v2647 = vmul.f32 %v2602, %v2623
        %v2648 = vmul.f32 %v2603, %v2619
        %v2649 = vmul.f32 %v2604, %v2623
        %v2650 = vmul.f32 %v2605, %v2619
        %v2651 = vmul.f32 %v2606, %v2623
        %v2652 = vmul.f32 %v2607, %v2619
        %v2653 = vmul.f32 %v2608, %v2623
        %v2654 = vmul.f32 %v2609, %v2619
        %v2655 = vmul.f32 %v2610, %v2623
        %v2656 = vmul.f32 %v2611, %v2619
        %v2657 = vmul.f32 %v2612, %v2623
        %v2658 = vadd.f32 %v2388, %v2626
        %v2659 = vadd.f32 %v2389, %v2627
        %v2660 = vadd.f32 %v2390, %v2628
        %v2661 = vadd.f32 %v2391, %v2629
        %v2662 = vadd.f32 %v2392, %v2630
        %v2663 = vadd.f32 %v2393, %v2631
        %v2664 = vadd.f32 %v2394, %v2632
        %v2665 = vadd.f32 %v2395, %v2633
        %v2666 = vadd.f32 %v2396, %v2634
        %v2667 = vadd.f32 %v2397, %v2635
        %v2668 = vadd.f32 %v2398, %v2636
        %v2669 = vadd.f32 %v2399, %v2637
        %v2670 = vadd.f32 %v2400, %v2638
        %v2671 = vadd.f32 %v2401, %v2639
        %v2672 = vadd.f32 %v2402, %v2640
        %v2673 = vadd.f32 %v2403, %v2641
        %v2674 = vadd.f32 %v2404, %v2642
        %v2675 = vadd.f32 %v2405, %v2643
        %v2676 = vadd.f32 %v2406, %v2644
        %v2677 = vadd.f32 %v2407, %v2645
        %v2678 = vadd.f32 %v2408, %v2646
        %v2679 = vadd.f32 %v2409, %v2647
        %v2680 = vadd.f32 %v2410, %v2648
        %v2681 = vadd.f32 %v2411, %v2649
        %v2682 = vadd.f32 %v2412, %v2650
        %v2683 = vadd.f32 %v2413, %v2651
        %v2684 = vadd.f32 %v2414, %v2652
        %v2685 = vadd.f32 %v2415, %v2653
        %v2686 = vadd.f32 %v2416, %v2654
        %v2687 = vadd.f32 %v2417, %v2655
        %v2688 = vadd.f32 %v2418, %v2656
        %v2689 = vadd.f32 %v2419, %v2657
        %2690 = vrot.lane.b32.xlu0 %v639, 111
        %v2691 = vpop.permute.xlu0 %2690
        %2692 = vrot.lane.b32.xlu0 %v641, 111
        %v2693 = vpop.permute.xlu0 %2692
        %2694 = vrot.lane.b32.xlu0 %v643, 111
        %v2695 = vpop.permute.xlu0 %2694
        %2696 = vrot.lane.b32.xlu0 %v645, 111
        %v2697 = vpop.permute.xlu0 %2696
        %2698 = vrot.lane.b32.xlu0 %v647, 111
        %v2699 = vpop.permute.xlu0 %2698
        %2700 = vrot.lane.b32.xlu0 %v649, 111
        %v2701 = vpop.permute.xlu0 %2700
        %2702 = vrot.lane.b32.xlu0 %v651, 111
        %v2703 = vpop.permute.xlu0 %2702
        %2704 = vrot.lane.b32.xlu0 %v653, 111
        %v2705 = vpop.permute.xlu0 %2704
        %2706 = vrot.lane.b32.xlu0 %v655, 111
        %v2707 = vpop.permute.xlu0 %2706
        %2708 = vrot.lane.b32.xlu0 %v657, 111
        %v2709 = vpop.permute.xlu0 %2708
        %2710 = vrot.lane.b32.xlu0 %v659, 111
        %v2711 = vpop.permute.xlu0 %2710
        %2712 = vrot.lane.b32.xlu0 %v661, 111
        %v2713 = vpop.permute.xlu0 %2712
        %2714 = vrot.lane.b32.xlu0 %v663, 111
        %v2715 = vpop.permute.xlu0 %2714
        %2716 = vrot.lane.b32.xlu0 %v665, 111
        %v2717 = vpop.permute.xlu0 %2716
        %2718 = vrot.lane.b32.xlu0 %v667, 111
        %v2719 = vpop.permute.xlu0 %2718
        %2720 = vrot.lane.b32.xlu0 %v669, 111
        %v2721 = vpop.permute.xlu0 %2720
        %2722 = vrot.lane.b32.xlu0 %v640, 111
        %v2723 = vpop.permute.xlu0 %2722
        %2724 = vrot.lane.b32.xlu0 %v642, 111
        %v2725 = vpop.permute.xlu0 %2724
        %2726 = vrot.lane.b32.xlu0 %v644, 111
        %v2727 = vpop.permute.xlu0 %2726
        %2728 = vrot.lane.b32.xlu0 %v646, 111
        %v2729 = vpop.permute.xlu0 %2728
        %2730 = vrot.lane.b32.xlu0 %v648, 111
        %v2731 = vpop.permute.xlu0 %2730
        %2732 = vrot.lane.b32.xlu0 %v650, 111
        %v2733 = vpop.permute.xlu0 %2732
        %2734 = vrot.lane.b32.xlu0 %v652, 111
        %v2735 = vpop.permute.xlu0 %2734
        %2736 = vrot.lane.b32.xlu0 %v654, 111
        %v2737 = vpop.permute.xlu0 %2736
        %2738 = vrot.lane.b32.xlu0 %v656, 111
        %v2739 = vpop.permute.xlu0 %2738
        %2740 = vrot.lane.b32.xlu0 %v658, 111
        %v2741 = vpop.permute.xlu0 %2740
        %2742 = vrot.lane.b32.xlu0 %v660, 111
        %v2743 = vpop.permute.xlu0 %2742
        %2744 = vrot.lane.b32.xlu0 %v662, 111
        %v2745 = vpop.permute.xlu0 %2744
        %2746 = vrot.lane.b32.xlu0 %v664, 111
        %v2747 = vpop.permute.xlu0 %2746
        %2748 = vrot.lane.b32.xlu0 %v666, 111
        %v2749 = vpop.permute.xlu0 %2748
        %2750 = vrot.lane.b32.xlu0 %v668, 111
        %v2751 = vpop.permute.xlu0 %2750
        %2752 = vrot.lane.b32.xlu0 %v670, 111
        %v2753 = vpop.permute.xlu0 %2752
        %vm2754 = vcmp.lt.s32.totalorder %v864, 111
        %v2755 = vsel %vm2754, %v2691, %v2723
        %v2756 = vsel %vm2754, %v2693, %v2725
        %v2757 = vsel %vm2754, %v2695, %v2727
        %v2758 = vsel %vm2754, %v2697, %v2729
        %v2759 = vsel %vm2754, %v2699, %v2731
        %v2760 = vsel %vm2754, %v2701, %v2733
        %v2761 = vsel %vm2754, %v2703, %v2735
        %v2762 = vsel %vm2754, %v2705, %v2737
        %v2763 = vsel %vm2754, %v2707, %v2739
        %v2764 = vsel %vm2754, %v2709, %v2741
        %v2765 = vsel %vm2754, %v2711, %v2743
        %v2766 = vsel %vm2754, %v2713, %v2745
        %v2767 = vsel %vm2754, %v2715, %v2747
        %v2768 = vsel %vm2754, %v2717, %v2749
        %v2769 = vsel %vm2754, %v2719, %v2751
        %v2770 = vsel %vm2754, %v2721, %v2753
        %v2771 = vsel %vm2754, %v2723, %v2691
        %v2772 = vsel %vm2754, %v2725, %v2693
        %v2773 = vsel %vm2754, %v2727, %v2695
        %v2774 = vsel %vm2754, %v2729, %v2697
        %v2775 = vsel %vm2754, %v2731, %v2699
        %v2776 = vsel %vm2754, %v2733, %v2701
        %v2777 = vsel %vm2754, %v2735, %v2703
        %v2778 = vsel %vm2754, %v2737, %v2705
        %v2779 = vsel %vm2754, %v2739, %v2707
        %v2780 = vsel %vm2754, %v2741, %v2709
        %v2781 = vsel %vm2754, %v2743, %v2711
        %v2782 = vsel %vm2754, %v2745, %v2713
        %v2783 = vsel %vm2754, %v2747, %v2715
        %v2784 = vsel %vm2754, %v2749, %v2717
        %v2785 = vsel %vm2754, %v2751, %v2719
        %v2786 = vsel %vm2754, %v2753, %v2721
        %2787 = vset.pattern.permute.xlu0 8
        %2788 = vperm.xlu0 %2787, %v671
        %v2789 = vpop.permute.xlu0 %2788
        %2791 = vset.pattern.permute.xlu0 8
        %2792 = vperm.xlu0 %2791, %v672
        %v2793 = vpop.permute.xlu0 %2792
        %2795 = vset.pattern.permute.xlu0 8
        %2796 = vperm.xlu0 %2795, %v673
        %v2797 = vpop.permute.xlu0 %2796
        %2799 = vset.pattern.permute.xlu0 8
        %2800 = vperm.xlu0 %2799, %v674
        %v2801 = vpop.permute.xlu0 %2800
        %2803 = vset.pattern.permute.xlu0 8
        %2804 = vperm.xlu0 %2803, %v675
        %v2805 = vpop.permute.xlu0 %2804
        %2807 = vset.pattern.permute.xlu0 8
        %2808 = vperm.xlu0 %2807, %v676
        %v2809 = vpop.permute.xlu0 %2808
        %2811 = vset.pattern.permute.xlu0 8
        %2812 = vperm.xlu0 %2811, %v677
        %v2813 = vpop.permute.xlu0 %2812
        %2815 = vset.pattern.permute.xlu0 8
        %2816 = vperm.xlu0 %2815, %v678
        %v2817 = vpop.permute.xlu0 %2816
        %2819 = vset.pattern.permute.xlu0 8
        %2820 = vperm.xlu0 %2819, %v679
        %v2821 = vpop.permute.xlu0 %2820
        %2823 = vset.pattern.permute.xlu0 8
        %2824 = vperm.xlu0 %2823, %v680
        %v2825 = vpop.permute.xlu0 %2824
        %2827 = vset.pattern.permute.xlu0 8
        %2828 = vperm.xlu0 %2827, %v681
        %v2829 = vpop.permute.xlu0 %2828
        %2831 = vset.pattern.permute.xlu0 8
        %2832 = vperm.xlu0 %2831, %v682
        %v2833 = vpop.permute.xlu0 %2832
        %2835 = vset.pattern.permute.xlu0 8
        %2836 = vperm.xlu0 %2835, %v683
        %v2837 = vpop.permute.xlu0 %2836
        %2839 = vset.pattern.permute.xlu0 8
        %2840 = vperm.xlu0 %2839, %v684
        %v2841 = vpop.permute.xlu0 %2840
        %2843 = vset.pattern.permute.xlu0 8
        %2844 = vperm.xlu0 %2843, %v685
        %v2845 = vpop.permute.xlu0 %2844
        %2847 = vset.pattern.permute.xlu0 8
        %2848 = vperm.xlu0 %2847, %v686
        %v2849 = vpop.permute.xlu0 %2848
        %v2851 = vmul.f32 %v2755, %v2789
        %v2852 = vmul.f32 %v2771, %v2789
        %v2853 = vmul.f32 %v2756, %v2793
        %v2854 = vmul.f32 %v2772, %v2793
        %v2855 = vmul.f32 %v2757, %v2797
        %v2856 = vmul.f32 %v2773, %v2797
        %v2857 = vmul.f32 %v2758, %v2801
        %v2858 = vmul.f32 %v2774, %v2801
        %v2859 = vmul.f32 %v2759, %v2805
        %v2860 = vmul.f32 %v2775, %v2805
        %v2861 = vmul.f32 %v2760, %v2809
        %v2862 = vmul.f32 %v2776, %v2809
        %v2863 = vmul.f32 %v2761, %v2813
        %v2864 = vmul.f32 %v2777, %v2813
        %v2865 = vmul.f32 %v2762, %v2817
        %v2866 = vmul.f32 %v2778, %v2817
        %v2867 = vmul.f32 %v2763, %v2821
        %v2868 = vmul.f32 %v2779, %v2821
        %v2869 = vmul.f32 %v2764, %v2825
        %v2870 = vmul.f32 %v2780, %v2825
        %v2871 = vmul.f32 %v2765, %v2829
        %v2872 = vmul.f32 %v2781, %v2829
        %v2873 = vmul.f32 %v2766, %v2833
        %v2874 = vmul.f32 %v2782, %v2833
        %v2875 = vmul.f32 %v2767, %v2837
        %v2876 = vmul.f32 %v2783, %v2837
        %v2877 = vmul.f32 %v2768, %v2841
        %v2878 = vmul.f32 %v2784, %v2841
        %v2879 = vmul.f32 %v2769, %v2845
        %v2880 = vmul.f32 %v2785, %v2845
        %v2881 = vmul.f32 %v2770, %v2849
        %v2882 = vmul.f32 %v2786, %v2849
        %s2883 = scalar_lea.vmem %s5, 16
        %v2884 = vld [vmem:[%s2883] ss:$8 sm:$0x3]
        %v2886 = vlaneseq
        %v2887 = vshrl.u32 %v2886, 7
        %v2888 = vsub.s32 0, %v2887
        %v2889 = vrot.slane %v2884, %v2888
        %v2890 = vlaneseq
        %v2891 = vshrl.u32 %v2890, 7
        %v2892 = vsub.s32 1, %v2891
        %v2893 = vrot.slane %v2884, %v2892
        %v2896 = vmul.f32 %v2851, %v2889
        %v2897 = vmul.f32 %v2852, %v2893
        %v2898 = vmul.f32 %v2853, %v2889
        %v2899 = vmul.f32 %v2854, %v2893
        %v2900 = vmul.f32 %v2855, %v2889
        %v2901 = vmul.f32 %v2856, %v2893
        %v2902 = vmul.f32 %v2857, %v2889
        %v2903 = vmul.f32 %v2858, %v2893
        %v2904 = vmul.f32 %v2859, %v2889
        %v2905 = vmul.f32 %v2860, %v2893
        %v2906 = vmul.f32 %v2861, %v2889
        %v2907 = vmul.f32 %v2862, %v2893
        %v2908 = vmul.f32 %v2863, %v2889
        %v2909 = vmul.f32 %v2864, %v2893
        %v2910 = vmul.f32 %v2865, %v2889
        %v2911 = vmul.f32 %v2866, %v2893
        %v2912 = vmul.f32 %v2867, %v2889
        %v2913 = vmul.f32 %v2868, %v2893
        %v2914 = vmul.f32 %v2869, %v2889
        %v2915 = vmul.f32 %v2870, %v2893
        %v2916 = vmul.f32 %v2871, %v2889
        %v2917 = vmul.f32 %v2872, %v2893
        %v2918 = vmul.f32 %v2873, %v2889
        %v2919 = vmul.f32 %v2874, %v2893
        %v2920 = vmul.f32 %v2875, %v2889
        %v2921 = vmul.f32 %v2876, %v2893
        %v2922 = vmul.f32 %v2877, %v2889
        %v2923 = vmul.f32 %v2878, %v2893
        %v2924 = vmul.f32 %v2879, %v2889
        %v2925 = vmul.f32 %v2880, %v2893
        %v2926 = vmul.f32 %v2881, %v2889
        %v2927 = vmul.f32 %v2882, %v2893
        %v2928 = vadd.f32 %v2658, %v2896
        %v2929 = vadd.f32 %v2659, %v2897
        %v2930 = vadd.f32 %v2660, %v2898
        %v2931 = vadd.f32 %v2661, %v2899
        %v2932 = vadd.f32 %v2662, %v2900
        %v2933 = vadd.f32 %v2663, %v2901
        %v2934 = vadd.f32 %v2664, %v2902
        %v2935 = vadd.f32 %v2665, %v2903
        %v2936 = vadd.f32 %v2666, %v2904
        %v2937 = vadd.f32 %v2667, %v2905
        %v2938 = vadd.f32 %v2668, %v2906
        %v2939 = vadd.f32 %v2669, %v2907
        %v2940 = vadd.f32 %v2670, %v2908
        %v2941 = vadd.f32 %v2671, %v2909
        %v2942 = vadd.f32 %v2672, %v2910
        %v2943 = vadd.f32 %v2673, %v2911
        %v2944 = vadd.f32 %v2674, %v2912
        %v2945 = vadd.f32 %v2675, %v2913
        %v2946 = vadd.f32 %v2676, %v2914
        %v2947 = vadd.f32 %v2677, %v2915
        %v2948 = vadd.f32 %v2678, %v2916
        %v2949 = vadd.f32 %v2679, %v2917
        %v2950 = vadd.f32 %v2680, %v2918
        %v2951 = vadd.f32 %v2681, %v2919
        %v2952 = vadd.f32 %v2682, %v2920
        %v2953 = vadd.f32 %v2683, %v2921
        %v2954 = vadd.f32 %v2684, %v2922
        %v2955 = vadd.f32 %v2685, %v2923
        %v2956 = vadd.f32 %v2686, %v2924
        %v2957 = vadd.f32 %v2687, %v2925
        %v2958 = vadd.f32 %v2688, %v2926
        %v2959 = vadd.f32 %v2689, %v2927
        %v2960 = vld [vmem:[%s4] sm:$0xff]
        %v2961 = vld [vmem:[%s4 + $0x8] sm:$0xff]
        %v2962 = vld [vmem:[%s4 + $0x10] sm:$0xff]
        %v2963 = vld [vmem:[%s4 + $0x18] sm:$0xff]
        %v2964 = vld [vmem:[%s4 + $0x20] sm:$0xff]
        %v2965 = vld [vmem:[%s4 + $0x28] sm:$0xff]
        %v2966 = vld [vmem:[%s4 + $0x30] sm:$0xff]
        %v2967 = vld [vmem:[%s4 + $0x38] sm:$0xff]
        %v2968 = vld [vmem:[%s4 + $0x40] sm:$0xff]
        %v2969 = vld [vmem:[%s4 + $0x48] sm:$0xff]
        %v2970 = vld [vmem:[%s4 + $0x50] sm:$0xff]
        %v2971 = vld [vmem:[%s4 + $0x58] sm:$0xff]
        %v2972 = vld [vmem:[%s4 + $0x60] sm:$0xff]
        %v2973 = vld [vmem:[%s4 + $0x68] sm:$0xff]
        %v2974 = vld [vmem:[%s4 + $0x70] sm:$0xff]
        %v2975 = vld [vmem:[%s4 + $0x78] sm:$0xff]
        %2977 = vset.pattern.permute.xlu0 0
        %2978 = vperm.xlu0 %2977, %v2960
        %v2979 = vpop.permute.xlu0 %2978
        %2982 = vset.pattern.permute.xlu0 0
        %2983 = vperm.xlu0 %2982, %v2961
        %v2984 = vpop.permute.xlu0 %2983
        %2987 = vset.pattern.permute.xlu0 0
        %2988 = vperm.xlu0 %2987, %v2962
        %v2989 = vpop.permute.xlu0 %2988
        %2992 = vset.pattern.permute.xlu0 0
        %2993 = vperm.xlu0 %2992, %v2963
        %v2994 = vpop.permute.xlu0 %2993
        %2997 = vset.pattern.permute.xlu0 0
        %2998 = vperm.xlu0 %2997, %v2964
        %v2999 = vpop.permute.xlu0 %2998
        %3002 = vset.pattern.permute.xlu0 0
        %3003 = vperm.xlu0 %3002, %v2965
        %v3004 = vpop.permute.xlu0 %3003
        %3007 = vset.pattern.permute.xlu0 0
        %3008 = vperm.xlu0 %3007, %v2966
        %v3009 = vpop.permute.xlu0 %3008
        %3012 = vset.pattern.permute.xlu0 0
        %3013 = vperm.xlu0 %3012, %v2967
        %v3014 = vpop.permute.xlu0 %3013
        %3017 = vset.pattern.permute.xlu0 0
        %3018 = vperm.xlu0 %3017, %v2968
        %v3019 = vpop.permute.xlu0 %3018
        %3022 = vset.pattern.permute.xlu0 0
        %3023 = vperm.xlu0 %3022, %v2969
        %v3024 = vpop.permute.xlu0 %3023
        %3027 = vset.pattern.permute.xlu0 0
        %3028 = vperm.xlu0 %3027, %v2970
        %v3029 = vpop.permute.xlu0 %3028
        %3032 = vset.pattern.permute.xlu0 0
        %3033 = vperm.xlu0 %3032, %v2971
        %v3034 = vpop.permute.xlu0 %3033
        %3037 = vset.pattern.permute.xlu0 0
        %3038 = vperm.xlu0 %3037, %v2972
        %v3039 = vpop.permute.xlu0 %3038
        %3042 = vset.pattern.permute.xlu0 0
        %3043 = vperm.xlu0 %3042, %v2973
        %v3044 = vpop.permute.xlu0 %3043
        %3047 = vset.pattern.permute.xlu0 0
        %3048 = vperm.xlu0 %3047, %v2974
        %v3049 = vpop.permute.xlu0 %3048
        %3052 = vset.pattern.permute.xlu0 0
        %3053 = vperm.xlu0 %3052, %v2975
        %v3054 = vpop.permute.xlu0 %3053
        %v3056 = vadd.f32 %v2928, %v2979
        %v3057 = vadd.f32 %v2929, %v2979
        %v3058 = vadd.f32 %v2930, %v2984
        %v3059 = vadd.f32 %v2931, %v2984
        %v3060 = vadd.f32 %v2932, %v2989
        %v3061 = vadd.f32 %v2933, %v2989
        %v3062 = vadd.f32 %v2934, %v2994
        %v3063 = vadd.f32 %v2935, %v2994
        %v3064 = vadd.f32 %v2936, %v2999
        %v3065 = vadd.f32 %v2937, %v2999
        %v3066 = vadd.f32 %v2938, %v3004
        %v3067 = vadd.f32 %v2939, %v3004
        %v3068 = vadd.f32 %v2940, %v3009
        %v3069 = vadd.f32 %v2941, %v3009
        %v3070 = vadd.f32 %v2942, %v3014
        %v3071 = vadd.f32 %v2943, %v3014
        %v3072 = vadd.f32 %v2944, %v3019
        %v3073 = vadd.f32 %v2945, %v3019
        %v3074 = vadd.f32 %v2946, %v3024
        %v3075 = vadd.f32 %v2947, %v3024
        %v3076 = vadd.f32 %v2948, %v3029
        %v3077 = vadd.f32 %v2949, %v3029
        %v3078 = vadd.f32 %v2950, %v3034
        %v3079 = vadd.f32 %v2951, %v3034
        %v3080 = vadd.f32 %v2952, %v3039
        %v3081 = vadd.f32 %v2953, %v3039
        %v3082 = vadd.f32 %v2954, %v3044
        %v3083 = vadd.f32 %v2955, %v3044
        %v3084 = vadd.f32 %v2956, %v3049
        %v3085 = vadd.f32 %v2957, %v3049
        %v3086 = vadd.f32 %v2958, %v3054
        %v3087 = vadd.f32 %v2959, %v3054
        %v3088 = vmax.f32 %v3056, 0.0
        %v3089 = vmax.f32 %v3057, 0.0
        %v3090 = vmax.f32 %v3058, 0.0
        %v3091 = vmax.f32 %v3059, 0.0
        %v3092 = vmax.f32 %v3060, 0.0
        %v3093 = vmax.f32 %v3061, 0.0
        %v3094 = vmax.f32 %v3062, 0.0
        %v3095 = vmax.f32 %v3063, 0.0
        %v3096 = vmax.f32 %v3064, 0.0
        %v3097 = vmax.f32 %v3065, 0.0
        %v3098 = vmax.f32 %v3066, 0.0
        %v3099 = vmax.f32 %v3067, 0.0
        %v3100 = vmax.f32 %v3068, 0.0
        %v3101 = vmax.f32 %v3069, 0.0
        %v3102 = vmax.f32 %v3070, 0.0
        %v3103 = vmax.f32 %v3071, 0.0
        %v3104 = vmax.f32 %v3072, 0.0
        %v3105 = vmax.f32 %v3073, 0.0
        %v3106 = vmax.f32 %v3074, 0.0
        %v3107 = vmax.f32 %v3075, 0.0
        %v3108 = vmax.f32 %v3076, 0.0
        %v3109 = vmax.f32 %v3077, 0.0
        %v3110 = vmax.f32 %v3078, 0.0
        %v3111 = vmax.f32 %v3079, 0.0
        %v3112 = vmax.f32 %v3080, 0.0
        %v3113 = vmax.f32 %v3081, 0.0
        %v3114 = vmax.f32 %v3082, 0.0
        %v3115 = vmax.f32 %v3083, 0.0
        %v3116 = vmax.f32 %v3084, 0.0
        %v3117 = vmax.f32 %v3085, 0.0
        %v3118 = vmax.f32 %v3086, 0.0
        %v3119 = vmax.f32 %v3087, 0.0
        %v3120 = vmin.f32 %v3088, 6.0
        %v3121 = vmin.f32 %v3089, 6.0
        %v3122 = vmin.f32 %v3090, 6.0
        %v3123 = vmin.f32 %v3091, 6.0
        %v3124 = vmin.f32 %v3092, 6.0
        %v3125 = vmin.f32 %v3093, 6.0
        %v3126 = vmin.f32 %v3094, 6.0
        %v3127 = vmin.f32 %v3095, 6.0
        %v3128 = vmin.f32 %v3096, 6.0
        %v3129 = vmin.f32 %v3097, 6.0
        %v3130 = vmin.f32 %v3098, 6.0
        %v3131 = vmin.f32 %v3099, 6.0
        %v3132 = vmin.f32 %v3100, 6.0
        %v3133 = vmin.f32 %v3101, 6.0
        %v3134 = vmin.f32 %v3102, 6.0
        %v3135 = vmin.f32 %v3103, 6.0
        %v3136 = vmin.f32 %v3104, 6.0
        %v3137 = vmin.f32 %v3105, 6.0
        %v3138 = vmin.f32 %v3106, 6.0
        %v3139 = vmin.f32 %v3107, 6.0
        %v3140 = vmin.f32 %v3108, 6.0
        %v3141 = vmin.f32 %v3109, 6.0
        %v3142 = vmin.f32 %v3110, 6.0
        %v3143 = vmin.f32 %v3111, 6.0
        %v3144 = vmin.f32 %v3112, 6.0
        %v3145 = vmin.f32 %v3113, 6.0
        %v3146 = vmin.f32 %v3114, 6.0
        %v3147 = vmin.f32 %v3115, 6.0
        %v3148 = vmin.f32 %v3116, 6.0
        %v3149 = vmin.f32 %v3117, 6.0
        %v3150 = vmin.f32 %v3118, 6.0
        %v3151 = vmin.f32 %v3119, 6.0
        %v3152 = vld [vmem:[%s6] sm:$0xf]
        %v3153 = vld [vmem:[%s6 + $0x4] sm:$0xf]
        %v3154 = vld [vmem:[%s6 + $0x8] sm:$0xf]
        %v3155 = vld [vmem:[%s6 + $0xc] sm:$0xf]
        %v3156 = vpack.c.bf16 %v3122, %v3120
        %v3157 = vpack.c.bf16 %v3123, %v3121
        %v3158 = vpack.c.bf16 %v3126, %v3124
        %v3159 = vpack.c.bf16 %v3127, %v3125
        %v3160 = vpack.c.bf16 %v3130, %v3128
        %v3161 = vpack.c.bf16 %v3131, %v3129
        %v3162 = vpack.c.bf16 %v3134, %v3132
        %v3163 = vpack.c.bf16 %v3135, %v3133
        %v3164 = vpack.c.bf16 %v3138, %v3136
        %v3165 = vpack.c.bf16 %v3139, %v3137
        %v3166 = vpack.c.bf16 %v3142, %v3140
        %v3167 = vpack.c.bf16 %v3143, %v3141
        %v3168 = vpack.c.bf16 %v3146, %v3144
        %v3169 = vpack.c.bf16 %v3147, %v3145
        %v3170 = vpack.c.bf16 %v3150, %v3148
        %v3171 = vpack.c.bf16 %v3151, %v3149
        %v3172 = vld [vmem:[%s7] sm:$0xff]
        %v3173 = vld [vmem:[%s7 + $0x8] sm:$0xff]
        %v3174 = vld [vmem:[%s7 + $0x10] sm:$0xff]
        %v3175 = vld [vmem:[%s7 + $0x18] sm:$0xff]
        %3177 = vset.pattern.permute.xlu0 0
        %3178 = vperm.xlu0 %3177, %v3172
        %v3179 = vpop.permute.xlu0 %3178
        %3182 = vset.pattern.permute.xlu0 0
        %3183 = vperm.xlu0 %3182, %v3173
        %v3184 = vpop.permute.xlu0 %3183
        %3187 = vset.pattern.permute.xlu0 0
        %3188 = vperm.xlu0 %3187, %v3174
        %v3189 = vpop.permute.xlu0 %3188
        %3192 = vset.pattern.permute.xlu0 0
        %3193 = vperm.xlu0 %3192, %v3175
        %v3194 = vpop.permute.xlu0 %3193
        %v3200 = vunpack.c.l.b16 %v3152
        %v3201 = vunpack.c.l.b16 %v3153
        %v3202 = vunpack.c.l.b16 %v3154
        %v3203 = vunpack.c.l.b16 %v3155
        %v3204 = vpack.c.b16 %v3201, %v3200
        %v3205 = vpack.c.b16 %v3203, %v3202
        %3208 = vmatprep.subr.bf16.mxu0 %v3157
        %3209 = vmatpush1.bf16.msra.mxu0 %v3156
        %3210 = vmatprep.subr.bf16.mxu0 %v3159
        %3211 = vmatpush1.bf16.msra.mxu0 %v3158
        %3212 = vmatprep.subr.bf16.mxu0 %v3161
        %3213 = vmatpush1.bf16.msra.mxu0 %v3160
        %3214 = vmatprep.subr.bf16.mxu0 %v3163
        %3215 = vmatpush1.bf16.msra.mxu0 %v3162
        %3216 = vmatprep.subr.bf16.mxu0 %v3165
        %3217 = vmatpush1.bf16.msra.mxu0 %v3164
        %3218 = vmatprep.subr.bf16.mxu0 %v3167
        %3219 = vmatpush1.bf16.msra.mxu0 %v3166
        %3220 = vmatprep.subr.bf16.mxu0 %v3169
        %3221 = vmatpush1.bf16.msra.mxu0 %v3168
        %3222 = vmatprep.subr.bf16.mxu0 %v3171
        %3223 = vmatpush1.bf16.msra.mxu0 %v3170
        %3224 = vmatprep.subr.bf16.mxu0 0
        %3225 = vmatpush1.bf16.msra.mxu0 0
        %3226 = vmatprep.subr.bf16.mxu0 0
        %3227 = vmatpush1.bf16.msra.mxu0 0
        %3228 = vmatprep.subr.bf16.mxu0 0
        %3229 = vmatpush1.bf16.msra.mxu0 0
        %3230 = vmatprep.subr.bf16.mxu0 0
        %3231 = vmatpush1.bf16.msra.mxu0 0
        %3232 = vmatprep.subr.bf16.mxu0 0
        %3233 = vmatpush1.bf16.msra.mxu0 0
        %3234 = vmatprep.subr.bf16.mxu0 0
        %3235 = vmatpush1.bf16.msra.mxu0 0
        %3236 = vmatprep.subr.bf16.mxu0 0
        %3237 = vmatpush1.bf16.msra.mxu0 0
        %3238 = vmatprep.subr.bf16.mxu0 0
        %3239 = vmatpush1.bf16.msra.mxu0 0
        %3240 = vmatprep.mubr.bf16.mxu0 0
        %3241 = vmatmul.mubr.bf16.gmra.mrb[0].mxu0 %v3204
        %v3242 = vpop.f32.mrb[0].mxu0
        %v3243 = vadd.f32 %v3179, %v3242
        %v3244 = vpop.f32.mrb[0].mxu0
        %v3245 = vadd.f32 %v3179, %v3244
        %v3246 = vpop.f32.mrb[0].mxu0
        %v3247 = vadd.f32 %v3184, %v3246
        %v3248 = vpop.f32.mrb[0].mxu0
        %v3249 = vadd.f32 %v3184, %v3248
        %3250 = vmatprep.mubr.bf16.mxu0 0
        %3251 = vmatmul.mubr.bf16.gmra.mrb[0].mxu0 %v3205
        %v3252 = vpop.f32.mrb[0].mxu0
        %v3253 = vadd.f32 %v3189, %v3252
        %v3254 = vpop.f32.mrb[0].mxu0
        %v3255 = vadd.f32 %v3189, %v3254
        %v3256 = vpop.f32.mrb[0].mxu0
        %v3257 = vadd.f32 %v3194, %v3256
        %v3258 = vpop.f32.mrb[0].mxu0
        %v3259 = vadd.f32 %v3194, %v3258
        %3260 = vdwg.mxu0
        %v3261 = vadd.f32 %v3243, %v305
        %v3262 = vadd.f32 %v3245, %v306
        %v3263 = vadd.f32 %v3247, %v307
        %v3264 = vadd.f32 %v3249, %v308
        %v3265 = vadd.f32 %v3253, %v309
        %v3266 = vadd.f32 %v3255, %v310
        %v3267 = vadd.f32 %v3257, %v311
        %v3268 = vadd.f32 %v3259, %v312
        %3269 = vst [vmem:[%s298] sm:$0xff] %v3261
        %3270 = vst [vmem:[%s298 + $0x8] sm:$0xff] %v3262
        %3271 = vst [vmem:[%s298 + $0x10] sm:$0xff] %v3263
        %3272 = vst [vmem:[%s298 + $0x18] sm:$0xff] %v3264
        %3273 = vst [vmem:[%s298 + $0x20] sm:$0xff] %v3265
        %3274 = vst [vmem:[%s298 + $0x28] sm:$0xff] %v3266
        %3275 = vst [vmem:[%s298 + $0x30] sm:$0xff] %v3267
        %3276 = vst [vmem:[%s298 + $0x38] sm:$0xff] %v3268
        %s3277 = sand.u32 %s203, 1
        %s3278 = scalar_lea.sflag [#allocation3], %s3277
        %s3279 = sand.u32 %s203, 1
        %s3280 = smul.addr %s3279, 64
        %s3281 = scalar_lea.vmem [#allocation2], %s3280
        // Predicated region
        $region53: #{tpu_custom_call.1} parent=51 // pred_check
          %p3282 = pneg %p213
        $region54: #{tpu_custom_call.1} parent=51 // pred_check_branch
          %3284 = sbr.rel (%p3282) target = $region56
        $region55: #{tpu_custom_call.1} parent=51 // pred_region
          %s3286 = ssub.s32 1024, 1024
          %3287 = vsyncadd %s3278, %s3286
          %s3288 = smul.addr %s22, 8
          %s3289 = smul.addr %s3288, 128
          %s3290 = scalar_lea.hbm %s8, %s3289
          %s3291 = sshll.u32 %s3281, 4
          %s3292 = int_to_ptr.vmem [resolvable:$true] %s3291
          %3297 = dma.vmem_to_hbm [thread:$0]  %s3292, 1024, %s3290, %s3278, 256, 256, 16
        $region56: #{tpu_custom_call.1} parent=51 // pred_fallthru
          _
      $region52: #{tpu_custom_call.1} parent=5 // pred_fallthru
        _
      %p3298 = scmp.le.s32.totalorder 2, %s17
      // Predicated region
      $region57: #{tpu_custom_call.1} parent=5 // pred_check
        %p3299 = pneg %p3298
      $region58: #{tpu_custom_call.1} parent=5 // pred_check_branch
        %3301 = sbr.rel (%p3299) target = $region60
      $region59: #{tpu_custom_call.1} parent=5 // pred_region
        %s3302 = ssub.s32 %s17, 2
        // Predicated region
        $region61: #{tpu_custom_call.1} parent=59 // pred_check
          %p3303 = pneg %p219
        $region62: #{tpu_custom_call.1} parent=59 // pred_check_branch
          %3305 = sbr.rel (%p3303) target = $region64
        $region63: #{tpu_custom_call.1} parent=59 // pred_region
          %s3306 = sand.u32 %s204, 1
          %s3307 = scalar_lea.sflag [#allocation3], %s3306
          %s3308 = sand.u32 %s204, 1
          %s3309 = smul.addr %s3308, 64
          %s3310 = scalar_lea.vmem [#allocation2], %s3309
          %3311 = dma.done %s3307, 1024
        $region64: #{tpu_custom_call.1} parent=59 // pred_fallthru
          _
      $region60: #{tpu_custom_call.1} parent=5 // pred_fallthru
        _
    $region6: #{tpu_custom_call.1} parent=1 // loop_footer
      %s21 = sadd.s32 1, %s17
    $region7: #{tpu_custom_call.1} parent=1 // loop_footer_branch
      %16 = sbr.rel target = $region3
    $region8: #{tpu_custom_call.1} parent=1 // loop_exit
      _
    %3312 = vsyncpa [#allocation3], 1
    %s3313 = scalar_lea.sflag [#allocation3], 1
    %3314 = vsyncpa %s3313, 1

</llo_original>
